<compile_context>
chip_gen: v7x
topology: tpu7x:2x2x1
jax: 0.10.0
libtpu: 0.0.40
codegen_flags: <defaults>
</compile_context>

<pallas_src>
import math

import numpy as np
import jax
import jax.numpy as jnp
from jax.experimental import pallas as pl
from jax.experimental.pallas import tpu as pltpu

# ---- small problem sizes consistent with the module -------------------------
B = 2            # batch
S = 16           # sequence length
T = B * S        # stacked token count (matmul M dim)
D_IN = 64        # d_input
D = 128          # d_model
D_OUT = 64       # d_output
D_OUT_PAD = 128  # lane-dense padded output head
H = 4            # num_heads
DH = D // H      # head dim
FFN = 256        # feed-forward dim (toy stand-in for PyTorch's default 2048)
LAYERS = 2       # num_layers

IN_SCALE = math.sqrt(D_IN)        # x * sqrt(d_input) after the projection
ATTN_SCALE = 1.0 / math.sqrt(DH)  # MultiheadAttention q scaling
LN_EPS = 1e-5
NEG_BIG = -1e30                   # additive mask for cross-sequence scores


# -----------------------------------------------------------------------------
# kernel-side math helpers
# -----------------------------------------------------------------------------
def _mm(a, w):
    """MXU matmul: explicit bf16 inputs, f32 accumulation."""
    return jnp.dot(a.astype(jnp.bfloat16), w.astype(jnp.bfloat16),
                   preferred_element_type=jnp.float32)


def _layer_norm(x, g, b):
    mu = jnp.mean(x, axis=-1, keepdims=True)
    var = jnp.mean((x - mu) ** 2, axis=-1, keepdims=True)
    return (x - mu) * jax.lax.rsqrt(var + LN_EPS) * g + b


# -----------------------------------------------------------------------------
# fused Pallas kernel: input proj + LAYERS encoder layers + output dense
# -----------------------------------------------------------------------------
def wsd_kernel(x_ref, bias_ref, wp_ref, bp_ref,
               wqkv_ref, bqkv_ref, wo_ref, bo_ref, g1_ref, be1_ref,
               w1_ref, b1_ref, w2_ref, b2_ref, g2_ref, be2_ref,
               wout_ref, bout_ref,
               scores_ref, h_ref):
    f32 = jnp.float32
    bf16 = jnp.bfloat16
    attn_bias = bias_ref[...]                    # (T, T) block-diagonal bias

    # project_layer + * sqrt(d_input): scale folded into wp/bp at prep time.
    h = _mm(x_ref[...], wp_ref[...]) + bp_ref[...]          # (T, D) f32

    for l in range(LAYERS):                      # static unroll over layers
        # ---------------- multi-head self-attention (heads + batch fused) ----
        # fused QKV matmul over the whole token slab; q columns pre-scaled.
        qkv = _mm(h, wqkv_ref[l]) + bqkv_ref[l]              # (T, 3D) f32

        def heads(base):
            # stack per-head lane slices into a leading head-batch dim
            return jnp.stack(
                [qkv[:, base + i * DH: base + (i + 1) * DH] for i in range(H)],
                axis=0).astype(bf16)                          # (H, T, DH)

        qh, kh, vh = heads(0), heads(D), heads(2 * D)

        # scores for all heads / all sequences in one batched dot; the
        # block-diagonal bias kills cross-sequence attention.
        s = jnp.einsum('htd,hsd->hts', qh, kh,
                       preferred_element_type=f32)            # (H, T, T)
        s = s + attn_bias[None, :, :]
        m = jnp.max(s, axis=-1, keepdims=True)
        e = jnp.exp(s - m)
        p = e / jnp.sum(e, axis=-1, keepdims=True)            # f32 softmax

        ctx = jnp.einsum('hts,hsd->htd', p.astype(bf16), vh,
                         preferred_element_type=f32)          # (H, T, DH)
        # per-head output projection as one batched dot, then sum over heads
        parts = jnp.einsum('htd,hdk->htk', ctx.astype(bf16), wo_ref[l],
                           preferred_element_type=f32)        # (H, T, D)
        attn = jnp.sum(parts, axis=0) + bo_ref[l]             # (T, D)

        # ---------------- add & norm, ReLU FFN, add & norm (post-LN) ---------
        h1 = _layer_norm(h + attn, g1_ref[l], be1_ref[l])
        ff = jnp.maximum(_mm(h1, w1_ref[l]) + b1_ref[l], 0.0)
        ff = _mm(ff, w2_ref[l]) + b2_ref[l]
        h = _layer_norm(h1 + ff, g2_ref[l], be2_ref[l])

    # output_dense, padded to a lane-dense 128-wide store
    scores_ref[...] = _mm(h, wout_ref[...]) + bout_ref[...]   # (T, 128)
    h_ref[...] = h                                            # (T, D)


# -----------------------------------------------------------------------------
# wrapper
# -----------------------------------------------------------------------------
_KP_ORDER = ('wp', 'bp', 'wqkv', 'bqkv', 'wo_h', 'bo', 'g1', 'be1',
             'w1', 'b1', 'w2', 'b2', 'g2', 'be2', 'wout_pad', 'bout_pad')


def wsd_forward(x, kparams):
    x2d = x.reshape(T, D_IN).astype(jnp.bfloat16)     # halve x HBM->VMEM bytes
    weights = tuple(kparams[n] for n in _KP_ORDER)

    flops = (2 * T * D_IN * D
             + LAYERS * (2 * T * D * 3 * D            # fused QKV
                         + 2 * 2 * H * T * T * DH     # scores + p@v
                         + 2 * T * D * D              # output projection
                         + 2 * 2 * T * D * FFN)       # FFN
             + 2 * T * D * D_OUT_PAD)
    bytes_accessed = (x2d.size * x2d.dtype.itemsize
                      + sum(int(a.size) * a.dtype.itemsize for a in weights)
                      + T * T * 4                      # attention bias
                      + T * (D + D_OUT_PAD) * 4)       # outputs
    cost = pl.CostEstimate(flops=int(flops),
                           transcendentals=LAYERS * H * T * T,
                           bytes_accessed=int(bytes_accessed))

    scores_pad, h2d = pl.pallas_call(
        wsd_kernel,
        out_shape=(jax.ShapeDtypeStruct((T, D_OUT_PAD), jnp.float32),
                   jax.ShapeDtypeStruct((T, D), jnp.float32)),
        compiler_params=pltpu.CompilerParams(
            vmem_limit_bytes=32 * 1024 * 1024),   # explicit; actual use < 1 MB
        cost_estimate=cost,
    )(x2d, kparams['attn_bias'], *weights)

    scores = scores_pad[:, :D_OUT].reshape(B, S, D_OUT)
    h = h2d.reshape(B, S, D)
    return scores, h


# -----------------------------------------------------------------------------
# parameters (canonical layout) + one-time kernel-side parameter transform
# -----------------------------------------------------------------------------
def init_params(key):
    ks = jax.random.split(key, 12)

    def w(k, shape, scale=0.05):   # matmul weights stored bf16 (MXU-native)
        return (scale * jax.random.normal(k, shape, jnp.float32)
                ).astype(jnp.bfloat16)

    def b(k, shape, scale=0.05):   # biases / LN params stay f32
        return scale * jax.random.normal(k, shape, jnp.float32)

    return {
        'wp': w(ks[0], (D_IN, D)), 'bp': b(ks[1], (1, D)),
        'wqkv': w(ks[2], (LAYERS, D, 3 * D)),
        'bqkv': b(ks[3], (LAYERS, 1, 3 * D)),
        'wo': w(ks[4], (LAYERS, D, D)), 'bo': b(ks[5], (LAYERS, 1, D)),
        'g1': jnp.ones((LAYERS, 1, D), jnp.float32),
        'be1': jnp.zeros((LAYERS, 1, D), jnp.float32),
        'w1': w(ks[6], (LAYERS, D, FFN)), 'b1': b(ks[7], (LAYERS, 1, FFN)),
        'w2': w(ks[8], (LAYERS, FFN, D)), 'b2': b(ks[9], (LAYERS, 1, D)),
        'g2': jnp.ones((LAYERS, 1, D), jnp.float32),
        'be2': jnp.zeros((LAYERS, 1, D), jnp.float32),
        'wout': w(ks[10], (D, D_OUT)), 'bout': b(ks[11], (1, D_OUT)),
    }


def prepare_kernel_params(params):
    """One-time parameter transform: fold scales, per-head wo, padded output."""
    f32, bf16 = jnp.float32, jnp.bfloat16
    kp = {}
    # fold * sqrt(d_input) into the input projection
    kp['wp'] = (params['wp'].astype(f32) * IN_SCALE).astype(bf16)
    kp['bp'] = params['bp'].astype(f32) * IN_SCALE
    # fold the 1/sqrt(head_dim) query scaling into the q columns of wqkv/bqkv
    col_scale = jnp.concatenate([jnp.full((D,), ATTN_SCALE, f32),
                                 jnp.ones((2 * D,), f32)])
    kp['wqkv'] = (params['wqkv'].astype(f32) * col_scale).astype(bf16)
    kp['bqkv'] = params['bqkv'].astype(f32) * col_scale
    # output projection grouped per head: rows h*DH:(h+1)*DH -> head h
    kp['wo_h'] = params['wo'].reshape(LAYERS, H, DH, D)
    kp['bo'] = params['bo']
    for n in ('g1', 'be1', 'w1', 'b1', 'w2', 'b2', 'g2', 'be2'):
        kp[n] = params[n]
    # pad the output head to 128 lanes (sliced back to D_OUT in the wrapper)
    kp['wout_pad'] = jnp.pad(params['wout'], ((0, 0), (0, D_OUT_PAD - D_OUT)))
    kp['bout_pad'] = jnp.pad(params['bout'], ((0, 0), (0, D_OUT_PAD - D_OUT)))
    # block-diagonal additive bias: tokens attend only within their sequence
    seq = np.arange(T) // S
    kp['attn_bias'] = jnp.asarray(
        np.where(seq[:, None] == seq[None, :], 0.0, NEG_BIG), dtype=f32)
    return kp


# -----------------------------------------------------------------------------
# independent pure-JAX reference (f32 activations, unfolded scales)
# -----------------------------------------------------------------------------
def ref_forward(x, params):
    f32 = jnp.float32

    def ln(v, g, b_):
        mu = jnp.mean(v, axis=-1, keepdims=True)
        var = jnp.mean((v - mu) ** 2, axis=-1, keepdims=True)
        return (v - mu) / jnp.sqrt(var + LN_EPS) * g + b_

    with jax.default_matmul_precision('float32'):
        h = (x.astype(f32) @ params['wp'].astype(f32)
             + params['bp'].astype(f32)) * IN_SCALE
        for l in range(LAYERS):
            qkv = (h @ params['wqkv'][l].astype(f32)
                   + params['bqkv'][l].astype(f32))
            q = qkv[..., 0:D] * ATTN_SCALE
            k = qkv[..., D:2 * D]
            v = qkv[..., 2 * D:3 * D]
            qh = q.reshape(B, S, H, DH).transpose(0, 2, 1, 3)
            kh = k.reshape(B, S, H, DH).transpose(0, 2, 1, 3)
            vh = v.reshape(B, S, H, DH).transpose(0, 2, 1, 3)
            s = jnp.einsum('bhqd,bhkd->bhqk', qh, kh)
            p = jax.nn.softmax(s, axis=-1)
            ctx = jnp.einsum('bhqk,bhkd->bhqd', p, vh)
            ctx = ctx.transpose(0, 2, 1, 3).reshape(B, S, D)
            attn = ctx @ params['wo'][l].astype(f32) + params['bo'][l]
            h1 = ln(h + attn, params['g1'][l], params['be1'][l])
            ff = jnp.maximum(
                h1 @ params['w1'][l].astype(f32) + params['b1'][l], 0.0)
            ff = ff @ params['w2'][l].astype(f32) + params['b2'][l]
            h = ln(h1 + ff, params['g2'][l], params['be2'][l])
        scores = h @ params['wout'].astype(f32) + params['bout']
    return scores, h


# -----------------------------------------------------------------------------
# test harness
# -----------------------------------------------------------------------------
if __name__ == "__main__":
    key = jax.random.PRNGKey(0)
    params = init_params(key)
    kparams = prepare_kernel_params(params)        # one-time param transform
    x = jax.random.normal(jax.random.fold_in(key, 123), (B, S, D_IN),
                          dtype=jnp.float32)

    scores, h = wsd_forward(x, kparams)            # single fused Pallas call
    jax.block_until_ready((scores, h))

    ref_scores, ref_h = ref_forward(x, params)
    # kernel uses bf16 activations at the MXU; reference is f32 end-to-end
    np.testing.assert_allclose(np.asarray(h), np.asarray(ref_h),
                               rtol=5e-2, atol=5e-2)
    np.testing.assert_allclose(np.asarray(scores), np.asarray(ref_scores),
                               rtol=5e-2, atol=5e-2)
    print("KERNEL_OK")
</pallas_src>

<mosaic_0001>
module attributes {stable_mosaic.version = 11 : i64} {
  func.func @wsd_kernel(%arg0: memref<32x64xbf16, #tpu.memory_space<vmem>>, %arg1: memref<32x32xf32, #tpu.memory_space<vmem>>, %arg2: memref<64x128xbf16, #tpu.memory_space<vmem>>, %arg3: memref<1x128xf32, #tpu.memory_space<vmem>>, %arg4: memref<2x128x384xbf16, #tpu.memory_space<vmem>>, %arg5: memref<2x1x384xf32, #tpu.memory_space<vmem>>, %arg6: memref<2x4x32x128xbf16, #tpu.memory_space<vmem>>, %arg7: memref<2x1x128xf32, #tpu.memory_space<vmem>>, %arg8: memref<2x1x128xf32, #tpu.memory_space<vmem>>, %arg9: memref<2x1x128xf32, #tpu.memory_space<vmem>>, %arg10: memref<2x128x256xbf16, #tpu.memory_space<vmem>>, %arg11: memref<2x1x256xf32, #tpu.memory_space<vmem>>, %arg12: memref<2x256x128xbf16, #tpu.memory_space<vmem>>, %arg13: memref<2x1x128xf32, #tpu.memory_space<vmem>>, %arg14: memref<2x1x128xf32, #tpu.memory_space<vmem>>, %arg15: memref<2x1x128xf32, #tpu.memory_space<vmem>>, %arg16: memref<128x128xbf16, #tpu.memory_space<vmem>>, %arg17: memref<1x128xf32, #tpu.memory_space<vmem>>, %arg18: memref<32x128xf32, #tpu.memory_space<vmem>>, %arg19: memref<32x128xf32, #tpu.memory_space<vmem>>) attributes {dimension_semantics = [], scalar_prefetch = 0 : i64, scratch_operands = 0 : i64, tpu.core_type = #tpu.core_type<tc>} {
    %c0 = arith.constant 0 : index
    %c0_0 = arith.constant 0 : index
    %0 = vector.load %arg1[%c0, %c0_0] : memref<32x32xf32, #tpu.memory_space<vmem>>, vector<32x32xf32>
    %c0_1 = arith.constant 0 : index
    %c0_2 = arith.constant 0 : index
    %1 = vector.load %arg0[%c0_1, %c0_2] : memref<32x64xbf16, #tpu.memory_space<vmem>>, vector<32x64xbf16>
    %c0_3 = arith.constant 0 : index
    %c0_4 = arith.constant 0 : index
    %2 = vector.load %arg2[%c0_3, %c0_4] : memref<64x128xbf16, #tpu.memory_space<vmem>>, vector<64x128xbf16>
    %cst = arith.constant dense<0.000000e+00> : vector<32x128xf32>
    %3 = tpu.matmul %1, %2, %cst {dimension_numbers = #tpu.dot_dimension_numbers<[1], [0], [0], [1], [0, 0, 1, 1], [], []>} : vector<32x64xbf16>, vector<64x128xbf16>, vector<32x128xf32> -> vector<32x128xf32>
    %c0_5 = arith.constant 0 : index
    %c0_6 = arith.constant 0 : index
    %4 = vector.load %arg3[%c0_5, %c0_6] : memref<1x128xf32, #tpu.memory_space<vmem>>, vector<1x128xf32>
    %5 = vector.broadcast %4 : vector<1x128xf32> to vector<32x128xf32>
    %6 = arith.addf %3, %5 : vector<32x128xf32>
    %c0_7 = arith.constant 0 : index
    %c0_8 = arith.constant 0 : index
    %c0_9 = arith.constant 0 : index
    %7 = vector.load %arg4[%c0_7, %c0_8, %c0_9] : memref<2x128x384xbf16, #tpu.memory_space<vmem>>, vector<1x128x384xbf16>
    %8 = vector.shape_cast %7 : vector<1x128x384xbf16> to vector<128x384xbf16>
    %9 = arith.truncf %6 : vector<32x128xf32> to vector<32x128xbf16>
    %cst_10 = arith.constant dense<0.000000e+00> : vector<32x384xf32>
    %10 = tpu.matmul %9, %8, %cst_10 {dimension_numbers = #tpu.dot_dimension_numbers<[1], [0], [0], [1], [0, 0, 1, 1], [], []>} : vector<32x128xbf16>, vector<128x384xbf16>, vector<32x384xf32> -> vector<32x384xf32>
    %c0_11 = arith.constant 0 : index
    %c0_12 = arith.constant 0 : index
    %c0_13 = arith.constant 0 : index
    %11 = vector.load %arg5[%c0_11, %c0_12, %c0_13] : memref<2x1x384xf32, #tpu.memory_space<vmem>>, vector<1x1x384xf32>
    %12 = vector.shape_cast %11 : vector<1x1x384xf32> to vector<1x384xf32>
    %13 = vector.broadcast %12 : vector<1x384xf32> to vector<32x384xf32>
    %14 = arith.addf %10, %13 : vector<32x384xf32>
    %15 = vector.extract_strided_slice %14 {offsets = [0, 0], sizes = [32, 32], strides = [1, 1]} : vector<32x384xf32> to vector<32x32xf32>
    %16 = vector.extract_strided_slice %14 {offsets = [0, 32], sizes = [32, 32], strides = [1, 1]} : vector<32x384xf32> to vector<32x32xf32>
    %17 = vector.extract_strided_slice %14 {offsets = [0, 64], sizes = [32, 32], strides = [1, 1]} : vector<32x384xf32> to vector<32x32xf32>
    %18 = vector.extract_strided_slice %14 {offsets = [0, 96], sizes = [32, 32], strides = [1, 1]} : vector<32x384xf32> to vector<32x32xf32>
    %19 = vector.shape_cast %15 : vector<32x32xf32> to vector<1x32x32xf32>
    %20 = vector.shape_cast %16 : vector<32x32xf32> to vector<1x32x32xf32>
    %21 = vector.shape_cast %17 : vector<32x32xf32> to vector<1x32x32xf32>
    %22 = vector.shape_cast %18 : vector<32x32xf32> to vector<1x32x32xf32>
    %23 = tpu.concatenate %19, %20, %21, %22 in 0 : vector<1x32x32xf32>, vector<1x32x32xf32>, vector<1x32x32xf32>, vector<1x32x32xf32> -> vector<4x32x32xf32>
    %24 = arith.truncf %23 : vector<4x32x32xf32> to vector<4x32x32xbf16>
    %25 = vector.extract_strided_slice %14 {offsets = [0, 128], sizes = [32, 32], strides = [1, 1]} : vector<32x384xf32> to vector<32x32xf32>
    %26 = vector.extract_strided_slice %14 {offsets = [0, 160], sizes = [32, 32], strides = [1, 1]} : vector<32x384xf32> to vector<32x32xf32>
    %27 = vector.extract_strided_slice %14 {offsets = [0, 192], sizes = [32, 32], strides = [1, 1]} : vector<32x384xf32> to vector<32x32xf32>
    %28 = vector.extract_strided_slice %14 {offsets = [0, 224], sizes = [32, 32], strides = [1, 1]} : vector<32x384xf32> to vector<32x32xf32>
    %29 = vector.shape_cast %25 : vector<32x32xf32> to vector<1x32x32xf32>
    %30 = vector.shape_cast %26 : vector<32x32xf32> to vector<1x32x32xf32>
    %31 = vector.shape_cast %27 : vector<32x32xf32> to vector<1x32x32xf32>
    %32 = vector.shape_cast %28 : vector<32x32xf32> to vector<1x32x32xf32>
    %33 = tpu.concatenate %29, %30, %31, %32 in 0 : vector<1x32x32xf32>, vector<1x32x32xf32>, vector<1x32x32xf32>, vector<1x32x32xf32> -> vector<4x32x32xf32>
    %34 = arith.truncf %33 : vector<4x32x32xf32> to vector<4x32x32xbf16>
    %35 = vector.extract_strided_slice %14 {offsets = [0, 256], sizes = [32, 32], strides = [1, 1]} : vector<32x384xf32> to vector<32x32xf32>
    %36 = vector.extract_strided_slice %14 {offsets = [0, 288], sizes = [32, 32], strides = [1, 1]} : vector<32x384xf32> to vector<32x32xf32>
    %37 = vector.extract_strided_slice %14 {offsets = [0, 320], sizes = [32, 32], strides = [1, 1]} : vector<32x384xf32> to vector<32x32xf32>
    %38 = vector.extract_strided_slice %14 {offsets = [0, 352], sizes = [32, 32], strides = [1, 1]} : vector<32x384xf32> to vector<32x32xf32>
    %39 = vector.shape_cast %35 : vector<32x32xf32> to vector<1x32x32xf32>
    %40 = vector.shape_cast %36 : vector<32x32xf32> to vector<1x32x32xf32>
    %41 = vector.shape_cast %37 : vector<32x32xf32> to vector<1x32x32xf32>
    %42 = vector.shape_cast %38 : vector<32x32xf32> to vector<1x32x32xf32>
    %43 = tpu.concatenate %39, %40, %41, %42 in 0 : vector<1x32x32xf32>, vector<1x32x32xf32>, vector<1x32x32xf32>, vector<1x32x32xf32> -> vector<4x32x32xf32>
    %44 = arith.truncf %43 : vector<4x32x32xf32> to vector<4x32x32xbf16>
    "tpu.trace_start"() <{level = 10 : i32, message = "htd,hsd->hts"}> : () -> ()
    %cst_14 = arith.constant dense<0.000000e+00> : vector<4x32x32xf32>
    %45 = tpu.matmul %24, %34, %cst_14 {dimension_numbers = #tpu.dot_dimension_numbers<[2], [2], [1], [1], [0, 0, 0, 1, 1, 1], [0], [0]>} : vector<4x32x32xbf16>, vector<4x32x32xbf16>, vector<4x32x32xf32> -> vector<4x32x32xf32>
    "tpu.trace_stop"() : () -> ()
    %46 = vector.shape_cast %0 : vector<32x32xf32> to vector<1x32x32xf32>
    %47 = vector.broadcast %46 : vector<1x32x32xf32> to vector<4x32x32xf32>
    %48 = arith.addf %45, %47 : vector<4x32x32xf32>
    %cst_15 = arith.constant dense<0xFF800000> : vector<4x32xf32>
    %49 = vector.multi_reduction <maximumf>, %48, %cst_15 [2] : vector<4x32x32xf32> to vector<4x32xf32>
    %50 = vector.shape_cast %49 : vector<4x32xf32> to vector<4x32x1xf32>
    %51 = vector.broadcast %50 : vector<4x32x1xf32> to vector<4x32x32xf32>
    %52 = arith.subf %48, %51 : vector<4x32x32xf32>
    %53 = math.exp %52 : vector<4x32x32xf32>
    %cst_16 = arith.constant dense<0.000000e+00> : vector<4x32xf32>
    %54 = vector.multi_reduction <add>, %53, %cst_16 [2] : vector<4x32x32xf32> to vector<4x32xf32>
    %55 = vector.shape_cast %54 : vector<4x32xf32> to vector<4x32x1xf32>
    %56 = vector.broadcast %55 : vector<4x32x1xf32> to vector<4x32x32xf32>
    %57 = arith.divf %53, %56 : vector<4x32x32xf32>
    %58 = arith.truncf %57 : vector<4x32x32xf32> to vector<4x32x32xbf16>
    "tpu.trace_start"() <{level = 10 : i32, message = "hts,hsd->htd"}> : () -> ()
    %cst_17 = arith.constant dense<0.000000e+00> : vector<4x32x32xf32>
    %59 = tpu.matmul %58, %44, %cst_17 {dimension_numbers = #tpu.dot_dimension_numbers<[2], [1], [1], [2], [0, 0, 0, 1, 1, 2], [0], [0]>} : vector<4x32x32xbf16>, vector<4x32x32xbf16>, vector<4x32x32xf32> -> vector<4x32x32xf32>
    "tpu.trace_stop"() : () -> ()
    %60 = arith.truncf %59 : vector<4x32x32xf32> to vector<4x32x32xbf16>
    %c0_18 = arith.constant 0 : index
    %c0_19 = arith.constant 0 : index
    %c0_20 = arith.constant 0 : index
    %c0_21 = arith.constant 0 : index
    %61 = vector.load %arg6[%c0_18, %c0_19, %c0_20, %c0_21] : memref<2x4x32x128xbf16, #tpu.memory_space<vmem>>, vector<1x4x32x128xbf16>
    %62 = vector.shape_cast %61 : vector<1x4x32x128xbf16> to vector<4x32x128xbf16>
    "tpu.trace_start"() <{level = 10 : i32, message = "htd,hdk->htk"}> : () -> ()
    %cst_22 = arith.constant dense<0.000000e+00> : vector<4x32x128xf32>
    %63 = tpu.matmul %60, %62, %cst_22 {dimension_numbers = #tpu.dot_dimension_numbers<[2], [1], [1], [2], [0, 0, 0, 1, 1, 2], [0], [0]>} : vector<4x32x32xbf16>, vector<4x32x128xbf16>, vector<4x32x128xf32> -> vector<4x32x128xf32>
    "tpu.trace_stop"() : () -> ()
    %cst_23 = arith.constant dense<0.000000e+00> : vector<32x128xf32>
    %64 = vector.multi_reduction <add>, %63, %cst_23 [0] : vector<4x32x128xf32> to vector<32x128xf32>
    %c0_24 = arith.constant 0 : index
    %c0_25 = arith.constant 0 : index
    %c0_26 = arith.constant 0 : index
    %65 = vector.load %arg7[%c0_24, %c0_25, %c0_26] : memref<2x1x128xf32, #tpu.memory_space<vmem>>, vector<1x1x128xf32>
    %66 = vector.shape_cast %65 : vector<1x1x128xf32> to vector<1x128xf32>
    %67 = vector.broadcast %66 : vector<1x128xf32> to vector<32x128xf32>
    %68 = arith.addf %64, %67 : vector<32x128xf32>
    %69 = arith.addf %6, %68 : vector<32x128xf32>
    %c0_27 = arith.constant 0 : index
    %c0_28 = arith.constant 0 : index
    %c0_29 = arith.constant 0 : index
    %70 = vector.load %arg8[%c0_27, %c0_28, %c0_29] : memref<2x1x128xf32, #tpu.memory_space<vmem>>, vector<1x1x128xf32>
    %71 = vector.shape_cast %70 : vector<1x1x128xf32> to vector<1x128xf32>
    %c0_30 = arith.constant 0 : index
    %c0_31 = arith.constant 0 : index
    %c0_32 = arith.constant 0 : index
    %72 = vector.load %arg9[%c0_30, %c0_31, %c0_32] : memref<2x1x128xf32, #tpu.memory_space<vmem>>, vector<1x1x128xf32>
    %73 = vector.shape_cast %72 : vector<1x1x128xf32> to vector<1x128xf32>
    %cst_33 = arith.constant dense<0.000000e+00> : vector<32xf32>
    %74 = vector.multi_reduction <add>, %69, %cst_33 [1] : vector<32x128xf32> to vector<32xf32>
    %75 = vector.shape_cast %74 : vector<32xf32> to vector<32x1xf32>
    %cst_34 = arith.constant 1.280000e+02 : f32
    %76 = vector.broadcast %cst_34 : f32 to vector<32x1xf32>
    %77 = arith.divf %75, %76 : vector<32x1xf32>
    %78 = vector.broadcast %77 : vector<32x1xf32> to vector<32x128xf32>
    %79 = arith.subf %69, %78 : vector<32x128xf32>
    %80 = arith.mulf %79, %79 : vector<32x128xf32>
    %cst_35 = arith.constant dense<0.000000e+00> : vector<32xf32>
    %81 = vector.multi_reduction <add>, %80, %cst_35 [1] : vector<32x128xf32> to vector<32xf32>
    %82 = vector.shape_cast %81 : vector<32xf32> to vector<32x1xf32>
    %cst_36 = arith.constant 1.280000e+02 : f32
    %83 = vector.broadcast %cst_36 : f32 to vector<32x1xf32>
    %84 = arith.divf %82, %83 : vector<32x1xf32>
    %85 = vector.broadcast %77 : vector<32x1xf32> to vector<32x128xf32>
    %86 = arith.subf %69, %85 : vector<32x128xf32>
    %cst_37 = arith.constant 9.99999974E-6 : f32
    %87 = vector.broadcast %cst_37 : f32 to vector<32x1xf32>
    %88 = arith.addf %84, %87 : vector<32x1xf32>
    %89 = math.rsqrt %88 : vector<32x1xf32>
    %90 = vector.broadcast %89 : vector<32x1xf32> to vector<32x128xf32>
    %91 = arith.mulf %86, %90 : vector<32x128xf32>
    %92 = vector.broadcast %71 : vector<1x128xf32> to vector<32x128xf32>
    %93 = arith.mulf %91, %92 : vector<32x128xf32>
    %94 = vector.broadcast %73 : vector<1x128xf32> to vector<32x128xf32>
    %95 = arith.addf %93, %94 : vector<32x128xf32>
    %c0_38 = arith.constant 0 : index
    %c0_39 = arith.constant 0 : index
    %c0_40 = arith.constant 0 : index
    %96 = vector.load %arg10[%c0_38, %c0_39, %c0_40] : memref<2x128x256xbf16, #tpu.memory_space<vmem>>, vector<1x128x256xbf16>
    %97 = vector.shape_cast %96 : vector<1x128x256xbf16> to vector<128x256xbf16>
    %98 = arith.truncf %95 : vector<32x128xf32> to vector<32x128xbf16>
    %cst_41 = arith.constant dense<0.000000e+00> : vector<32x256xf32>
    %99 = tpu.matmul %98, %97, %cst_41 {dimension_numbers = #tpu.dot_dimension_numbers<[1], [0], [0], [1], [0, 0, 1, 1], [], []>} : vector<32x128xbf16>, vector<128x256xbf16>, vector<32x256xf32> -> vector<32x256xf32>
    %c0_42 = arith.constant 0 : index
    %c0_43 = arith.constant 0 : index
    %c0_44 = arith.constant 0 : index
    %100 = vector.load %arg11[%c0_42, %c0_43, %c0_44] : memref<2x1x256xf32, #tpu.memory_space<vmem>>, vector<1x1x256xf32>
    %101 = vector.shape_cast %100 : vector<1x1x256xf32> to vector<1x256xf32>
    %102 = vector.broadcast %101 : vector<1x256xf32> to vector<32x256xf32>
    %103 = arith.addf %99, %102 : vector<32x256xf32>
    %cst_45 = arith.constant 0.000000e+00 : f32
    %104 = vector.broadcast %cst_45 : f32 to vector<32x256xf32>
    %105 = arith.maximumf %103, %104 : vector<32x256xf32>
    %c0_46 = arith.constant 0 : index
    %c0_47 = arith.constant 0 : index
    %c0_48 = arith.constant 0 : index
    %106 = vector.load %arg12[%c0_46, %c0_47, %c0_48] : memref<2x256x128xbf16, #tpu.memory_space<vmem>>, vector<1x256x128xbf16>
    %107 = vector.shape_cast %106 : vector<1x256x128xbf16> to vector<256x128xbf16>
    %108 = arith.truncf %105 : vector<32x256xf32> to vector<32x256xbf16>
    %cst_49 = arith.constant dense<0.000000e+00> : vector<32x128xf32>
    %109 = tpu.matmul %108, %107, %cst_49 {dimension_numbers = #tpu.dot_dimension_numbers<[1], [0], [0], [1], [0, 0, 1, 1], [], []>} : vector<32x256xbf16>, vector<256x128xbf16>, vector<32x128xf32> -> vector<32x128xf32>
    %c0_50 = arith.constant 0 : index
    %c0_51 = arith.constant 0 : index
    %c0_52 = arith.constant 0 : index
    %110 = vector.load %arg13[%c0_50, %c0_51, %c0_52] : memref<2x1x128xf32, #tpu.memory_space<vmem>>, vector<1x1x128xf32>
    %111 = vector.shape_cast %110 : vector<1x1x128xf32> to vector<1x128xf32>
    %112 = vector.broadcast %111 : vector<1x128xf32> to vector<32x128xf32>
    %113 = arith.addf %109, %112 : vector<32x128xf32>
    %114 = arith.addf %95, %113 : vector<32x128xf32>
    %c0_53 = arith.constant 0 : index
    %c0_54 = arith.constant 0 : index
    %c0_55 = arith.constant 0 : index
    %115 = vector.load %arg14[%c0_53, %c0_54, %c0_55] : memref<2x1x128xf32, #tpu.memory_space<vmem>>, vector<1x1x128xf32>
    %116 = vector.shape_cast %115 : vector<1x1x128xf32> to vector<1x128xf32>
    %c0_56 = arith.constant 0 : index
    %c0_57 = arith.constant 0 : index
    %c0_58 = arith.constant 0 : index
    %117 = vector.load %arg15[%c0_56, %c0_57, %c0_58] : memref<2x1x128xf32, #tpu.memory_space<vmem>>, vector<1x1x128xf32>
    %118 = vector.shape_cast %117 : vector<1x1x128xf32> to vector<1x128xf32>
    %cst_59 = arith.constant dense<0.000000e+00> : vector<32xf32>
    %119 = vector.multi_reduction <add>, %114, %cst_59 [1] : vector<32x128xf32> to vector<32xf32>
    %120 = vector.shape_cast %119 : vector<32xf32> to vector<32x1xf32>
    %cst_60 = arith.constant 1.280000e+02 : f32
    %121 = vector.broadcast %cst_60 : f32 to vector<32x1xf32>
    %122 = arith.divf %120, %121 : vector<32x1xf32>
    %123 = vector.broadcast %122 : vector<32x1xf32> to vector<32x128xf32>
    %124 = arith.subf %114, %123 : vector<32x128xf32>
    %125 = arith.mulf %124, %124 : vector<32x128xf32>
    %cst_61 = arith.constant dense<0.000000e+00> : vector<32xf32>
    %126 = vector.multi_reduction <add>, %125, %cst_61 [1] : vector<32x128xf32> to vector<32xf32>
    %127 = vector.shape_cast %126 : vector<32xf32> to vector<32x1xf32>
    %cst_62 = arith.constant 1.280000e+02 : f32
    %128 = vector.broadcast %cst_62 : f32 to vector<32x1xf32>
    %129 = arith.divf %127, %128 : vector<32x1xf32>
    %130 = vector.broadcast %122 : vector<32x1xf32> to vector<32x128xf32>
    %131 = arith.subf %114, %130 : vector<32x128xf32>
    %cst_63 = arith.constant 9.99999974E-6 : f32
    %132 = vector.broadcast %cst_63 : f32 to vector<32x1xf32>
    %133 = arith.addf %129, %132 : vector<32x1xf32>
    %134 = math.rsqrt %133 : vector<32x1xf32>
    %135 = vector.broadcast %134 : vector<32x1xf32> to vector<32x128xf32>
    %136 = arith.mulf %131, %135 : vector<32x128xf32>
    %137 = vector.broadcast %116 : vector<1x128xf32> to vector<32x128xf32>
    %138 = arith.mulf %136, %137 : vector<32x128xf32>
    %139 = vector.broadcast %118 : vector<1x128xf32> to vector<32x128xf32>
    %140 = arith.addf %138, %139 : vector<32x128xf32>
    %c1 = arith.constant 1 : index
    %c0_64 = arith.constant 0 : index
    %c0_65 = arith.constant 0 : index
    %141 = vector.load %arg4[%c1, %c0_64, %c0_65] : memref<2x128x384xbf16, #tpu.memory_space<vmem>>, vector<1x128x384xbf16>
    %142 = vector.shape_cast %141 : vector<1x128x384xbf16> to vector<128x384xbf16>
    %143 = arith.truncf %140 : vector<32x128xf32> to vector<32x128xbf16>
    %cst_66 = arith.constant dense<0.000000e+00> : vector<32x384xf32>
    %144 = tpu.matmul %143, %142, %cst_66 {dimension_numbers = #tpu.dot_dimension_numbers<[1], [0], [0], [1], [0, 0, 1, 1], [], []>} : vector<32x128xbf16>, vector<128x384xbf16>, vector<32x384xf32> -> vector<32x384xf32>
    %c1_67 = arith.constant 1 : index
    %c0_68 = arith.constant 0 : index
    %c0_69 = arith.constant 0 : index
    %145 = vector.load %arg5[%c1_67, %c0_68, %c0_69] : memref<2x1x384xf32, #tpu.memory_space<vmem>>, vector<1x1x384xf32>
    %146 = vector.shape_cast %145 : vector<1x1x384xf32> to vector<1x384xf32>
    %147 = vector.broadcast %146 : vector<1x384xf32> to vector<32x384xf32>
    %148 = arith.addf %144, %147 : vector<32x384xf32>
    %149 = vector.extract_strided_slice %148 {offsets = [0, 0], sizes = [32, 32], strides = [1, 1]} : vector<32x384xf32> to vector<32x32xf32>
    %150 = vector.extract_strided_slice %148 {offsets = [0, 32], sizes = [32, 32], strides = [1, 1]} : vector<32x384xf32> to vector<32x32xf32>
    %151 = vector.extract_strided_slice %148 {offsets = [0, 64], sizes = [32, 32], strides = [1, 1]} : vector<32x384xf32> to vector<32x32xf32>
    %152 = vector.extract_strided_slice %148 {offsets = [0, 96], sizes = [32, 32], strides = [1, 1]} : vector<32x384xf32> to vector<32x32xf32>
    %153 = vector.shape_cast %149 : vector<32x32xf32> to vector<1x32x32xf32>
    %154 = vector.shape_cast %150 : vector<32x32xf32> to vector<1x32x32xf32>
    %155 = vector.shape_cast %151 : vector<32x32xf32> to vector<1x32x32xf32>
    %156 = vector.shape_cast %152 : vector<32x32xf32> to vector<1x32x32xf32>
    %157 = tpu.concatenate %153, %154, %155, %156 in 0 : vector<1x32x32xf32>, vector<1x32x32xf32>, vector<1x32x32xf32>, vector<1x32x32xf32> -> vector<4x32x32xf32>
    %158 = arith.truncf %157 : vector<4x32x32xf32> to vector<4x32x32xbf16>
    %159 = vector.extract_strided_slice %148 {offsets = [0, 128], sizes = [32, 32], strides = [1, 1]} : vector<32x384xf32> to vector<32x32xf32>
    %160 = vector.extract_strided_slice %148 {offsets = [0, 160], sizes = [32, 32], strides = [1, 1]} : vector<32x384xf32> to vector<32x32xf32>
    %161 = vector.extract_strided_slice %148 {offsets = [0, 192], sizes = [32, 32], strides = [1, 1]} : vector<32x384xf32> to vector<32x32xf32>
    %162 = vector.extract_strided_slice %148 {offsets = [0, 224], sizes = [32, 32], strides = [1, 1]} : vector<32x384xf32> to vector<32x32xf32>
    %163 = vector.shape_cast %159 : vector<32x32xf32> to vector<1x32x32xf32>
    %164 = vector.shape_cast %160 : vector<32x32xf32> to vector<1x32x32xf32>
    %165 = vector.shape_cast %161 : vector<32x32xf32> to vector<1x32x32xf32>
    %166 = vector.shape_cast %162 : vector<32x32xf32> to vector<1x32x32xf32>
    %167 = tpu.concatenate %163, %164, %165, %166 in 0 : vector<1x32x32xf32>, vector<1x32x32xf32>, vector<1x32x32xf32>, vector<1x32x32xf32> -> vector<4x32x32xf32>
    %168 = arith.truncf %167 : vector<4x32x32xf32> to vector<4x32x32xbf16>
    %169 = vector.extract_strided_slice %148 {offsets = [0, 256], sizes = [32, 32], strides = [1, 1]} : vector<32x384xf32> to vector<32x32xf32>
    %170 = vector.extract_strided_slice %148 {offsets = [0, 288], sizes = [32, 32], strides = [1, 1]} : vector<32x384xf32> to vector<32x32xf32>
    %171 = vector.extract_strided_slice %148 {offsets = [0, 320], sizes = [32, 32], strides = [1, 1]} : vector<32x384xf32> to vector<32x32xf32>
    %172 = vector.extract_strided_slice %148 {offsets = [0, 352], sizes = [32, 32], strides = [1, 1]} : vector<32x384xf32> to vector<32x32xf32>
    %173 = vector.shape_cast %169 : vector<32x32xf32> to vector<1x32x32xf32>
    %174 = vector.shape_cast %170 : vector<32x32xf32> to vector<1x32x32xf32>
    %175 = vector.shape_cast %171 : vector<32x32xf32> to vector<1x32x32xf32>
    %176 = vector.shape_cast %172 : vector<32x32xf32> to vector<1x32x32xf32>
    %177 = tpu.concatenate %173, %174, %175, %176 in 0 : vector<1x32x32xf32>, vector<1x32x32xf32>, vector<1x32x32xf32>, vector<1x32x32xf32> -> vector<4x32x32xf32>
    %178 = arith.truncf %177 : vector<4x32x32xf32> to vector<4x32x32xbf16>
    "tpu.trace_start"() <{level = 10 : i32, message = "htd,hsd->hts"}> : () -> ()
    %cst_70 = arith.constant dense<0.000000e+00> : vector<4x32x32xf32>
    %179 = tpu.matmul %158, %168, %cst_70 {dimension_numbers = #tpu.dot_dimension_numbers<[2], [2], [1], [1], [0, 0, 0, 1, 1, 1], [0], [0]>} : vector<4x32x32xbf16>, vector<4x32x32xbf16>, vector<4x32x32xf32> -> vector<4x32x32xf32>
    "tpu.trace_stop"() : () -> ()
    %180 = vector.shape_cast %0 : vector<32x32xf32> to vector<1x32x32xf32>
    %181 = vector.broadcast %180 : vector<1x32x32xf32> to vector<4x32x32xf32>
    %182 = arith.addf %179, %181 : vector<4x32x32xf32>
    %cst_71 = arith.constant dense<0xFF800000> : vector<4x32xf32>
    %183 = vector.multi_reduction <maximumf>, %182, %cst_71 [2] : vector<4x32x32xf32> to vector<4x32xf32>
    %184 = vector.shape_cast %183 : vector<4x32xf32> to vector<4x32x1xf32>
    %185 = vector.broadcast %184 : vector<4x32x1xf32> to vector<4x32x32xf32>
    %186 = arith.subf %182, %185 : vector<4x32x32xf32>
    %187 = math.exp %186 : vector<4x32x32xf32>
    %cst_72 = arith.constant dense<0.000000e+00> : vector<4x32xf32>
    %188 = vector.multi_reduction <add>, %187, %cst_72 [2] : vector<4x32x32xf32> to vector<4x32xf32>
    %189 = vector.shape_cast %188 : vector<4x32xf32> to vector<4x32x1xf32>
    %190 = vector.broadcast %189 : vector<4x32x1xf32> to vector<4x32x32xf32>
    %191 = arith.divf %187, %190 : vector<4x32x32xf32>
    %192 = arith.truncf %191 : vector<4x32x32xf32> to vector<4x32x32xbf16>
    "tpu.trace_start"() <{level = 10 : i32, message = "hts,hsd->htd"}> : () -> ()
    %cst_73 = arith.constant dense<0.000000e+00> : vector<4x32x32xf32>
    %193 = tpu.matmul %192, %178, %cst_73 {dimension_numbers = #tpu.dot_dimension_numbers<[2], [1], [1], [2], [0, 0, 0, 1, 1, 2], [0], [0]>} : vector<4x32x32xbf16>, vector<4x32x32xbf16>, vector<4x32x32xf32> -> vector<4x32x32xf32>
    "tpu.trace_stop"() : () -> ()
    %194 = arith.truncf %193 : vector<4x32x32xf32> to vector<4x32x32xbf16>
    %c1_74 = arith.constant 1 : index
    %c0_75 = arith.constant 0 : index
    %c0_76 = arith.constant 0 : index
    %c0_77 = arith.constant 0 : index
    %195 = vector.load %arg6[%c1_74, %c0_75, %c0_76, %c0_77] : memref<2x4x32x128xbf16, #tpu.memory_space<vmem>>, vector<1x4x32x128xbf16>
    %196 = vector.shape_cast %195 : vector<1x4x32x128xbf16> to vector<4x32x128xbf16>
    "tpu.trace_start"() <{level = 10 : i32, message = "htd,hdk->htk"}> : () -> ()
    %cst_78 = arith.constant dense<0.000000e+00> : vector<4x32x128xf32>
    %197 = tpu.matmul %194, %196, %cst_78 {dimension_numbers = #tpu.dot_dimension_numbers<[2], [1], [1], [2], [0, 0, 0, 1, 1, 2], [0], [0]>} : vector<4x32x32xbf16>, vector<4x32x128xbf16>, vector<4x32x128xf32> -> vector<4x32x128xf32>
    "tpu.trace_stop"() : () -> ()
    %cst_79 = arith.constant dense<0.000000e+00> : vector<32x128xf32>
    %198 = vector.multi_reduction <add>, %197, %cst_79 [0] : vector<4x32x128xf32> to vector<32x128xf32>
    %c1_80 = arith.constant 1 : index
    %c0_81 = arith.constant 0 : index
    %c0_82 = arith.constant 0 : index
    %199 = vector.load %arg7[%c1_80, %c0_81, %c0_82] : memref<2x1x128xf32, #tpu.memory_space<vmem>>, vector<1x1x128xf32>
    %200 = vector.shape_cast %199 : vector<1x1x128xf32> to vector<1x128xf32>
    %201 = vector.broadcast %200 : vector<1x128xf32> to vector<32x128xf32>
    %202 = arith.addf %198, %201 : vector<32x128xf32>
    %203 = arith.addf %140, %202 : vector<32x128xf32>
    %c1_83 = arith.constant 1 : index
    %c0_84 = arith.constant 0 : index
    %c0_85 = arith.constant 0 : index
    %204 = vector.load %arg8[%c1_83, %c0_84, %c0_85] : memref<2x1x128xf32, #tpu.memory_space<vmem>>, vector<1x1x128xf32>
    %205 = vector.shape_cast %204 : vector<1x1x128xf32> to vector<1x128xf32>
    %c1_86 = arith.constant 1 : index
    %c0_87 = arith.constant 0 : index
    %c0_88 = arith.constant 0 : index
    %206 = vector.load %arg9[%c1_86, %c0_87, %c0_88] : memref<2x1x128xf32, #tpu.memory_space<vmem>>, vector<1x1x128xf32>
    %207 = vector.shape_cast %206 : vector<1x1x128xf32> to vector<1x128xf32>
    %cst_89 = arith.constant dense<0.000000e+00> : vector<32xf32>
    %208 = vector.multi_reduction <add>, %203, %cst_89 [1] : vector<32x128xf32> to vector<32xf32>
    %209 = vector.shape_cast %208 : vector<32xf32> to vector<32x1xf32>
    %cst_90 = arith.constant 1.280000e+02 : f32
    %210 = vector.broadcast %cst_90 : f32 to vector<32x1xf32>
    %211 = arith.divf %209, %210 : vector<32x1xf32>
    %212 = vector.broadcast %211 : vector<32x1xf32> to vector<32x128xf32>
    %213 = arith.subf %203, %212 : vector<32x128xf32>
    %214 = arith.mulf %213, %213 : vector<32x128xf32>
    %cst_91 = arith.constant dense<0.000000e+00> : vector<32xf32>
    %215 = vector.multi_reduction <add>, %214, %cst_91 [1] : vector<32x128xf32> to vector<32xf32>
    %216 = vector.shape_cast %215 : vector<32xf32> to vector<32x1xf32>
    %cst_92 = arith.constant 1.280000e+02 : f32
    %217 = vector.broadcast %cst_92 : f32 to vector<32x1xf32>
    %218 = arith.divf %216, %217 : vector<32x1xf32>
    %219 = vector.broadcast %211 : vector<32x1xf32> to vector<32x128xf32>
    %220 = arith.subf %203, %219 : vector<32x128xf32>
    %cst_93 = arith.constant 9.99999974E-6 : f32
    %221 = vector.broadcast %cst_93 : f32 to vector<32x1xf32>
    %222 = arith.addf %218, %221 : vector<32x1xf32>
    %223 = math.rsqrt %222 : vector<32x1xf32>
    %224 = vector.broadcast %223 : vector<32x1xf32> to vector<32x128xf32>
    %225 = arith.mulf %220, %224 : vector<32x128xf32>
    %226 = vector.broadcast %205 : vector<1x128xf32> to vector<32x128xf32>
    %227 = arith.mulf %225, %226 : vector<32x128xf32>
    %228 = vector.broadcast %207 : vector<1x128xf32> to vector<32x128xf32>
    %229 = arith.addf %227, %228 : vector<32x128xf32>
    %c1_94 = arith.constant 1 : index
    %c0_95 = arith.constant 0 : index
    %c0_96 = arith.constant 0 : index
    %230 = vector.load %arg10[%c1_94, %c0_95, %c0_96] : memref<2x128x256xbf16, #tpu.memory_space<vmem>>, vector<1x128x256xbf16>
    %231 = vector.shape_cast %230 : vector<1x128x256xbf16> to vector<128x256xbf16>
    %232 = arith.truncf %229 : vector<32x128xf32> to vector<32x128xbf16>
    %cst_97 = arith.constant dense<0.000000e+00> : vector<32x256xf32>
    %233 = tpu.matmul %232, %231, %cst_97 {dimension_numbers = #tpu.dot_dimension_numbers<[1], [0], [0], [1], [0, 0, 1, 1], [], []>} : vector<32x128xbf16>, vector<128x256xbf16>, vector<32x256xf32> -> vector<32x256xf32>
    %c1_98 = arith.constant 1 : index
    %c0_99 = arith.constant 0 : index
    %c0_100 = arith.constant 0 : index
    %234 = vector.load %arg11[%c1_98, %c0_99, %c0_100] : memref<2x1x256xf32, #tpu.memory_space<vmem>>, vector<1x1x256xf32>
    %235 = vector.shape_cast %234 : vector<1x1x256xf32> to vector<1x256xf32>
    %236 = vector.broadcast %235 : vector<1x256xf32> to vector<32x256xf32>
    %237 = arith.addf %233, %236 : vector<32x256xf32>
    %cst_101 = arith.constant 0.000000e+00 : f32
    %238 = vector.broadcast %cst_101 : f32 to vector<32x256xf32>
    %239 = arith.maximumf %237, %238 : vector<32x256xf32>
    %c1_102 = arith.constant 1 : index
    %c0_103 = arith.constant 0 : index
    %c0_104 = arith.constant 0 : index
    %240 = vector.load %arg12[%c1_102, %c0_103, %c0_104] : memref<2x256x128xbf16, #tpu.memory_space<vmem>>, vector<1x256x128xbf16>
    %241 = vector.shape_cast %240 : vector<1x256x128xbf16> to vector<256x128xbf16>
    %242 = arith.truncf %239 : vector<32x256xf32> to vector<32x256xbf16>
    %cst_105 = arith.constant dense<0.000000e+00> : vector<32x128xf32>
    %243 = tpu.matmul %242, %241, %cst_105 {dimension_numbers = #tpu.dot_dimension_numbers<[1], [0], [0], [1], [0, 0, 1, 1], [], []>} : vector<32x256xbf16>, vector<256x128xbf16>, vector<32x128xf32> -> vector<32x128xf32>
    %c1_106 = arith.constant 1 : index
    %c0_107 = arith.constant 0 : index
    %c0_108 = arith.constant 0 : index
    %244 = vector.load %arg13[%c1_106, %c0_107, %c0_108] : memref<2x1x128xf32, #tpu.memory_space<vmem>>, vector<1x1x128xf32>
    %245 = vector.shape_cast %244 : vector<1x1x128xf32> to vector<1x128xf32>
    %246 = vector.broadcast %245 : vector<1x128xf32> to vector<32x128xf32>
    %247 = arith.addf %243, %246 : vector<32x128xf32>
    %248 = arith.addf %229, %247 : vector<32x128xf32>
    %c1_109 = arith.constant 1 : index
    %c0_110 = arith.constant 0 : index
    %c0_111 = arith.constant 0 : index
    %249 = vector.load %arg14[%c1_109, %c0_110, %c0_111] : memref<2x1x128xf32, #tpu.memory_space<vmem>>, vector<1x1x128xf32>
    %250 = vector.shape_cast %249 : vector<1x1x128xf32> to vector<1x128xf32>
    %c1_112 = arith.constant 1 : index
    %c0_113 = arith.constant 0 : index
    %c0_114 = arith.constant 0 : index
    %251 = vector.load %arg15[%c1_112, %c0_113, %c0_114] : memref<2x1x128xf32, #tpu.memory_space<vmem>>, vector<1x1x128xf32>
    %252 = vector.shape_cast %251 : vector<1x1x128xf32> to vector<1x128xf32>
    %cst_115 = arith.constant dense<0.000000e+00> : vector<32xf32>
    %253 = vector.multi_reduction <add>, %248, %cst_115 [1] : vector<32x128xf32> to vector<32xf32>
    %254 = vector.shape_cast %253 : vector<32xf32> to vector<32x1xf32>
    %cst_116 = arith.constant 1.280000e+02 : f32
    %255 = vector.broadcast %cst_116 : f32 to vector<32x1xf32>
    %256 = arith.divf %254, %255 : vector<32x1xf32>
    %257 = vector.broadcast %256 : vector<32x1xf32> to vector<32x128xf32>
    %258 = arith.subf %248, %257 : vector<32x128xf32>
    %259 = arith.mulf %258, %258 : vector<32x128xf32>
    %cst_117 = arith.constant dense<0.000000e+00> : vector<32xf32>
    %260 = vector.multi_reduction <add>, %259, %cst_117 [1] : vector<32x128xf32> to vector<32xf32>
    %261 = vector.shape_cast %260 : vector<32xf32> to vector<32x1xf32>
    %cst_118 = arith.constant 1.280000e+02 : f32
    %262 = vector.broadcast %cst_118 : f32 to vector<32x1xf32>
    %263 = arith.divf %261, %262 : vector<32x1xf32>
    %264 = vector.broadcast %256 : vector<32x1xf32> to vector<32x128xf32>
    %265 = arith.subf %248, %264 : vector<32x128xf32>
    %cst_119 = arith.constant 9.99999974E-6 : f32
    %266 = vector.broadcast %cst_119 : f32 to vector<32x1xf32>
    %267 = arith.addf %263, %266 : vector<32x1xf32>
    %268 = math.rsqrt %267 : vector<32x1xf32>
    %269 = vector.broadcast %268 : vector<32x1xf32> to vector<32x128xf32>
    %270 = arith.mulf %265, %269 : vector<32x128xf32>
    %271 = vector.broadcast %250 : vector<1x128xf32> to vector<32x128xf32>
    %272 = arith.mulf %270, %271 : vector<32x128xf32>
    %273 = vector.broadcast %252 : vector<1x128xf32> to vector<32x128xf32>
    %274 = arith.addf %272, %273 : vector<32x128xf32>
    %c0_120 = arith.constant 0 : index
    %c0_121 = arith.constant 0 : index
    %275 = vector.load %arg16[%c0_120, %c0_121] : memref<128x128xbf16, #tpu.memory_space<vmem>>, vector<128x128xbf16>
    %276 = arith.truncf %274 : vector<32x128xf32> to vector<32x128xbf16>
    %cst_122 = arith.constant dense<0.000000e+00> : vector<32x128xf32>
    %277 = tpu.matmul %276, %275, %cst_122 {dimension_numbers = #tpu.dot_dimension_numbers<[1], [0], [0], [1], [0, 0, 1, 1], [], []>} : vector<32x128xbf16>, vector<128x128xbf16>, vector<32x128xf32> -> vector<32x128xf32>
    %c0_123 = arith.constant 0 : index
    %c0_124 = arith.constant 0 : index
    %278 = vector.load %arg17[%c0_123, %c0_124] : memref<1x128xf32, #tpu.memory_space<vmem>>, vector<1x128xf32>
    %279 = vector.broadcast %278 : vector<1x128xf32> to vector<32x128xf32>
    %280 = arith.addf %277, %279 : vector<32x128xf32>
    %c0_125 = arith.constant 0 : index
    %c0_126 = arith.constant 0 : index
    %281 = vector.load %arg18[%c0_125, %c0_126] : memref<32x128xf32, #tpu.memory_space<vmem>>, vector<32x128xf32>
    tpu.vector_store %arg18[%c0_125, %c0_126], %280 {strides = array<i32>} : memref<32x128xf32, #tpu.memory_space<vmem>>, vector<32x128xf32>,
    %c0_127 = arith.constant 0 : index
    %c0_128 = arith.constant 0 : index
    %282 = vector.load %arg19[%c0_127, %c0_128] : memref<32x128xf32, #tpu.memory_space<vmem>>, vector<32x128xf32>
    tpu.vector_store %arg19[%c0_127, %c0_128], %274 {strides = array<i32>} : memref<32x128xf32, #tpu.memory_space<vmem>>, vector<32x128xf32>,
    return
  }
}

</mosaic_0001>

<llo_original>
// kernel: tpu_custom_call.1
$region0: #{tpu_custom_call.1}
  #allocation0 [shape = 'u32[]', space=smem, size = 0x4, offset = 0x4, fixed_abs, tag = 'smem constant byte address 0x4 - core index']
  #allocation1 [shape = 'u32[144,128]{1,0:T(1,128)}', space=vmem, size = 0x12000, scoped, tag = 'internal scratch']
  %s0 = inlined_call_operand.hbm [shape: bf16[32,64], index: 0, kind: input, shape index: {}]
  %s1 = inlined_call_operand.hbm [shape: f32[32,32], index: 1, kind: input, shape index: {}]
  %s2 = inlined_call_operand.hbm [shape: bf16[64,128], index: 2, kind: input, shape index: {}]
  %s3 = inlined_call_operand.hbm [shape: f32[1,128], index: 3, kind: input, shape index: {}]
  %s4 = inlined_call_operand.hbm [shape: bf16[2,128,384], index: 4, kind: input, shape index: {}]
  %s5 = inlined_call_operand.vmem [shape: f32[2,1,384], index: 5, kind: input, shape index: {}]
  %s6 = inlined_call_operand.hbm [shape: bf16[2,4,32,128], index: 6, kind: input, shape index: {}]
  %s7 = inlined_call_operand.vmem [shape: f32[2,1,128], index: 7, kind: input, shape index: {}]
  %s8 = inlined_call_operand.vmem [shape: f32[2,1,128], index: 8, kind: input, shape index: {}]
  %s9 = inlined_call_operand.vmem [shape: f32[2,1,128], index: 9, kind: input, shape index: {}]
  %s10 = inlined_call_operand.hbm [shape: bf16[2,128,256], index: 10, kind: input, shape index: {}]
  %s11 = inlined_call_operand.vmem [shape: f32[2,1,256], index: 11, kind: input, shape index: {}]
  %s12 = inlined_call_operand.hbm [shape: bf16[2,256,128], index: 12, kind: input, shape index: {}]
  %s13 = inlined_call_operand.vmem [shape: f32[2,1,128], index: 13, kind: input, shape index: {}]
  %s14 = inlined_call_operand.vmem [shape: f32[2,1,128], index: 14, kind: input, shape index: {}]
  %s15 = inlined_call_operand.vmem [shape: f32[2,1,128], index: 15, kind: input, shape index: {}]
  %s16 = inlined_call_operand.hbm [shape: bf16[128,128], index: 16, kind: input, shape index: {}]
  %s17 = inlined_call_operand.vmem [shape: f32[1,128], index: 17, kind: input, shape index: {}]
  %s18 = inlined_call_operand.hbm [shape: f32[32,128], index: 18, kind: output, shape index: {0}]
  %s19 = inlined_call_operand.hbm [shape: f32[32,128], index: 19, kind: output, shape index: {1}]
  %20 = xla_tuple %s18, %s19
  %s21 = sld [smem:[#allocation0]]
  $region126: #{tpu_custom_call.1} parent=0
    _
  %s23 = ssub.s32 1, %s21
  %s24 = scalar_select 0, %s23, %s21
  $region1: #{tpu_custom_call.1} parent=0
    #allocation2 [shape = 'u8[8192]{0}', space=vmem, size = 0x2000, scoped, tag = 'input window, operand 0, single buffered']
    #allocation3 [shape = 's32[1]{0}', space=sflag, size = 0x4, scoped, tag = 'scoped memory for tpu_custom_call.1']
    #allocation4 [shape = 's32[1]{0}', space=sflag, size = 0x4, scoped, tag = 'scoped memory for tpu_custom_call.1']
    #allocation5 [shape = 'u8[16384]{0}', space=vmem, size = 0x4000, scoped, tag = 'input window, operand 1, single buffered']
    #allocation6 [shape = 's32[1]{0}', space=sflag, size = 0x4, scoped, tag = 'scoped memory for tpu_custom_call.1']
    #allocation7 [shape = 'u8[16384]{0}', space=vmem, size = 0x4000, scoped, tag = 'input window, operand 2, single buffered']
    #allocation8 [shape = 'u8[512]{0}', space=vmem, size = 0x400, scoped, tag = 'input window, operand 3, single buffered']
    #allocation9 [shape = 's32[1]{0}', space=sflag, size = 0x4, scoped, tag = 'scoped memory for tpu_custom_call.1']
    #allocation10 [shape = 'u8[196608]{0}', space=vmem, size = 0x30000, scoped, tag = 'input window, operand 4, single buffered']
    #allocation11 [shape = 'u8[65536]{0}', space=vmem, size = 0x10000, scoped, tag = 'input window, operand 6, single buffered']
    #allocation12 [shape = 's32[1]{0}', space=sflag, size = 0x4, scoped, tag = 'scoped memory for tpu_custom_call.1']
    #allocation13 [shape = 'u8[131072]{0}', space=vmem, size = 0x20000, scoped, tag = 'input window, operand 10, single buffered']
    #allocation14 [shape = 'u8[131072]{0}', space=vmem, size = 0x20000, scoped, tag = 'input window, operand 12, single buffered']
    #allocation15 [shape = 's32[1]{0}', space=sflag, size = 0x4, scoped, tag = 'scoped memory for tpu_custom_call.1']
    #allocation16 [shape = 'u8[32768]{0}', space=vmem, size = 0x8000, scoped, tag = 'input window, operand 16, single buffered']
    #allocation17 [shape = 'u8[16384]{0}', space=vmem, size = 0x4000, scoped, tag = 'output window, operand 0, single buffered']
    #allocation18 [shape = 'u8[16384]{0}', space=vmem, size = 0x4000, scoped, tag = 'output window, operand 1, single buffered']
    #allocation19 [shape = 's32[1]{0}', space=sflag, size = 0x4, scoped, tag = 'scoped memory for tpu_custom_call.1']
    %25 = vsyncpa [#allocation3], 0
    %26 = vsyncpa [#allocation6], 0
    %27 = vsyncpa [#allocation9], 0
    %28 = vsyncpa [#allocation12], 0
    %29 = vsyncpa [#allocation15], 0
    %30 = vsyncpa [#allocation4], 0
    %31 = vsyncpa [#allocation19], 0
    // Predicated region
    $region2: #{tpu_custom_call.1} parent=1 // pred_check
      _
    $region3: #{tpu_custom_call.1} parent=1 // pred_check_branch
      %33 = sbr.rel (0) target = $region5
    $region4: #{tpu_custom_call.1} parent=1 // pred_region
      %s35 = ssub.s32 256, 256
      %36 = vsyncadd [#allocation3], %s35
      %s37 = sshll.u32 [#allocation2], 4
      %s38 = int_to_ptr.vmem [resolvable:$true] %s37
      %43 = dma.hbm_to_vmem [thread:$0]  %s0, 256, %s38, [#allocation3], 64, 64, 4
    $region5: #{tpu_custom_call.1} parent=1 // pred_fallthru
      _
    // Predicated region
    $region6: #{tpu_custom_call.1} parent=1 // pred_check
      _
    $region7: #{tpu_custom_call.1} parent=1 // pred_check_branch
      %45 = sbr.rel (0) target = $region9
    $region8: #{tpu_custom_call.1} parent=1 // pred_region
      %s47 = ssub.s32 512, 512
      %48 = vsyncadd [#allocation6], %s47
      %s49 = sshll.u32 [#allocation5], 4
      %s50 = int_to_ptr.vmem [resolvable:$true] %s49
      %55 = dma.hbm_to_vmem [thread:$0]  %s1, 512, %s50, [#allocation6], 128, 128, 8
    $region9: #{tpu_custom_call.1} parent=1 // pred_fallthru
      _
    // Predicated region
    $region10: #{tpu_custom_call.1} parent=1 // pred_check
      _
    $region11: #{tpu_custom_call.1} parent=1 // pred_check_branch
      %57 = sbr.rel (0) target = $region13
    $region12: #{tpu_custom_call.1} parent=1 // pred_region
      %s59 = ssub.s32 512, 512
      %60 = vsyncadd [#allocation6], %s59
      %s61 = sshll.u32 [#allocation7], 4
      %s62 = int_to_ptr.vmem [resolvable:$true] %s61
      %67 = dma.hbm_to_vmem [thread:$0]  %s2, 512, %s62, [#allocation6], 64, 64, 4
    $region13: #{tpu_custom_call.1} parent=1 // pred_fallthru
      _
    // Predicated region
    $region14: #{tpu_custom_call.1} parent=1 // pred_check
      _
    $region15: #{tpu_custom_call.1} parent=1 // pred_check_branch
      %69 = sbr.rel (0) target = $region17
    $region16: #{tpu_custom_call.1} parent=1 // pred_region
      %s71 = ssub.s32 16, 16
      %72 = vsyncadd [#allocation9], %s71
      %s74 = sshll.u32 [#allocation8], 4
      %s75 = int_to_ptr.vmem [resolvable:$true] %s74
      %77 = dma.hbm_to_vmem [thread:$0]  %s3, 16, %s75, [#allocation9]
    $region17: #{tpu_custom_call.1} parent=1 // pred_fallthru
      _
    // Predicated region
    $region18: #{tpu_custom_call.1} parent=1 // pred_check
      _
    $region19: #{tpu_custom_call.1} parent=1 // pred_check_branch
      %79 = sbr.rel (0) target = $region21
    $region20: #{tpu_custom_call.1} parent=1 // pred_region
      %s81 = ssub.s32 6144, 6144
      %82 = vsyncadd [#allocation9], %s81
      %s83 = sshll.u32 [#allocation10], 4
      %s84 = int_to_ptr.vmem [resolvable:$true] %s83
      %89 = dma.hbm_to_vmem [thread:$0]  %s4, 6144, %s84, [#allocation9], 192, 192, 12
    $region21: #{tpu_custom_call.1} parent=1 // pred_fallthru
      _
    // Predicated region
    $region22: #{tpu_custom_call.1} parent=1 // pred_check
      _
    $region23: #{tpu_custom_call.1} parent=1 // pred_check_branch
      %91 = sbr.rel (0) target = $region25
    $region24: #{tpu_custom_call.1} parent=1 // pred_region
      _
    $region25: #{tpu_custom_call.1} parent=1 // pred_fallthru
      _
    // Predicated region
    $region26: #{tpu_custom_call.1} parent=1 // pred_check
      _
    $region27: #{tpu_custom_call.1} parent=1 // pred_check_branch
      %93 = sbr.rel (0) target = $region29
    $region28: #{tpu_custom_call.1} parent=1 // pred_region
      %s95 = ssub.s32 2048, 2048
      %96 = vsyncadd [#allocation12], %s95
      %s97 = sshll.u32 [#allocation11], 4
      %s98 = int_to_ptr.vmem [resolvable:$true] %s97
      %103 = dma.hbm_to_vmem [thread:$0]  %s6, 2048, %s98, [#allocation12], 64, 64, 4
    $region29: #{tpu_custom_call.1} parent=1 // pred_fallthru
      _
    // Predicated region
    $region30: #{tpu_custom_call.1} parent=1 // pred_check
      _
    $region31: #{tpu_custom_call.1} parent=1 // pred_check_branch
      %105 = sbr.rel (0) target = $region33
    $region32: #{tpu_custom_call.1} parent=1 // pred_region
      _
    $region33: #{tpu_custom_call.1} parent=1 // pred_fallthru
      _
    // Predicated region
    $region34: #{tpu_custom_call.1} parent=1 // pred_check
      _
    $region35: #{tpu_custom_call.1} parent=1 // pred_check_branch
      %107 = sbr.rel (0) target = $region37
    $region36: #{tpu_custom_call.1} parent=1 // pred_region
      _
    $region37: #{tpu_custom_call.1} parent=1 // pred_fallthru
      _
    // Predicated region
    $region38: #{tpu_custom_call.1} parent=1 // pred_check
      _
    $region39: #{tpu_custom_call.1} parent=1 // pred_check_branch
      %109 = sbr.rel (0) target = $region41
    $region40: #{tpu_custom_call.1} parent=1 // pred_region
      _
    $region41: #{tpu_custom_call.1} parent=1 // pred_fallthru
      _
    // Predicated region
    $region42: #{tpu_custom_call.1} parent=1 // pred_check
      _
    $region43: #{tpu_custom_call.1} parent=1 // pred_check_branch
      %111 = sbr.rel (0) target = $region45
    $region44: #{tpu_custom_call.1} parent=1 // pred_region
      %s113 = ssub.s32 4096, 4096
      %114 = vsyncadd [#allocation12], %s113
      %s115 = sshll.u32 [#allocation13], 4
      %s116 = int_to_ptr.vmem [resolvable:$true] %s115
      %121 = dma.hbm_to_vmem [thread:$0]  %s10, 4096, %s116, [#allocation12], 128, 128, 8
    $region45: #{tpu_custom_call.1} parent=1 // pred_fallthru
      _
    // Predicated region
    $region46: #{tpu_custom_call.1} parent=1 // pred_check
      _
    $region47: #{tpu_custom_call.1} parent=1 // pred_check_branch
      %123 = sbr.rel (0) target = $region49
    $region48: #{tpu_custom_call.1} parent=1 // pred_region
      _
    $region49: #{tpu_custom_call.1} parent=1 // pred_fallthru
      _
    // Predicated region
    $region50: #{tpu_custom_call.1} parent=1 // pred_check
      _
    $region51: #{tpu_custom_call.1} parent=1 // pred_check_branch
      %125 = sbr.rel (0) target = $region53
    $region52: #{tpu_custom_call.1} parent=1 // pred_region
      %s127 = ssub.s32 4096, 4096
      %128 = vsyncadd [#allocation15], %s127
      %s129 = sshll.u32 [#allocation14], 4
      %s130 = int_to_ptr.vmem [resolvable:$true] %s129
      %135 = dma.hbm_to_vmem [thread:$0]  %s12, 4096, %s130, [#allocation15], 64, 64, 4
    $region53: #{tpu_custom_call.1} parent=1 // pred_fallthru
      _
    // Predicated region
    $region54: #{tpu_custom_call.1} parent=1 // pred_check
      _
    $region55: #{tpu_custom_call.1} parent=1 // pred_check_branch
      %137 = sbr.rel (0) target = $region57
    $region56: #{tpu_custom_call.1} parent=1 // pred_region
      _
    $region57: #{tpu_custom_call.1} parent=1 // pred_fallthru
      _
    // Predicated region
    $region58: #{tpu_custom_call.1} parent=1 // pred_check
      _
    $region59: #{tpu_custom_call.1} parent=1 // pred_check_branch
      %139 = sbr.rel (0) target = $region61
    $region60: #{tpu_custom_call.1} parent=1 // pred_region
      _
    $region61: #{tpu_custom_call.1} parent=1 // pred_fallthru
      _
    // Predicated region
    $region62: #{tpu_custom_call.1} parent=1 // pred_check
      _
    $region63: #{tpu_custom_call.1} parent=1 // pred_check_branch
      %141 = sbr.rel (0) target = $region65
    $region64: #{tpu_custom_call.1} parent=1 // pred_region
      _
    $region65: #{tpu_custom_call.1} parent=1 // pred_fallthru
      _
    // Predicated region
    $region66: #{tpu_custom_call.1} parent=1 // pred_check
      _
    $region67: #{tpu_custom_call.1} parent=1 // pred_check_branch
      %143 = sbr.rel (0) target = $region69
    $region68: #{tpu_custom_call.1} parent=1 // pred_region
      %s145 = ssub.s32 1024, 1024
      %146 = vsyncadd [#allocation15], %s145
      %s147 = sshll.u32 [#allocation16], 4
      %s148 = int_to_ptr.vmem [resolvable:$true] %s147
      %153 = dma.hbm_to_vmem [thread:$0]  %s16, 1024, %s148, [#allocation15], 64, 64, 4
    $region69: #{tpu_custom_call.1} parent=1 // pred_fallthru
      _
    // Predicated region
    $region70: #{tpu_custom_call.1} parent=1 // pred_check
      _
    $region71: #{tpu_custom_call.1} parent=1 // pred_check_branch
      %155 = sbr.rel (0) target = $region73
    $region72: #{tpu_custom_call.1} parent=1 // pred_region
      _
    $region73: #{tpu_custom_call.1} parent=1 // pred_fallthru
      _
    // Predicated region
    $region74: #{tpu_custom_call.1} parent=1 // pred_check
      _
    $region75: #{tpu_custom_call.1} parent=1 // pred_check_branch
      %157 = sbr.rel (0) target = $region77
    $region76: #{tpu_custom_call.1} parent=1 // pred_region
      %158 = dma.done [#allocation3], 256
    $region77: #{tpu_custom_call.1} parent=1 // pred_fallthru
      _
    // Predicated region
    $region78: #{tpu_custom_call.1} parent=1 // pred_check
      _
    $region79: #{tpu_custom_call.1} parent=1 // pred_check_branch
      %160 = sbr.rel (0) target = $region81
    $region80: #{tpu_custom_call.1} parent=1 // pred_region
      %161 = dma.done [#allocation6], 512
    $region81: #{tpu_custom_call.1} parent=1 // pred_fallthru
      _
    // Predicated region
    $region82: #{tpu_custom_call.1} parent=1 // pred_check
      _
    $region83: #{tpu_custom_call.1} parent=1 // pred_check_branch
      %163 = sbr.rel (0) target = $region85
    $region84: #{tpu_custom_call.1} parent=1 // pred_region
      %164 = dma.done [#allocation6], 512
    $region85: #{tpu_custom_call.1} parent=1 // pred_fallthru
      _
    // Predicated region
    $region86: #{tpu_custom_call.1} parent=1 // pred_check
      _
    $region87: #{tpu_custom_call.1} parent=1 // pred_check_branch
      %166 = sbr.rel (0) target = $region89
    $region88: #{tpu_custom_call.1} parent=1 // pred_region
      %167 = dma.done [#allocation9], 16
    $region89: #{tpu_custom_call.1} parent=1 // pred_fallthru
      _
    // Predicated region
    $region90: #{tpu_custom_call.1} parent=1 // pred_check
      _
    $region91: #{tpu_custom_call.1} parent=1 // pred_check_branch
      %169 = sbr.rel (0) target = $region93
    $region92: #{tpu_custom_call.1} parent=1 // pred_region
      %170 = dma.done [#allocation9], 6144
    $region93: #{tpu_custom_call.1} parent=1 // pred_fallthru
      _
    // Predicated region
    $region94: #{tpu_custom_call.1} parent=1 // pred_check
      _
    $region95: #{tpu_custom_call.1} parent=1 // pred_check_branch
      %172 = sbr.rel (0) target = $region97
    $region96: #{tpu_custom_call.1} parent=1 // pred_region
      %173 = dma.done [#allocation12], 2048
    $region97: #{tpu_custom_call.1} parent=1 // pred_fallthru
      _
    // Predicated region
    $region98: #{tpu_custom_call.1} parent=1 // pred_check
      _
    $region99: #{tpu_custom_call.1} parent=1 // pred_check_branch
      %175 = sbr.rel (0) target = $region101
    $region100: #{tpu_custom_call.1} parent=1 // pred_region
      %176 = dma.done [#allocation12], 4096
    $region101: #{tpu_custom_call.1} parent=1 // pred_fallthru
      _
    // Predicated region
    $region102: #{tpu_custom_call.1} parent=1 // pred_check
      _
    $region103: #{tpu_custom_call.1} parent=1 // pred_check_branch
      %178 = sbr.rel (0) target = $region105
    $region104: #{tpu_custom_call.1} parent=1 // pred_region
      %179 = dma.done [#allocation15], 4096
    $region105: #{tpu_custom_call.1} parent=1 // pred_fallthru
      _
    // Predicated region
    $region106: #{tpu_custom_call.1} parent=1 // pred_check
      _
    $region107: #{tpu_custom_call.1} parent=1 // pred_check_branch
      %181 = sbr.rel (0) target = $region109
    $region108: #{tpu_custom_call.1} parent=1 // pred_region
      %182 = dma.done [#allocation15], 1024
    $region109: #{tpu_custom_call.1} parent=1 // pred_fallthru
      _
    %v184 = vld [vmem:[#allocation5] sm:$0xff]
    %v185 = vld [vmem:[#allocation5 + $0x8] sm:$0xff]
    %v186 = vld [vmem:[#allocation5 + $0x10] sm:$0xff]
    %v187 = vld [vmem:[#allocation5 + $0x18] sm:$0xff]
    %v188 = vld [vmem:[#allocation2] sm:$0xf]
    %v189 = vld [vmem:[#allocation2 + $0x4] sm:$0xf]
    %v190 = vld [vmem:[#allocation2 + $0x8] sm:$0xf]
    %v191 = vld [vmem:[#allocation2 + $0xc] sm:$0xf]
    %v192 = vld [vmem:[#allocation7] sm:$0xf]
    %v193 = vld [vmem:[#allocation7 + $0x4] sm:$0xf]
    %v194 = vld [vmem:[#allocation7 + $0x8] sm:$0xf]
    %v195 = vld [vmem:[#allocation7 + $0xc] sm:$0xf]
    %v196 = vld [vmem:[#allocation7 + $0x10] sm:$0xf]
    %v197 = vld [vmem:[#allocation7 + $0x14] sm:$0xf]
    %v198 = vld [vmem:[#allocation7 + $0x18] sm:$0xf]
    %v199 = vld [vmem:[#allocation7 + $0x1c] sm:$0xf]
    %v200 = vld [vmem:[#allocation8] sm:$0x1]
    %v202 = vlaneseq
    %v203 = vshrl.u32 %v202, 7
    %v204 = vsub.s32 0, %v203
    %v205 = vrot.slane %v200, %v204
    %v211 = vunpack.c.l.b16 %v188
    %v212 = vunpack.c.l.b16 %v189
    %v213 = vunpack.c.l.b16 %v190
    %v214 = vunpack.c.l.b16 %v191
    %v215 = vpack.c.b16 %v212, %v211
    %v216 = vpack.c.b16 %v214, %v213
    %v225 = vunpack.c.l.b16 %v192
    %v226 = vunpack.c.l.b16 %v193
    %v227 = vunpack.c.l.b16 %v194
    %v228 = vunpack.c.l.b16 %v195
    %v229 = vunpack.c.l.b16 %v196
    %v230 = vunpack.c.l.b16 %v197
    %v231 = vunpack.c.l.b16 %v198
    %v232 = vunpack.c.l.b16 %v199
    %v233 = vpack.c.b16 %v226, %v225
    %v234 = vpack.c.b16 %v228, %v227
    %v235 = vpack.c.b16 %v230, %v229
    %v236 = vpack.c.b16 %v232, %v231
    %vm241 = vcmask 523264
    %v243 = vsel %vm241, %v215, 0
    %v246 = vsel %vm241, %v216, 0
    %248 = vmatprep.subr.bf16.mxu0 0
    %249 = vmatpush1.bf16.msra.mxu0 %v233
    %250 = vmatprep.subr.bf16.mxu0 0
    %251 = vmatpush1.bf16.msra.mxu0 %v234
    %252 = vmatprep.subr.bf16.mxu0 0
    %253 = vmatpush1.bf16.msra.mxu0 %v235
    %254 = vmatprep.subr.bf16.mxu0 0
    %255 = vmatpush1.bf16.msra.mxu0 %v236
    %256 = vmatprep.subr.bf16.mxu0 0
    %257 = vmatpush1.bf16.msra.mxu0 0
    %258 = vmatprep.subr.bf16.mxu0 0
    %259 = vmatpush1.bf16.msra.mxu0 0
    %260 = vmatprep.subr.bf16.mxu0 0
    %261 = vmatpush1.bf16.msra.mxu0 0
    %262 = vmatprep.subr.bf16.mxu0 0
    %263 = vmatpush1.bf16.msra.mxu0 0
    %264 = vmatprep.subr.bf16.mxu0 0
    %265 = vmatpush1.bf16.msra.mxu0 0
    %266 = vmatprep.subr.bf16.mxu0 0
    %267 = vmatpush1.bf16.msra.mxu0 0
    %268 = vmatprep.subr.bf16.mxu0 0
    %269 = vmatpush1.bf16.msra.mxu0 0
    %270 = vmatprep.subr.bf16.mxu0 0
    %271 = vmatpush1.bf16.msra.mxu0 0
    %272 = vmatprep.subr.bf16.mxu0 0
    %273 = vmatpush1.bf16.msra.mxu0 0
    %274 = vmatprep.subr.bf16.mxu0 0
    %275 = vmatpush1.bf16.msra.mxu0 0
    %276 = vmatprep.subr.bf16.mxu0 0
    %277 = vmatpush1.bf16.msra.mxu0 0
    %278 = vmatprep.subr.bf16.mxu0 0
    %279 = vmatpush1.bf16.msra.mxu0 0
    %280 = vmatprep.mubr.bf16.mxu0 0
    %281 = vmatmul.mubr.bf16.gmra.mrb[0].mxu0 %v243
    %v282 = vpop.f32.mrb[0].mxu0
    %v283 = vadd.f32 %v205, %v282
    %v284 = vpop.f32.mrb[0].mxu0
    %v285 = vpop.f32.mrb[0].mxu0
    %v286 = vadd.f32 %v205, %v285
    %v287 = vpop.f32.mrb[0].mxu0
    %288 = vmatprep.mubr.bf16.mxu0 0
    %289 = vmatmul.mubr.bf16.gmra.mrb[0].mxu0 %v246
    %v290 = vpop.f32.mrb[0].mxu0
    %v291 = vadd.f32 %v205, %v290
    %v292 = vpop.f32.mrb[0].mxu0
    %v293 = vpop.f32.mrb[0].mxu0
    %v294 = vadd.f32 %v205, %v293
    %v295 = vpop.f32.mrb[0].mxu0
    %296 = vdwg.mxu0
    %v297 = vld [vmem:[#allocation10] sm:$0xff]
    %v298 = vld [vmem:[#allocation10 + $0x8] sm:$0xf]
    %v299 = vld [vmem:[#allocation10 + $0xc] sm:$0xff]
    %v300 = vld [vmem:[#allocation10 + $0x14] sm:$0xf]
    %v301 = vld [vmem:[#allocation10 + $0x18] sm:$0xff]
    %v302 = vld [vmem:[#allocation10 + $0x20] sm:$0xf]
    %v303 = vld [vmem:[#allocation10 + $0x24] sm:$0xff]
    %v304 = vld [vmem:[#allocation10 + $0x2c] sm:$0xf]
    %v305 = vld [vmem:[#allocation10 + $0x30] sm:$0xff]
    %v306 = vld [vmem:[#allocation10 + $0x38] sm:$0xf]
    %v307 = vld [vmem:[#allocation10 + $0x3c] sm:$0xff]
    %v308 = vld [vmem:[#allocation10 + $0x44] sm:$0xf]
    %v309 = vld [vmem:[#allocation10 + $0x48] sm:$0xff]
    %v310 = vld [vmem:[#allocation10 + $0x50] sm:$0xf]
    %v311 = vld [vmem:[#allocation10 + $0x54] sm:$0xff]
    %v312 = vld [vmem:[#allocation10 + $0x5c] sm:$0xf]
    %v313 = vld [vmem:[#allocation10 + $0x60] sm:$0xff]
    %v314 = vld [vmem:[#allocation10 + $0x68] sm:$0xf]
    %v315 = vld [vmem:[#allocation10 + $0x6c] sm:$0xff]
    %v316 = vld [vmem:[#allocation10 + $0x74] sm:$0xf]
    %v317 = vld [vmem:[#allocation10 + $0x78] sm:$0xff]
    %v318 = vld [vmem:[#allocation10 + $0x80] sm:$0xf]
    %v319 = vld [vmem:[#allocation10 + $0x84] sm:$0xff]
    %v320 = vld [vmem:[#allocation10 + $0x8c] sm:$0xf]
    %v321 = vld [vmem:[#allocation10 + $0x90] sm:$0xff]
    %v322 = vld [vmem:[#allocation10 + $0x98] sm:$0xf]
    %v323 = vld [vmem:[#allocation10 + $0x9c] sm:$0xff]
    %v324 = vld [vmem:[#allocation10 + $0xa4] sm:$0xf]
    %v325 = vld [vmem:[#allocation10 + $0xa8] sm:$0xff]
    %v326 = vld [vmem:[#allocation10 + $0xb0] sm:$0xf]
    %v327 = vld [vmem:[#allocation10 + $0xb4] sm:$0xff]
    %v328 = vld [vmem:[#allocation10 + $0xbc] sm:$0xf]
    %v329 = vpack.c.bf16 %v286, %v283
    %v330 = vpack.c.bf16 %v294, %v291
    %v331 = vld [vmem:[%s5] sm:$0x7]
    %v333 = vlaneseq
    %v334 = vshrl.u32 %v333, 7
    %v335 = vsub.s32 0, %v334
    %v336 = vrot.slane %v331, %v335
    %v337 = vlaneseq
    %v338 = vshrl.u32 %v337, 7
    %v339 = vsub.s32 1, %v338
    %v340 = vrot.slane %v331, %v339
    %v341 = vlaneseq
    %v342 = vshrl.u32 %v341, 7
    %v343 = vsub.s32 2, %v342
    %v344 = vrot.slane %v331, %v343
    %v380 = vunpack.c.l.b16 %v297
    %v381 = vunpack.c.h.b16 %v297
    %v382 = vunpack.c.l.b16 %v298
    %v383 = vunpack.c.l.b16 %v299
    %v384 = vunpack.c.h.b16 %v299
    %v385 = vunpack.c.l.b16 %v300
    %v386 = vunpack.c.l.b16 %v301
    %v387 = vunpack.c.h.b16 %v301
    %v388 = vunpack.c.l.b16 %v302
    %v389 = vunpack.c.l.b16 %v303
    %v390 = vunpack.c.h.b16 %v303
    %v391 = vunpack.c.l.b16 %v304
    %v392 = vunpack.c.l.b16 %v305
    %v393 = vunpack.c.h.b16 %v305
    %v394 = vunpack.c.l.b16 %v306
    %v395 = vunpack.c.l.b16 %v307
    %v396 = vunpack.c.h.b16 %v307
    %v397 = vunpack.c.l.b16 %v308
    %v398 = vunpack.c.l.b16 %v309
    %v399 = vunpack.c.h.b16 %v309
    %v400 = vunpack.c.l.b16 %v310
    %v401 = vunpack.c.l.b16 %v311
    %v402 = vunpack.c.h.b16 %v311
    %v403 = vunpack.c.l.b16 %v312
    %v404 = vunpack.c.l.b16 %v313
    %v405 = vunpack.c.h.b16 %v313
    %v406 = vunpack.c.l.b16 %v314
    %v407 = vunpack.c.l.b16 %v315
    %v408 = vunpack.c.h.b16 %v315
    %v409 = vunpack.c.l.b16 %v316
    %v410 = vunpack.c.l.b16 %v317
    %v411 = vunpack.c.h.b16 %v317
    %v412 = vunpack.c.l.b16 %v318
    %v413 = vunpack.c.l.b16 %v319
    %v414 = vunpack.c.h.b16 %v319
    %v415 = vunpack.c.l.b16 %v320
    %v416 = vunpack.c.l.b16 %v321
    %v417 = vunpack.c.h.b16 %v321
    %v418 = vunpack.c.l.b16 %v322
    %v419 = vunpack.c.l.b16 %v323
    %v420 = vunpack.c.h.b16 %v323
    %v421 = vunpack.c.l.b16 %v324
    %v422 = vunpack.c.l.b16 %v325
    %v423 = vunpack.c.h.b16 %v325
    %v424 = vunpack.c.l.b16 %v326
    %v425 = vunpack.c.l.b16 %v327
    %v426 = vunpack.c.h.b16 %v327
    %v427 = vunpack.c.l.b16 %v328
    %v428 = vpack.c.b16 %v383, %v380
    %v429 = vpack.c.b16 %v384, %v381
    %v430 = vpack.c.b16 %v385, %v382
    %v431 = vpack.c.b16 %v389, %v386
    %v432 = vpack.c.b16 %v390, %v387
    %v433 = vpack.c.b16 %v391, %v388
    %v434 = vpack.c.b16 %v395, %v392
    %v435 = vpack.c.b16 %v396, %v393
    %v436 = vpack.c.b16 %v397, %v394
    %v437 = vpack.c.b16 %v401, %v398
    %v438 = vpack.c.b16 %v402, %v399
    %v439 = vpack.c.b16 %v403, %v400
    %v440 = vpack.c.b16 %v407, %v404
    %v441 = vpack.c.b16 %v408, %v405
    %v442 = vpack.c.b16 %v409, %v406
    %v443 = vpack.c.b16 %v413, %v410
    %v444 = vpack.c.b16 %v414, %v411
    %v445 = vpack.c.b16 %v415, %v412
    %v446 = vpack.c.b16 %v419, %v416
    %v447 = vpack.c.b16 %v420, %v417
    %v448 = vpack.c.b16 %v421, %v418
    %v449 = vpack.c.b16 %v425, %v422
    %v450 = vpack.c.b16 %v426, %v423
    %v451 = vpack.c.b16 %v427, %v424
    %476 = vmatprep.subr.bf16.mxu0 %v429
    %477 = vmatpush1.bf16.msra.mxu0 %v428
    %478 = vmatprep.subr.bf16.mxu0 %v432
    %479 = vmatpush1.bf16.msra.mxu0 %v431
    %480 = vmatprep.subr.bf16.mxu0 %v435
    %481 = vmatpush1.bf16.msra.mxu0 %v434
    %482 = vmatprep.subr.bf16.mxu0 %v438
    %483 = vmatpush1.bf16.msra.mxu0 %v437
    %484 = vmatprep.subr.bf16.mxu0 %v441
    %485 = vmatpush1.bf16.msra.mxu0 %v440
    %486 = vmatprep.subr.bf16.mxu0 %v444
    %487 = vmatpush1.bf16.msra.mxu0 %v443
    %488 = vmatprep.subr.bf16.mxu0 %v447
    %489 = vmatpush1.bf16.msra.mxu0 %v446
    %490 = vmatprep.subr.bf16.mxu0 %v450
    %491 = vmatpush1.bf16.msra.mxu0 %v449
    %492 = vmatprep.subr.bf16.mxu0 0
    %493 = vmatpush1.bf16.msra.mxu0 0
    %494 = vmatprep.subr.bf16.mxu0 0
    %495 = vmatpush1.bf16.msra.mxu0 0
    %496 = vmatprep.subr.bf16.mxu0 0
    %497 = vmatpush1.bf16.msra.mxu0 0
    %498 = vmatprep.subr.bf16.mxu0 0
    %499 = vmatpush1.bf16.msra.mxu0 0
    %500 = vmatprep.subr.bf16.mxu0 0
    %501 = vmatpush1.bf16.msra.mxu0 0
    %502 = vmatprep.subr.bf16.mxu0 0
    %503 = vmatpush1.bf16.msra.mxu0 0
    %504 = vmatprep.subr.bf16.mxu0 0
    %505 = vmatpush1.bf16.msra.mxu0 0
    %506 = vmatprep.subr.bf16.mxu0 0
    %507 = vmatpush1.bf16.msra.mxu0 0
    %508 = vmatprep.mubr.bf16.mxu0 0
    %509 = vmatmul.mubr.bf16.gmra.mrb[0].mxu0 %v329
    %v510 = vpop.f32.mrb[0].mxu0
    %v511 = vadd.f32 %v336, %v510
    %v512 = vpop.f32.mrb[0].mxu0
    %v513 = vadd.f32 %v340, %v512
    %v514 = vpop.f32.mrb[0].mxu0
    %v515 = vadd.f32 %v336, %v514
    %v516 = vpop.f32.mrb[0].mxu0
    %v517 = vadd.f32 %v340, %v516
    %518 = vmatprep.mubr.bf16.mxu0 0
    %519 = vmatmul.mubr.bf16.gmra.mrb[0].mxu0 %v330
    %v520 = vpop.f32.mrb[0].mxu0
    %v521 = vadd.f32 %v336, %v520
    %v522 = vpop.f32.mrb[0].mxu0
    %v523 = vadd.f32 %v340, %v522
    %v524 = vpop.f32.mrb[0].mxu0
    %v525 = vadd.f32 %v336, %v524
    %v526 = vpop.f32.mrb[0].mxu0
    %v527 = vadd.f32 %v340, %v526
    %528 = vdwg.mxu0
    %529 = vmatprep.subr.bf16.mxu0 0
    %530 = vmatpush1.bf16.msra.mxu0 %v430
    %531 = vmatprep.subr.bf16.mxu0 0
    %532 = vmatpush1.bf16.msra.mxu0 %v433
    %533 = vmatprep.subr.bf16.mxu0 0
    %534 = vmatpush1.bf16.msra.mxu0 %v436
    %535 = vmatprep.subr.bf16.mxu0 0
    %536 = vmatpush1.bf16.msra.mxu0 %v439
    %537 = vmatprep.subr.bf16.mxu0 0
    %538 = vmatpush1.bf16.msra.mxu0 %v442
    %539 = vmatprep.subr.bf16.mxu0 0
    %540 = vmatpush1.bf16.msra.mxu0 %v445
    %541 = vmatprep.subr.bf16.mxu0 0
    %542 = vmatpush1.bf16.msra.mxu0 %v448
    %543 = vmatprep.subr.bf16.mxu0 0
    %544 = vmatpush1.bf16.msra.mxu0 %v451
    %545 = vmatprep.subr.bf16.mxu0 0
    %546 = vmatpush1.bf16.msra.mxu0 0
    %547 = vmatprep.subr.bf16.mxu0 0
    %548 = vmatpush1.bf16.msra.mxu0 0
    %549 = vmatprep.subr.bf16.mxu0 0
    %550 = vmatpush1.bf16.msra.mxu0 0
    %551 = vmatprep.subr.bf16.mxu0 0
    %552 = vmatpush1.bf16.msra.mxu0 0
    %553 = vmatprep.subr.bf16.mxu0 0
    %554 = vmatpush1.bf16.msra.mxu0 0
    %555 = vmatprep.subr.bf16.mxu0 0
    %556 = vmatpush1.bf16.msra.mxu0 0
    %557 = vmatprep.subr.bf16.mxu0 0
    %558 = vmatpush1.bf16.msra.mxu0 0
    %559 = vmatprep.subr.bf16.mxu0 0
    %560 = vmatpush1.bf16.msra.mxu0 0
    %561 = vmatprep.mubr.bf16.mxu0 0
    %562 = vmatmul.mubr.bf16.gmra.mrb[0].mxu0 %v329
    %v563 = vpop.f32.mrb[0].mxu0
    %v564 = vadd.f32 %v344, %v563
    %v565 = vpop.f32.mrb[0].mxu0
    %v566 = vpop.f32.mrb[0].mxu0
    %v567 = vadd.f32 %v344, %v566
    %v568 = vpop.f32.mrb[0].mxu0
    %569 = vmatprep.mubr.bf16.mxu0 0
    %570 = vmatmul.mubr.bf16.gmra.mrb[0].mxu0 %v330
    %v571 = vpop.f32.mrb[0].mxu0
    %v572 = vadd.f32 %v344, %v571
    %v573 = vpop.f32.mrb[0].mxu0
    %v574 = vpop.f32.mrb[0].mxu0
    %v575 = vadd.f32 %v344, %v574
    %v576 = vpop.f32.mrb[0].mxu0
    %577 = vdwg.mxu0
    %582 = vrot.lane.b32.xlu0 %v511, 96
    %v583 = vpop.permute.xlu0 %582
    %584 = vrot.lane.b32.xlu0 %v515, 96
    %v585 = vpop.permute.xlu0 %584
    %586 = vrot.lane.b32.xlu0 %v521, 96
    %v587 = vpop.permute.xlu0 %586
    %588 = vrot.lane.b32.xlu0 %v525, 96
    %v589 = vpop.permute.xlu0 %588
    %594 = vrot.lane.b32.xlu0 %v511, 64
    %v595 = vpop.permute.xlu0 %594
    %596 = vrot.lane.b32.xlu0 %v515, 64
    %v597 = vpop.permute.xlu0 %596
    %598 = vrot.lane.b32.xlu0 %v521, 64
    %v599 = vpop.permute.xlu0 %598
    %600 = vrot.lane.b32.xlu0 %v525, 64
    %v601 = vpop.permute.xlu0 %600
    %606 = vrot.lane.b32.xlu0 %v511, 32
    %v607 = vpop.permute.xlu0 %606
    %608 = vrot.lane.b32.xlu0 %v515, 32
    %v609 = vpop.permute.xlu0 %608
    %610 = vrot.lane.b32.xlu0 %v521, 32
    %v611 = vpop.permute.xlu0 %610
    %612 = vrot.lane.b32.xlu0 %v525, 32
    %v613 = vpop.permute.xlu0 %612
    %v618 = vpack.c.bf16 %v515, %v511
    %v619 = vpack.c.bf16 %v525, %v521
    %v620 = vpack.c.bf16 %v585, %v583
    %v621 = vpack.c.bf16 %v589, %v587
    %v622 = vpack.c.bf16 %v597, %v595
    %v623 = vpack.c.bf16 %v601, %v599
    %v624 = vpack.c.bf16 %v609, %v607
    %v625 = vpack.c.bf16 %v613, %v611
    %630 = vrot.lane.b32.xlu0 %v513, 96
    %v631 = vpop.permute.xlu0 %630
    %632 = vrot.lane.b32.xlu0 %v517, 96
    %v633 = vpop.permute.xlu0 %632
    %634 = vrot.lane.b32.xlu0 %v523, 96
    %v635 = vpop.permute.xlu0 %634
    %636 = vrot.lane.b32.xlu0 %v527, 96
    %v637 = vpop.permute.xlu0 %636
    %642 = vrot.lane.b32.xlu0 %v513, 64
    %v643 = vpop.permute.xlu0 %642
    %644 = vrot.lane.b32.xlu0 %v517, 64
    %v645 = vpop.permute.xlu0 %644
    %646 = vrot.lane.b32.xlu0 %v523, 64
    %v647 = vpop.permute.xlu0 %646
    %648 = vrot.lane.b32.xlu0 %v527, 64
    %v649 = vpop.permute.xlu0 %648
    %654 = vrot.lane.b32.xlu0 %v513, 32
    %v655 = vpop.permute.xlu0 %654
    %656 = vrot.lane.b32.xlu0 %v517, 32
    %v657 = vpop.permute.xlu0 %656
    %658 = vrot.lane.b32.xlu0 %v523, 32
    %v659 = vpop.permute.xlu0 %658
    %660 = vrot.lane.b32.xlu0 %v527, 32
    %v661 = vpop.permute.xlu0 %660
    %v666 = vpack.c.bf16 %v517, %v513
    %v667 = vpack.c.bf16 %v527, %v523
    %v668 = vpack.c.bf16 %v633, %v631
    %v669 = vpack.c.bf16 %v637, %v635
    %v670 = vpack.c.bf16 %v645, %v643
    %v671 = vpack.c.bf16 %v649, %v647
    %v672 = vpack.c.bf16 %v657, %v655
    %v673 = vpack.c.bf16 %v661, %v659
    %678 = vrot.lane.b32.xlu0 %v564, 96
    %v679 = vpop.permute.xlu0 %678
    %680 = vrot.lane.b32.xlu0 %v567, 96
    %v681 = vpop.permute.xlu0 %680
    %682 = vrot.lane.b32.xlu0 %v572, 96
    %v683 = vpop.permute.xlu0 %682
    %684 = vrot.lane.b32.xlu0 %v575, 96
    %v685 = vpop.permute.xlu0 %684
    %690 = vrot.lane.b32.xlu0 %v564, 64
    %v691 = vpop.permute.xlu0 %690
    %692 = vrot.lane.b32.xlu0 %v567, 64
    %v693 = vpop.permute.xlu0 %692
    %694 = vrot.lane.b32.xlu0 %v572, 64
    %v695 = vpop.permute.xlu0 %694
    %696 = vrot.lane.b32.xlu0 %v575, 64
    %v697 = vpop.permute.xlu0 %696
    %702 = vrot.lane.b32.xlu0 %v564, 32
    %v703 = vpop.permute.xlu0 %702
    %704 = vrot.lane.b32.xlu0 %v567, 32
    %v705 = vpop.permute.xlu0 %704
    %706 = vrot.lane.b32.xlu0 %v572, 32
    %v707 = vpop.permute.xlu0 %706
    %708 = vrot.lane.b32.xlu0 %v575, 32
    %v709 = vpop.permute.xlu0 %708
    %v714 = vpack.c.bf16 %v567, %v564
    %v715 = vpack.c.bf16 %v575, %v572
    %v716 = vpack.c.bf16 %v681, %v679
    %v717 = vpack.c.bf16 %v685, %v683
    %v718 = vpack.c.bf16 %v693, %v691
    %v719 = vpack.c.bf16 %v697, %v695
    %v720 = vpack.c.bf16 %v705, %v703
    %v721 = vpack.c.bf16 %v709, %v707
    %vm722 = vcmask 261120
    %v724 = vsel %vm722, %v618, 0
    %v727 = vsel %vm722, %v619, 0
    %v730 = vsel %vm722, %v666, 0
    %v733 = vsel %vm722, %v667, 0
    %735 = vmatprep.subr.bf16.mxu0 0
    %736 = vmatpush1.bf16.xpose.msra.mxu0 %v730
    %737 = vmatprep.subr.bf16.mxu0 0
    %738 = vmatpush1.bf16.xpose.msra.mxu0 %v733
    %739 = vmatprep.subr.bf16.mxu0 0
    %740 = vmatpush1.bf16.xpose.msra.mxu0 0
    %741 = vmatprep.subr.bf16.mxu0 0
    %742 = vmatpush1.bf16.xpose.msra.mxu0 0
    %743 = vmatprep.subr.bf16.mxu0 0
    %744 = vmatpush1.bf16.xpose.msra.mxu0 0
    %745 = vmatprep.subr.bf16.mxu0 0
    %746 = vmatpush1.bf16.xpose.msra.mxu0 0
    %747 = vmatprep.subr.bf16.mxu0 0
    %748 = vmatpush1.bf16.xpose.msra.mxu0 0
    %749 = vmatprep.subr.bf16.mxu0 0
    %750 = vmatpush1.bf16.xpose.msra.mxu0 0
    %751 = vmatprep.subr.bf16.mxu0 0
    %752 = vmatpush1.bf16.xpose.msra.mxu0 0
    %753 = vmatprep.subr.bf16.mxu0 0
    %754 = vmatpush1.bf16.xpose.msra.mxu0 0
    %755 = vmatprep.subr.bf16.mxu0 0
    %756 = vmatpush1.bf16.xpose.msra.mxu0 0
    %757 = vmatprep.subr.bf16.mxu0 0
    %758 = vmatpush1.bf16.xpose.msra.mxu0 0
    %759 = vmatprep.subr.bf16.mxu0 0
    %760 = vmatpush1.bf16.xpose.msra.mxu0 0
    %761 = vmatprep.subr.bf16.mxu0 0
    %762 = vmatpush1.bf16.xpose.msra.mxu0 0
    %763 = vmatprep.subr.bf16.mxu0 0
    %764 = vmatpush1.bf16.xpose.msra.mxu0 0
    %765 = vmatprep.subr.bf16.mxu0 0
    %766 = vmatpush1.bf16.xpose.msra.mxu0 0
    %767 = vmatprep.mubr.bf16.mxu0 0
    %768 = vmatmul.mubr.bf16.gmra.mrb[0].mxu0 %v724
    %v769 = vpop.f32.mrb[0].mxu0
    %v770 = vadd.f32 %v184, %v769
    %v771 = vpop.f32.mrb[0].mxu0
    %v772 = vpop.f32.mrb[0].mxu0
    %v773 = vadd.f32 %v185, %v772
    %v774 = vpop.f32.mrb[0].mxu0
    %775 = vmatprep.mubr.bf16.mxu0 0
    %776 = vmatmul.mubr.bf16.gmra.mrb[0].mxu0 %v727
    %v777 = vpop.f32.mrb[0].mxu0
    %v778 = vadd.f32 %v186, %v777
    %v779 = vpop.f32.mrb[0].mxu0
    %v780 = vpop.f32.mrb[0].mxu0
    %v781 = vadd.f32 %v187, %v780
    %v782 = vpop.f32.mrb[0].mxu0
    %783 = vdwg.mxu0
    %v785 = vsel %vm722, %v620, 0
    %v788 = vsel %vm722, %v621, 0
    %v791 = vsel %vm722, %v668, 0
    %v794 = vsel %vm722, %v669, 0
    %796 = vmatprep.subr.bf16.mxu0 0
    %797 = vmatpush1.bf16.xpose.msra.mxu0 %v791
    %798 = vmatprep.subr.bf16.mxu0 0
    %799 = vmatpush1.bf16.xpose.msra.mxu0 %v794
    %800 = vmatprep.subr.bf16.mxu0 0
    %801 = vmatpush1.bf16.xpose.msra.mxu0 0
    %802 = vmatprep.subr.bf16.mxu0 0
    %803 = vmatpush1.bf16.xpose.msra.mxu0 0
    %804 = vmatprep.subr.bf16.mxu0 0
    %805 = vmatpush1.bf16.xpose.msra.mxu0 0
    %806 = vmatprep.subr.bf16.mxu0 0
    %807 = vmatpush1.bf16.xpose.msra.mxu0 0
    %808 = vmatprep.subr.bf16.mxu0 0
    %809 = vmatpush1.bf16.xpose.msra.mxu0 0
    %810 = vmatprep.subr.bf16.mxu0 0
    %811 = vmatpush1.bf16.xpose.msra.mxu0 0
    %812 = vmatprep.subr.bf16.mxu0 0
    %813 = vmatpush1.bf16.xpose.msra.mxu0 0
    %814 = vmatprep.subr.bf16.mxu0 0
    %815 = vmatpush1.bf16.xpose.msra.mxu0 0
    %816 = vmatprep.subr.bf16.mxu0 0
    %817 = vmatpush1.bf16.xpose.msra.mxu0 0
    %818 = vmatprep.subr.bf16.mxu0 0
    %819 = vmatpush1.bf16.xpose.msra.mxu0 0
    %820 = vmatprep.subr.bf16.mxu0 0
    %821 = vmatpush1.bf16.xpose.msra.mxu0 0
    %822 = vmatprep.subr.bf16.mxu0 0
    %823 = vmatpush1.bf16.xpose.msra.mxu0 0
    %824 = vmatprep.subr.bf16.mxu0 0
    %825 = vmatpush1.bf16.xpose.msra.mxu0 0
    %826 = vmatprep.subr.bf16.mxu0 0
    %827 = vmatpush1.bf16.xpose.msra.mxu0 0
    %828 = vmatprep.mubr.bf16.mxu0 0
    %829 = vmatmul.mubr.bf16.gmra.mrb[0].mxu0 %v785
    %v830 = vpop.f32.mrb[0].mxu0
    %v831 = vadd.f32 %v184, %v830
    %v832 = vpop.f32.mrb[0].mxu0
    %v833 = vpop.f32.mrb[0].mxu0
    %v834 = vadd.f32 %v185, %v833
    %v835 = vpop.f32.mrb[0].mxu0
    %836 = vmatprep.mubr.bf16.mxu0 0
    %837 = vmatmul.mubr.bf16.gmra.mrb[0].mxu0 %v788
    %v838 = vpop.f32.mrb[0].mxu0
    %v839 = vadd.f32 %v186, %v838
    %v840 = vpop.f32.mrb[0].mxu0
    %v841 = vpop.f32.mrb[0].mxu0
    %v842 = vadd.f32 %v187, %v841
    %v843 = vpop.f32.mrb[0].mxu0
    %844 = vdwg.mxu0
    %v846 = vsel %vm722, %v622, 0
    %v849 = vsel %vm722, %v623, 0
    %v852 = vsel %vm722, %v670, 0
    %v855 = vsel %vm722, %v671, 0
    %857 = vmatprep.subr.bf16.mxu0 0
    %858 = vmatpush1.bf16.xpose.msra.mxu0 %v852
    %859 = vmatprep.subr.bf16.mxu0 0
    %860 = vmatpush1.bf16.xpose.msra.mxu0 %v855
    %861 = vmatprep.subr.bf16.mxu0 0
    %862 = vmatpush1.bf16.xpose.msra.mxu0 0
    %863 = vmatprep.subr.bf16.mxu0 0
    %864 = vmatpush1.bf16.xpose.msra.mxu0 0
    %865 = vmatprep.subr.bf16.mxu0 0
    %866 = vmatpush1.bf16.xpose.msra.mxu0 0
    %867 = vmatprep.subr.bf16.mxu0 0
    %868 = vmatpush1.bf16.xpose.msra.mxu0 0
    %869 = vmatprep.subr.bf16.mxu0 0
    %870 = vmatpush1.bf16.xpose.msra.mxu0 0
    %871 = vmatprep.subr.bf16.mxu0 0
    %872 = vmatpush1.bf16.xpose.msra.mxu0 0
    %873 = vmatprep.subr.bf16.mxu0 0
    %874 = vmatpush1.bf16.xpose.msra.mxu0 0
    %875 = vmatprep.subr.bf16.mxu0 0
    %876 = vmatpush1.bf16.xpose.msra.mxu0 0
    %877 = vmatprep.subr.bf16.mxu0 0
    %878 = vmatpush1.bf16.xpose.msra.mxu0 0
    %879 = vmatprep.subr.bf16.mxu0 0
    %880 = vmatpush1.bf16.xpose.msra.mxu0 0
    %881 = vmatprep.subr.bf16.mxu0 0
    %882 = vmatpush1.bf16.xpose.msra.mxu0 0
    %883 = vmatprep.subr.bf16.mxu0 0
    %884 = vmatpush1.bf16.xpose.msra.mxu0 0
    %885 = vmatprep.subr.bf16.mxu0 0
    %886 = vmatpush1.bf16.xpose.msra.mxu0 0
    %887 = vmatprep.subr.bf16.mxu0 0
    %888 = vmatpush1.bf16.xpose.msra.mxu0 0
    %889 = vmatprep.mubr.bf16.mxu0 0
    %890 = vmatmul.mubr.bf16.gmra.mrb[0].mxu0 %v846
    %v891 = vpop.f32.mrb[0].mxu0
    %v892 = vadd.f32 %v184, %v891
    %v893 = vpop.f32.mrb[0].mxu0
    %v894 = vpop.f32.mrb[0].mxu0
    %v895 = vadd.f32 %v185, %v894
    %v896 = vpop.f32.mrb[0].mxu0
    %897 = vmatprep.mubr.bf16.mxu0 0
    %898 = vmatmul.mubr.bf16.gmra.mrb[0].mxu0 %v849
    %v899 = vpop.f32.mrb[0].mxu0
    %v900 = vadd.f32 %v186, %v899
    %v901 = vpop.f32.mrb[0].mxu0
    %v902 = vpop.f32.mrb[0].mxu0
    %v903 = vadd.f32 %v187, %v902
    %v904 = vpop.f32.mrb[0].mxu0
    %905 = vdwg.mxu0
    %v907 = vsel %vm722, %v624, 0
    %v910 = vsel %vm722, %v625, 0
    %v913 = vsel %vm722, %v672, 0
    %v916 = vsel %vm722, %v673, 0
    %918 = vmatprep.subr.bf16.mxu0 0
    %919 = vmatpush1.bf16.xpose.msra.mxu0 %v913
    %920 = vmatprep.subr.bf16.mxu0 0
    %921 = vmatpush1.bf16.xpose.msra.mxu0 %v916
    %922 = vmatprep.subr.bf16.mxu0 0
    %923 = vmatpush1.bf16.xpose.msra.mxu0 0
    %924 = vmatprep.subr.bf16.mxu0 0
    %925 = vmatpush1.bf16.xpose.msra.mxu0 0
    %926 = vmatprep.subr.bf16.mxu0 0
    %927 = vmatpush1.bf16.xpose.msra.mxu0 0
    %928 = vmatprep.subr.bf16.mxu0 0
    %929 = vmatpush1.bf16.xpose.msra.mxu0 0
    %930 = vmatprep.subr.bf16.mxu0 0
    %931 = vmatpush1.bf16.xpose.msra.mxu0 0
    %932 = vmatprep.subr.bf16.mxu0 0
    %933 = vmatpush1.bf16.xpose.msra.mxu0 0
    %934 = vmatprep.subr.bf16.mxu0 0
    %935 = vmatpush1.bf16.xpose.msra.mxu0 0
    %936 = vmatprep.subr.bf16.mxu0 0
    %937 = vmatpush1.bf16.xpose.msra.mxu0 0
    %938 = vmatprep.subr.bf16.mxu0 0
    %939 = vmatpush1.bf16.xpose.msra.mxu0 0
    %940 = vmatprep.subr.bf16.mxu0 0
    %941 = vmatpush1.bf16.xpose.msra.mxu0 0
    %942 = vmatprep.subr.bf16.mxu0 0
    %943 = vmatpush1.bf16.xpose.msra.mxu0 0
    %944 = vmatprep.subr.bf16.mxu0 0
    %945 = vmatpush1.bf16.xpose.msra.mxu0 0
    %946 = vmatprep.subr.bf16.mxu0 0
    %947 = vmatpush1.bf16.xpose.msra.mxu0 0
    %948 = vmatprep.subr.bf16.mxu0 0
    %949 = vmatpush1.bf16.xpose.msra.mxu0 0
    %950 = vmatprep.mubr.bf16.mxu0 0
    %951 = vmatmul.mubr.bf16.gmra.mrb[0].mxu0 %v907
    %v952 = vpop.f32.mrb[0].mxu0
    %v953 = vadd.f32 %v184, %v952
    %v954 = vpop.f32.mrb[0].mxu0
    %v955 = vpop.f32.mrb[0].mxu0
    %v956 = vadd.f32 %v185, %v955
    %v957 = vpop.f32.mrb[0].mxu0
    %958 = vmatprep.mubr.bf16.mxu0 0
    %959 = vmatmul.mubr.bf16.gmra.mrb[0].mxu0 %v910
    %v960 = vpop.f32.mrb[0].mxu0
    %v961 = vadd.f32 %v186, %v960
    %v962 = vpop.f32.mrb[0].mxu0
    %v963 = vpop.f32.mrb[0].mxu0
    %v964 = vadd.f32 %v187, %v963
    %v965 = vpop.f32.mrb[0].mxu0
    %966 = vdwg.mxu0
    %v967 = vsel %vm722, %v770, -inf
    %968 = vmax.xlane.f32.xlu0 %v967
    %v969 = vpop.xlane.xlu0 %968
    %v970 = vsel %vm722, %v773, -inf
    %971 = vmax.xlane.f32.xlu0 %v970
    %v972 = vpop.xlane.xlu0 %971
    %v973 = vsel %vm722, %v778, -inf
    %974 = vmax.xlane.f32.xlu0 %v973
    %v975 = vpop.xlane.xlu0 %974
    %v976 = vsel %vm722, %v781, -inf
    %977 = vmax.xlane.f32.xlu0 %v976
    %v978 = vpop.xlane.xlu0 %977
    %v979 = vsel %vm722, %v831, -inf
    %980 = vmax.xlane.f32.xlu0 %v979
    %v981 = vpop.xlane.xlu0 %980
    %v982 = vsel %vm722, %v834, -inf
    %983 = vmax.xlane.f32.xlu0 %v982
    %v984 = vpop.xlane.xlu0 %983
    %v985 = vsel %vm722, %v839, -inf
    %986 = vmax.xlane.f32.xlu0 %v985
    %v987 = vpop.xlane.xlu0 %986
    %v988 = vsel %vm722, %v842, -inf
    %989 = vmax.xlane.f32.xlu0 %v988
    %v990 = vpop.xlane.xlu0 %989
    %v991 = vsel %vm722, %v892, -inf
    %992 = vmax.xlane.f32.xlu0 %v991
    %v993 = vpop.xlane.xlu0 %992
    %v994 = vsel %vm722, %v895, -inf
    %995 = vmax.xlane.f32.xlu0 %v994
    %v996 = vpop.xlane.xlu0 %995
    %v997 = vsel %vm722, %v900, -inf
    %998 = vmax.xlane.f32.xlu0 %v997
    %v999 = vpop.xlane.xlu0 %998
    %v1000 = vsel %vm722, %v903, -inf
    %1001 = vmax.xlane.f32.xlu0 %v1000
    %v1002 = vpop.xlane.xlu0 %1001
    %v1003 = vsel %vm722, %v953, -inf
    %1004 = vmax.xlane.f32.xlu0 %v1003
    %v1005 = vpop.xlane.xlu0 %1004
    %v1006 = vsel %vm722, %v956, -inf
    %1007 = vmax.xlane.f32.xlu0 %v1006
    %v1008 = vpop.xlane.xlu0 %1007
    %v1009 = vsel %vm722, %v961, -inf
    %1010 = vmax.xlane.f32.xlu0 %v1009
    %v1011 = vpop.xlane.xlu0 %1010
    %v1012 = vsel %vm722, %v964, -inf
    %1013 = vmax.xlane.f32.xlu0 %v1012
    %v1014 = vpop.xlane.xlu0 %1013
    %v1015 = vsub.f32 %v770, %v969
    %v1016 = vsub.f32 %v773, %v972
    %v1017 = vsub.f32 %v778, %v975
    %v1018 = vsub.f32 %v781, %v978
    %v1019 = vsub.f32 %v831, %v981
    %v1020 = vsub.f32 %v834, %v984
    %v1021 = vsub.f32 %v839, %v987
    %v1022 = vsub.f32 %v842, %v990
    %v1023 = vsub.f32 %v892, %v993
    %v1024 = vsub.f32 %v895, %v996
    %v1025 = vsub.f32 %v900, %v999
    %v1026 = vsub.f32 %v903, %v1002
    %v1027 = vsub.f32 %v953, %v1005
    %v1028 = vsub.f32 %v956, %v1008
    %v1029 = vsub.f32 %v961, %v1011
    %v1030 = vsub.f32 %v964, %v1014
    %v1031 = vmul.f32 %v1015, 1.442695
    %v1032 = vpow.pop %v1031
    %v1033 = vmul.f32 %v1016, 1.442695
    %v1034 = vpow.pop %v1033
    %v1035 = vmul.f32 %v1017, 1.442695
    %v1036 = vpow.pop %v1035
    %v1037 = vmul.f32 %v1018, 1.442695
    %v1038 = vpow.pop %v1037
    %v1039 = vmul.f32 %v1019, 1.442695
    %v1040 = vpow.pop %v1039
    %v1041 = vmul.f32 %v1020, 1.442695
    %v1042 = vpow.pop %v1041
    %v1043 = vmul.f32 %v1021, 1.442695
    %v1044 = vpow.pop %v1043
    %v1045 = vmul.f32 %v1022, 1.442695
    %v1046 = vpow.pop %v1045
    %v1047 = vmul.f32 %v1023, 1.442695
    %v1048 = vpow.pop %v1047
    %v1049 = vmul.f32 %v1024, 1.442695
    %v1050 = vpow.pop %v1049
    %v1051 = vmul.f32 %v1025, 1.442695
    %v1052 = vpow.pop %v1051
    %v1053 = vmul.f32 %v1026, 1.442695
    %v1054 = vpow.pop %v1053
    %v1055 = vmul.f32 %v1027, 1.442695
    %v1056 = vpow.pop %v1055
    %v1057 = vmul.f32 %v1028, 1.442695
    %v1058 = vpow.pop %v1057
    %v1059 = vmul.f32 %v1029, 1.442695
    %v1060 = vpow.pop %v1059
    %v1061 = vmul.f32 %v1030, 1.442695
    %v1062 = vpow.pop %v1061
    %v1063 = vsel %vm722, %v1032, 0.0
    %1064 = vadd.xlane.f32.xlu0 %v1063
    %v1065 = vpop.xlane.xlu0 %1064
    %v1066 = vsel %vm722, %v1034, 0.0
    %1067 = vadd.xlane.f32.xlu0 %v1066
    %v1068 = vpop.xlane.xlu0 %1067
    %v1069 = vsel %vm722, %v1036, 0.0
    %1070 = vadd.xlane.f32.xlu0 %v1069
    %v1071 = vpop.xlane.xlu0 %1070
    %v1072 = vsel %vm722, %v1038, 0.0
    %1073 = vadd.xlane.f32.xlu0 %v1072
    %v1074 = vpop.xlane.xlu0 %1073
    %v1075 = vsel %vm722, %v1040, 0.0
    %1076 = vadd.xlane.f32.xlu0 %v1075
    %v1077 = vpop.xlane.xlu0 %1076
    %v1078 = vsel %vm722, %v1042, 0.0
    %1079 = vadd.xlane.f32.xlu0 %v1078
    %v1080 = vpop.xlane.xlu0 %1079
    %v1081 = vsel %vm722, %v1044, 0.0
    %1082 = vadd.xlane.f32.xlu0 %v1081
    %v1083 = vpop.xlane.xlu0 %1082
    %v1084 = vsel %vm722, %v1046, 0.0
    %1085 = vadd.xlane.f32.xlu0 %v1084
    %v1086 = vpop.xlane.xlu0 %1085
    %v1087 = vsel %vm722, %v1048, 0.0
    %1088 = vadd.xlane.f32.xlu0 %v1087
    %v1089 = vpop.xlane.xlu0 %1088
    %v1090 = vsel %vm722, %v1050, 0.0
    %1091 = vadd.xlane.f32.xlu0 %v1090
    %v1092 = vpop.xlane.xlu0 %1091
    %v1093 = vsel %vm722, %v1052, 0.0
    %1094 = vadd.xlane.f32.xlu0 %v1093
    %v1095 = vpop.xlane.xlu0 %1094
    %v1096 = vsel %vm722, %v1054, 0.0
    %1097 = vadd.xlane.f32.xlu0 %v1096
    %v1098 = vpop.xlane.xlu0 %1097
    %v1099 = vsel %vm722, %v1056, 0.0
    %1100 = vadd.xlane.f32.xlu0 %v1099
    %v1101 = vpop.xlane.xlu0 %1100
    %v1102 = vsel %vm722, %v1058, 0.0
    %1103 = vadd.xlane.f32.xlu0 %v1102
    %v1104 = vpop.xlane.xlu0 %1103
    %v1105 = vsel %vm722, %v1060, 0.0
    %1106 = vadd.xlane.f32.xlu0 %v1105
    %v1107 = vpop.xlane.xlu0 %1106
    %v1108 = vsel %vm722, %v1062, 0.0
    %1109 = vadd.xlane.f32.xlu0 %v1108
    %v1110 = vpop.xlane.xlu0 %1109
    %v1111 = vrcp.pop %v1065
    %v1112 = vmul.f32 %v1032, %v1111
    %v1113 = vrcp.pop %v1068
    %v1114 = vmul.f32 %v1034, %v1113
    %v1115 = vrcp.pop %v1071
    %v1116 = vmul.f32 %v1036, %v1115
    %v1117 = vrcp.pop %v1074
    %v1118 = vmul.f32 %v1038, %v1117
    %v1119 = vrcp.pop %v1077
    %v1120 = vmul.f32 %v1040, %v1119
    %v1121 = vrcp.pop %v1080
    %v1122 = vmul.f32 %v1042, %v1121
    %v1123 = vrcp.pop %v1083
    %v1124 = vmul.f32 %v1044, %v1123
    %v1125 = vrcp.pop %v1086
    %v1126 = vmul.f32 %v1046, %v1125
    %v1127 = vrcp.pop %v1089
    %v1128 = vmul.f32 %v1048, %v1127
    %v1129 = vrcp.pop %v1092
    %v1130 = vmul.f32 %v1050, %v1129
    %v1131 = vrcp.pop %v1095
    %v1132 = vmul.f32 %v1052, %v1131
    %v1133 = vrcp.pop %v1098
    %v1134 = vmul.f32 %v1054, %v1133
    %v1135 = vrcp.pop %v1101
    %v1136 = vmul.f32 %v1056, %v1135
    %v1137 = vrcp.pop %v1104
    %v1138 = vmul.f32 %v1058, %v1137
    %v1139 = vrcp.pop %v1107
    %v1140 = vmul.f32 %v1060, %v1139
    %v1141 = vrcp.pop %v1110
    %v1142 = vmul.f32 %v1062, %v1141
    %v1143 = vpack.c.bf16 %v1114, %v1112
    %v1144 = vpack.c.bf16 %v1118, %v1116
    %v1145 = vpack.c.bf16 %v1122, %v1120
    %v1146 = vpack.c.bf16 %v1126, %v1124
    %v1147 = vpack.c.bf16 %v1130, %v1128
    %v1148 = vpack.c.bf16 %v1134, %v1132
    %v1149 = vpack.c.bf16 %v1138, %v1136
    %v1150 = vpack.c.bf16 %v1142, %v1140
    %v1152 = vsel %vm722, %v1143, 0
    %v1155 = vsel %vm722, %v1144, 0
    %1157 = vmatprep.subr.bf16.mxu0 0
    %1158 = vmatpush1.bf16.msra.mxu0 %v714
    %1159 = vmatprep.subr.bf16.mxu0 0
    %1160 = vmatpush1.bf16.msra.mxu0 %v715
    %1161 = vmatprep.subr.bf16.mxu0 0
    %1162 = vmatpush1.bf16.msra.mxu0 0
    %1163 = vmatprep.subr.bf16.mxu0 0
    %1164 = vmatpush1.bf16.msra.mxu0 0
    %1165 = vmatprep.subr.bf16.mxu0 0
    %1166 = vmatpush1.bf16.msra.mxu0 0
    %1167 = vmatprep.subr.bf16.mxu0 0
    %1168 = vmatpush1.bf16.msra.mxu0 0
    %1169 = vmatprep.subr.bf16.mxu0 0
    %1170 = vmatpush1.bf16.msra.mxu0 0
    %1171 = vmatprep.subr.bf16.mxu0 0
    %1172 = vmatpush1.bf16.msra.mxu0 0
    %1173 = vmatprep.subr.bf16.mxu0 0
    %1174 = vmatpush1.bf16.msra.mxu0 0
    %1175 = vmatprep.subr.bf16.mxu0 0
    %1176 = vmatpush1.bf16.msra.mxu0 0
    %1177 = vmatprep.subr.bf16.mxu0 0
    %1178 = vmatpush1.bf16.msra.mxu0 0
    %1179 = vmatprep.subr.bf16.mxu0 0
    %1180 = vmatpush1.bf16.msra.mxu0 0
    %1181 = vmatprep.subr.bf16.mxu0 0
    %1182 = vmatpush1.bf16.msra.mxu0 0
    %1183 = vmatprep.subr.bf16.mxu0 0
    %1184 = vmatpush1.bf16.msra.mxu0 0
    %1185 = vmatprep.subr.bf16.mxu0 0
    %1186 = vmatpush1.bf16.msra.mxu0 0
    %1187 = vmatprep.subr.bf16.mxu0 0
    %1188 = vmatpush1.bf16.msra.mxu0 0
    %1189 = vmatprep.mubr.bf16.mxu0 0
    %1190 = vmatmul.mubr.bf16.gmra.mrb[0].mxu0 %v1152
    %v1191 = vpop.f32.mrb[0].mxu0
    %v1192 = vadd.f32 0.0, %v1191
    %v1193 = vpop.f32.mrb[0].mxu0
    %v1194 = vpop.f32.mrb[0].mxu0
    %v1195 = vadd.f32 0.0, %v1194
    %v1196 = vpop.f32.mrb[0].mxu0
    %1197 = vmatprep.mubr.bf16.mxu0 0
    %1198 = vmatmul.mubr.bf16.gmra.mrb[0].mxu0 %v1155
    %v1199 = vpop.f32.mrb[0].mxu0
    %v1200 = vadd.f32 0.0, %v1199
    %v1201 = vpop.f32.mrb[0].mxu0
    %v1202 = vpop.f32.mrb[0].mxu0
    %v1203 = vadd.f32 0.0, %v1202
    %v1204 = vpop.f32.mrb[0].mxu0
    %1205 = vdwg.mxu0
    %v1207 = vsel %vm722, %v1145, 0
    %v1210 = vsel %vm722, %v1146, 0
    %1212 = vmatprep.subr.bf16.mxu0 0
    %1213 = vmatpush1.bf16.msra.mxu0 %v716
    %1214 = vmatprep.subr.bf16.mxu0 0
    %1215 = vmatpush1.bf16.msra.mxu0 %v717
    %1216 = vmatprep.subr.bf16.mxu0 0
    %1217 = vmatpush1.bf16.msra.mxu0 0
    %1218 = vmatprep.subr.bf16.mxu0 0
    %1219 = vmatpush1.bf16.msra.mxu0 0
    %1220 = vmatprep.subr.bf16.mxu0 0
    %1221 = vmatpush1.bf16.msra.mxu0 0
    %1222 = vmatprep.subr.bf16.mxu0 0
    %1223 = vmatpush1.bf16.msra.mxu0 0
    %1224 = vmatprep.subr.bf16.mxu0 0
    %1225 = vmatpush1.bf16.msra.mxu0 0
    %1226 = vmatprep.subr.bf16.mxu0 0
    %1227 = vmatpush1.bf16.msra.mxu0 0
    %1228 = vmatprep.subr.bf16.mxu0 0
    %1229 = vmatpush1.bf16.msra.mxu0 0
    %1230 = vmatprep.subr.bf16.mxu0 0
    %1231 = vmatpush1.bf16.msra.mxu0 0
    %1232 = vmatprep.subr.bf16.mxu0 0
    %1233 = vmatpush1.bf16.msra.mxu0 0
    %1234 = vmatprep.subr.bf16.mxu0 0
    %1235 = vmatpush1.bf16.msra.mxu0 0
    %1236 = vmatprep.subr.bf16.mxu0 0
    %1237 = vmatpush1.bf16.msra.mxu0 0
    %1238 = vmatprep.subr.bf16.mxu0 0
    %1239 = vmatpush1.bf16.msra.mxu0 0
    %1240 = vmatprep.subr.bf16.mxu0 0
    %1241 = vmatpush1.bf16.msra.mxu0 0
    %1242 = vmatprep.subr.bf16.mxu0 0
    %1243 = vmatpush1.bf16.msra.mxu0 0
    %1244 = vmatprep.mubr.bf16.mxu0 0
    %1245 = vmatmul.mubr.bf16.gmra.mrb[0].mxu0 %v1207
    %v1246 = vpop.f32.mrb[0].mxu0
    %v1247 = vadd.f32 0.0, %v1246
    %v1248 = vpop.f32.mrb[0].mxu0
    %v1249 = vpop.f32.mrb[0].mxu0
    %v1250 = vadd.f32 0.0, %v1249
    %v1251 = vpop.f32.mrb[0].mxu0
    %1252 = vmatprep.mubr.bf16.mxu0 0
    %1253 = vmatmul.mubr.bf16.gmra.mrb[0].mxu0 %v1210
    %v1254 = vpop.f32.mrb[0].mxu0
    %v1255 = vadd.f32 0.0, %v1254
    %v1256 = vpop.f32.mrb[0].mxu0
    %v1257 = vpop.f32.mrb[0].mxu0
    %v1258 = vadd.f32 0.0, %v1257
    %v1259 = vpop.f32.mrb[0].mxu0
    %1260 = vdwg.mxu0
    %v1262 = vsel %vm722, %v1147, 0
    %v1265 = vsel %vm722, %v1148, 0
    %1267 = vmatprep.subr.bf16.mxu0 0
    %1268 = vmatpush1.bf16.msra.mxu0 %v718
    %1269 = vmatprep.subr.bf16.mxu0 0
    %1270 = vmatpush1.bf16.msra.mxu0 %v719
    %1271 = vmatprep.subr.bf16.mxu0 0
    %1272 = vmatpush1.bf16.msra.mxu0 0
    %1273 = vmatprep.subr.bf16.mxu0 0
    %1274 = vmatpush1.bf16.msra.mxu0 0
    %1275 = vmatprep.subr.bf16.mxu0 0
    %1276 = vmatpush1.bf16.msra.mxu0 0
    %1277 = vmatprep.subr.bf16.mxu0 0
    %1278 = vmatpush1.bf16.msra.mxu0 0
    %1279 = vmatprep.subr.bf16.mxu0 0
    %1280 = vmatpush1.bf16.msra.mxu0 0
    %1281 = vmatprep.subr.bf16.mxu0 0
    %1282 = vmatpush1.bf16.msra.mxu0 0
    %1283 = vmatprep.subr.bf16.mxu0 0
    %1284 = vmatpush1.bf16.msra.mxu0 0
    %1285 = vmatprep.subr.bf16.mxu0 0
    %1286 = vmatpush1.bf16.msra.mxu0 0
    %1287 = vmatprep.subr.bf16.mxu0 0
    %1288 = vmatpush1.bf16.msra.mxu0 0
    %1289 = vmatprep.subr.bf16.mxu0 0
    %1290 = vmatpush1.bf16.msra.mxu0 0
    %1291 = vmatprep.subr.bf16.mxu0 0
    %1292 = vmatpush1.bf16.msra.mxu0 0
    %1293 = vmatprep.subr.bf16.mxu0 0
    %1294 = vmatpush1.bf16.msra.mxu0 0
    %1295 = vmatprep.subr.bf16.mxu0 0
    %1296 = vmatpush1.bf16.msra.mxu0 0
    %1297 = vmatprep.subr.bf16.mxu0 0
    %1298 = vmatpush1.bf16.msra.mxu0 0
    %1299 = vmatprep.mubr.bf16.mxu0 0
    %1300 = vmatmul.mubr.bf16.gmra.mrb[0].mxu0 %v1262
    %v1301 = vpop.f32.mrb[0].mxu0
    %v1302 = vadd.f32 0.0, %v1301
    %v1303 = vpop.f32.mrb[0].mxu0
    %v1304 = vpop.f32.mrb[0].mxu0
    %v1305 = vadd.f32 0.0, %v1304
    %v1306 = vpop.f32.mrb[0].mxu0
    %1307 = vmatprep.mubr.bf16.mxu0 0
    %1308 = vmatmul.mubr.bf16.gmra.mrb[0].mxu0 %v1265
    %v1309 = vpop.f32.mrb[0].mxu0
    %v1310 = vadd.f32 0.0, %v1309
    %v1311 = vpop.f32.mrb[0].mxu0
    %v1312 = vpop.f32.mrb[0].mxu0
    %v1313 = vadd.f32 0.0, %v1312
    %v1314 = vpop.f32.mrb[0].mxu0
    %1315 = vdwg.mxu0
    %v1317 = vsel %vm722, %v1149, 0
    %v1320 = vsel %vm722, %v1150, 0
    %1322 = vmatprep.subr.bf16.mxu0 0
    %1323 = vmatpush1.bf16.msra.mxu0 %v720
    %1324 = vmatprep.subr.bf16.mxu0 0
    %1325 = vmatpush1.bf16.msra.mxu0 %v721
    %1326 = vmatprep.subr.bf16.mxu0 0
    %1327 = vmatpush1.bf16.msra.mxu0 0
    %1328 = vmatprep.subr.bf16.mxu0 0
    %1329 = vmatpush1.bf16.msra.mxu0 0
    %1330 = vmatprep.subr.bf16.mxu0 0
    %1331 = vmatpush1.bf16.msra.mxu0 0
    %1332 = vmatprep.subr.bf16.mxu0 0
    %1333 = vmatpush1.bf16.msra.mxu0 0
    %1334 = vmatprep.subr.bf16.mxu0 0
    %1335 = vmatpush1.bf16.msra.mxu0 0
    %1336 = vmatprep.subr.bf16.mxu0 0
    %1337 = vmatpush1.bf16.msra.mxu0 0
    %1338 = vmatprep.subr.bf16.mxu0 0
    %1339 = vmatpush1.bf16.msra.mxu0 0
    %1340 = vmatprep.subr.bf16.mxu0 0
    %1341 = vmatpush1.bf16.msra.mxu0 0
    %1342 = vmatprep.subr.bf16.mxu0 0
    %1343 = vmatpush1.bf16.msra.mxu0 0
    %1344 = vmatprep.subr.bf16.mxu0 0
    %1345 = vmatpush1.bf16.msra.mxu0 0
    %1346 = vmatprep.subr.bf16.mxu0 0
    %1347 = vmatpush1.bf16.msra.mxu0 0
    %1348 = vmatprep.subr.bf16.mxu0 0
    %1349 = vmatpush1.bf16.msra.mxu0 0
    %1350 = vmatprep.subr.bf16.mxu0 0
    %1351 = vmatpush1.bf16.msra.mxu0 0
    %1352 = vmatprep.subr.bf16.mxu0 0
    %1353 = vmatpush1.bf16.msra.mxu0 0
    %1354 = vmatprep.mubr.bf16.mxu0 0
    %1355 = vmatmul.mubr.bf16.gmra.mrb[0].mxu0 %v1317
    %v1356 = vpop.f32.mrb[0].mxu0
    %v1357 = vadd.f32 0.0, %v1356
    %v1358 = vpop.f32.mrb[0].mxu0
    %v1359 = vpop.f32.mrb[0].mxu0
    %v1360 = vadd.f32 0.0, %v1359
    %v1361 = vpop.f32.mrb[0].mxu0
    %1362 = vmatprep.mubr.bf16.mxu0 0
    %1363 = vmatmul.mubr.bf16.gmra.mrb[0].mxu0 %v1320
    %v1364 = vpop.f32.mrb[0].mxu0
    %v1365 = vadd.f32 0.0, %v1364
    %v1366 = vpop.f32.mrb[0].mxu0
    %v1367 = vpop.f32.mrb[0].mxu0
    %v1368 = vadd.f32 0.0, %v1367
    %v1369 = vpop.f32.mrb[0].mxu0
    %1370 = vdwg.mxu0
    %v1371 = vpack.c.bf16 %v1195, %v1192
    %v1372 = vpack.c.bf16 %v1203, %v1200
    %v1373 = vpack.c.bf16 %v1250, %v1247
    %v1374 = vpack.c.bf16 %v1258, %v1255
    %v1375 = vpack.c.bf16 %v1305, %v1302
    %v1376 = vpack.c.bf16 %v1313, %v1310
    %v1377 = vpack.c.bf16 %v1360, %v1357
    %v1378 = vpack.c.bf16 %v1368, %v1365
    %v1379 = vld [vmem:[#allocation11] sm:$0xf]
    %v1380 = vld [vmem:[#allocation11 + $0x4] sm:$0xf]
    %v1381 = vld [vmem:[#allocation11 + $0x8] sm:$0xf]
    %v1382 = vld [vmem:[#allocation11 + $0xc] sm:$0xf]
    %v1383 = vld [vmem:[#allocation11 + $0x10] sm:$0xf]
    %v1384 = vld [vmem:[#allocation11 + $0x14] sm:$0xf]
    %v1385 = vld [vmem:[#allocation11 + $0x18] sm:$0xf]
    %v1386 = vld [vmem:[#allocation11 + $0x1c] sm:$0xf]
    %v1387 = vld [vmem:[#allocation11 + $0x20] sm:$0xf]
    %v1388 = vld [vmem:[#allocation11 + $0x24] sm:$0xf]
    %v1389 = vld [vmem:[#allocation11 + $0x28] sm:$0xf]
    %v1390 = vld [vmem:[#allocation11 + $0x2c] sm:$0xf]
    %v1391 = vld [vmem:[#allocation11 + $0x30] sm:$0xf]
    %v1392 = vld [vmem:[#allocation11 + $0x34] sm:$0xf]
    %v1393 = vld [vmem:[#allocation11 + $0x38] sm:$0xf]
    %v1394 = vld [vmem:[#allocation11 + $0x3c] sm:$0xf]
    %v1399 = vunpack.c.l.b16 %v1379
    %v1400 = vunpack.c.l.b16 %v1380
    %v1401 = vunpack.c.l.b16 %v1381
    %v1402 = vunpack.c.l.b16 %v1382
    %v1403 = vpack.c.b16 %v1400, %v1399
    %v1404 = vpack.c.b16 %v1402, %v1401
    %v1408 = vsel %vm722, %v1371, 0
    %v1411 = vsel %vm722, %v1372, 0
    %1413 = vmatprep.subr.bf16.mxu0 0
    %1414 = vmatpush1.bf16.msra.mxu0 %v1403
    %1415 = vmatprep.subr.bf16.mxu0 0
    %1416 = vmatpush1.bf16.msra.mxu0 %v1404
    %1417 = vmatprep.subr.bf16.mxu0 0
    %1418 = vmatpush1.bf16.msra.mxu0 0
    %1419 = vmatprep.subr.bf16.mxu0 0
    %1420 = vmatpush1.bf16.msra.mxu0 0
    %1421 = vmatprep.subr.bf16.mxu0 0
    %1422 = vmatpush1.bf16.msra.mxu0 0
    %1423 = vmatprep.subr.bf16.mxu0 0
    %1424 = vmatpush1.bf16.msra.mxu0 0
    %1425 = vmatprep.subr.bf16.mxu0 0
    %1426 = vmatpush1.bf16.msra.mxu0 0
    %1427 = vmatprep.subr.bf16.mxu0 0
    %1428 = vmatpush1.bf16.msra.mxu0 0
    %1429 = vmatprep.subr.bf16.mxu0 0
    %1430 = vmatpush1.bf16.msra.mxu0 0
    %1431 = vmatprep.subr.bf16.mxu0 0
    %1432 = vmatpush1.bf16.msra.mxu0 0
    %1433 = vmatprep.subr.bf16.mxu0 0
    %1434 = vmatpush1.bf16.msra.mxu0 0
    %1435 = vmatprep.subr.bf16.mxu0 0
    %1436 = vmatpush1.bf16.msra.mxu0 0
    %1437 = vmatprep.subr.bf16.mxu0 0
    %1438 = vmatpush1.bf16.msra.mxu0 0
    %1439 = vmatprep.subr.bf16.mxu0 0
    %1440 = vmatpush1.bf16.msra.mxu0 0
    %1441 = vmatprep.subr.bf16.mxu0 0
    %1442 = vmatpush1.bf16.msra.mxu0 0
    %1443 = vmatprep.subr.bf16.mxu0 0
    %1444 = vmatpush1.bf16.msra.mxu0 0
    %1445 = vmatprep.mubr.bf16.mxu0 0
    %1446 = vmatmul.mubr.bf16.gmra.mrb[0].mxu0 %v1408
    %v1447 = vpop.f32.mrb[0].mxu0
    %v1448 = vadd.f32 0.0, %v1447
    %v1449 = vpop.f32.mrb[0].mxu0
    %v1450 = vpop.f32.mrb[0].mxu0
    %v1451 = vadd.f32 0.0, %v1450
    %v1452 = vpop.f32.mrb[0].mxu0
    %1453 = vmatprep.mubr.bf16.mxu0 0
    %1454 = vmatmul.mubr.bf16.gmra.mrb[0].mxu0 %v1411
    %v1455 = vpop.f32.mrb[0].mxu0
    %v1456 = vadd.f32 0.0, %v1455
    %v1457 = vpop.f32.mrb[0].mxu0
    %v1458 = vpop.f32.mrb[0].mxu0
    %v1459 = vadd.f32 0.0, %v1458
    %v1460 = vpop.f32.mrb[0].mxu0
    %1461 = vdwg.mxu0
    %v1466 = vunpack.c.l.b16 %v1383
    %v1467 = vunpack.c.l.b16 %v1384
    %v1468 = vunpack.c.l.b16 %v1385
    %v1469 = vunpack.c.l.b16 %v1386
    %v1470 = vpack.c.b16 %v1467, %v1466
    %v1471 = vpack.c.b16 %v1469, %v1468
    %v1475 = vsel %vm722, %v1373, 0
    %v1478 = vsel %vm722, %v1374, 0
    %1480 = vmatprep.subr.bf16.mxu0 0
    %1481 = vmatpush1.bf16.msra.mxu0 %v1470
    %1482 = vmatprep.subr.bf16.mxu0 0
    %1483 = vmatpush1.bf16.msra.mxu0 %v1471
    %1484 = vmatprep.subr.bf16.mxu0 0
    %1485 = vmatpush1.bf16.msra.mxu0 0
    %1486 = vmatprep.subr.bf16.mxu0 0
    %1487 = vmatpush1.bf16.msra.mxu0 0
    %1488 = vmatprep.subr.bf16.mxu0 0
    %1489 = vmatpush1.bf16.msra.mxu0 0
    %1490 = vmatprep.subr.bf16.mxu0 0
    %1491 = vmatpush1.bf16.msra.mxu0 0
    %1492 = vmatprep.subr.bf16.mxu0 0
    %1493 = vmatpush1.bf16.msra.mxu0 0
    %1494 = vmatprep.subr.bf16.mxu0 0
    %1495 = vmatpush1.bf16.msra.mxu0 0
    %1496 = vmatprep.subr.bf16.mxu0 0
    %1497 = vmatpush1.bf16.msra.mxu0 0
    %1498 = vmatprep.subr.bf16.mxu0 0
    %1499 = vmatpush1.bf16.msra.mxu0 0
    %1500 = vmatprep.subr.bf16.mxu0 0
    %1501 = vmatpush1.bf16.msra.mxu0 0
    %1502 = vmatprep.subr.bf16.mxu0 0
    %1503 = vmatpush1.bf16.msra.mxu0 0
    %1504 = vmatprep.subr.bf16.mxu0 0
    %1505 = vmatpush1.bf16.msra.mxu0 0
    %1506 = vmatprep.subr.bf16.mxu0 0
    %1507 = vmatpush1.bf16.msra.mxu0 0
    %1508 = vmatprep.subr.bf16.mxu0 0
    %1509 = vmatpush1.bf16.msra.mxu0 0
    %1510 = vmatprep.subr.bf16.mxu0 0
    %1511 = vmatpush1.bf16.msra.mxu0 0
    %1512 = vmatprep.mubr.bf16.mxu0 0
    %1513 = vmatmul.mubr.bf16.gmra.mrb[0].mxu0 %v1475
    %v1514 = vpop.f32.mrb[0].mxu0
    %v1515 = vadd.f32 0.0, %v1514
    %v1516 = vpop.f32.mrb[0].mxu0
    %v1517 = vpop.f32.mrb[0].mxu0
    %v1518 = vadd.f32 0.0, %v1517
    %v1519 = vpop.f32.mrb[0].mxu0
    %1520 = vmatprep.mubr.bf16.mxu0 0
    %1521 = vmatmul.mubr.bf16.gmra.mrb[0].mxu0 %v1478
    %v1522 = vpop.f32.mrb[0].mxu0
    %v1523 = vadd.f32 0.0, %v1522
    %v1524 = vpop.f32.mrb[0].mxu0
    %v1525 = vpop.f32.mrb[0].mxu0
    %v1526 = vadd.f32 0.0, %v1525
    %v1527 = vpop.f32.mrb[0].mxu0
    %1528 = vdwg.mxu0
    %v1533 = vunpack.c.l.b16 %v1387
    %v1534 = vunpack.c.l.b16 %v1388
    %v1535 = vunpack.c.l.b16 %v1389
    %v1536 = vunpack.c.l.b16 %v1390
    %v1537 = vpack.c.b16 %v1534, %v1533
    %v1538 = vpack.c.b16 %v1536, %v1535
    %v1542 = vsel %vm722, %v1375, 0
    %v1545 = vsel %vm722, %v1376, 0
    %1547 = vmatprep.subr.bf16.mxu0 0
    %1548 = vmatpush1.bf16.msra.mxu0 %v1537
    %1549 = vmatprep.subr.bf16.mxu0 0
    %1550 = vmatpush1.bf16.msra.mxu0 %v1538
    %1551 = vmatprep.subr.bf16.mxu0 0
    %1552 = vmatpush1.bf16.msra.mxu0 0
    %1553 = vmatprep.subr.bf16.mxu0 0
    %1554 = vmatpush1.bf16.msra.mxu0 0
    %1555 = vmatprep.subr.bf16.mxu0 0
    %1556 = vmatpush1.bf16.msra.mxu0 0
    %1557 = vmatprep.subr.bf16.mxu0 0
    %1558 = vmatpush1.bf16.msra.mxu0 0
    %1559 = vmatprep.subr.bf16.mxu0 0
    %1560 = vmatpush1.bf16.msra.mxu0 0
    %1561 = vmatprep.subr.bf16.mxu0 0
    %1562 = vmatpush1.bf16.msra.mxu0 0
    %1563 = vmatprep.subr.bf16.mxu0 0
    %1564 = vmatpush1.bf16.msra.mxu0 0
    %1565 = vmatprep.subr.bf16.mxu0 0
    %1566 = vmatpush1.bf16.msra.mxu0 0
    %1567 = vmatprep.subr.bf16.mxu0 0
    %1568 = vmatpush1.bf16.msra.mxu0 0
    %1569 = vmatprep.subr.bf16.mxu0 0
    %1570 = vmatpush1.bf16.msra.mxu0 0
    %1571 = vmatprep.subr.bf16.mxu0 0
    %1572 = vmatpush1.bf16.msra.mxu0 0
    %1573 = vmatprep.subr.bf16.mxu0 0
    %1574 = vmatpush1.bf16.msra.mxu0 0
    %1575 = vmatprep.subr.bf16.mxu0 0
    %1576 = vmatpush1.bf16.msra.mxu0 0
    %1577 = vmatprep.subr.bf16.mxu0 0
    %1578 = vmatpush1.bf16.msra.mxu0 0
    %1579 = vmatprep.mubr.bf16.mxu0 0
    %1580 = vmatmul.mubr.bf16.gmra.mrb[0].mxu0 %v1542
    %v1581 = vpop.f32.mrb[0].mxu0
    %v1582 = vadd.f32 0.0, %v1581
    %v1583 = vpop.f32.mrb[0].mxu0
    %v1584 = vpop.f32.mrb[0].mxu0
    %v1585 = vadd.f32 0.0, %v1584
    %v1586 = vpop.f32.mrb[0].mxu0
    %1587 = vmatprep.mubr.bf16.mxu0 0
    %1588 = vmatmul.mubr.bf16.gmra.mrb[0].mxu0 %v1545
    %v1589 = vpop.f32.mrb[0].mxu0
    %v1590 = vadd.f32 0.0, %v1589
    %v1591 = vpop.f32.mrb[0].mxu0
    %v1592 = vpop.f32.mrb[0].mxu0
    %v1593 = vadd.f32 0.0, %v1592
    %v1594 = vpop.f32.mrb[0].mxu0
    %1595 = vdwg.mxu0
    %v1600 = vunpack.c.l.b16 %v1391
    %v1601 = vunpack.c.l.b16 %v1392
    %v1602 = vunpack.c.l.b16 %v1393
    %v1603 = vunpack.c.l.b16 %v1394
    %v1604 = vpack.c.b16 %v1601, %v1600
    %v1605 = vpack.c.b16 %v1603, %v1602
    %v1609 = vsel %vm722, %v1377, 0
    %v1612 = vsel %vm722, %v1378, 0
    %1614 = vmatprep.subr.bf16.mxu0 0
    %1615 = vmatpush1.bf16.msra.mxu0 %v1604
    %1616 = vmatprep.subr.bf16.mxu0 0
    %1617 = vmatpush1.bf16.msra.mxu0 %v1605
    %1618 = vmatprep.subr.bf16.mxu0 0
    %1619 = vmatpush1.bf16.msra.mxu0 0
    %1620 = vmatprep.subr.bf16.mxu0 0
    %1621 = vmatpush1.bf16.msra.mxu0 0
    %1622 = vmatprep.subr.bf16.mxu0 0
    %1623 = vmatpush1.bf16.msra.mxu0 0
    %1624 = vmatprep.subr.bf16.mxu0 0
    %1625 = vmatpush1.bf16.msra.mxu0 0
    %1626 = vmatprep.subr.bf16.mxu0 0
    %1627 = vmatpush1.bf16.msra.mxu0 0
    %1628 = vmatprep.subr.bf16.mxu0 0
    %1629 = vmatpush1.bf16.msra.mxu0 0
    %1630 = vmatprep.subr.bf16.mxu0 0
    %1631 = vmatpush1.bf16.msra.mxu0 0
    %1632 = vmatprep.subr.bf16.mxu0 0
    %1633 = vmatpush1.bf16.msra.mxu0 0
    %1634 = vmatprep.subr.bf16.mxu0 0
    %1635 = vmatpush1.bf16.msra.mxu0 0
    %1636 = vmatprep.subr.bf16.mxu0 0
    %1637 = vmatpush1.bf16.msra.mxu0 0
    %1638 = vmatprep.subr.bf16.mxu0 0
    %1639 = vmatpush1.bf16.msra.mxu0 0
    %1640 = vmatprep.subr.bf16.mxu0 0
    %1641 = vmatpush1.bf16.msra.mxu0 0
    %1642 = vmatprep.subr.bf16.mxu0 0
    %1643 = vmatpush1.bf16.msra.mxu0 0
    %1644 = vmatprep.subr.bf16.mxu0 0
    %1645 = vmatpush1.bf16.msra.mxu0 0
    %1646 = vmatprep.mubr.bf16.mxu0 0
    %1647 = vmatmul.mubr.bf16.gmra.mrb[0].mxu0 %v1609
    %v1648 = vpop.f32.mrb[0].mxu0
    %v1649 = vadd.f32 0.0, %v1648
    %v1650 = vpop.f32.mrb[0].mxu0
    %v1651 = vpop.f32.mrb[0].mxu0
    %v1652 = vadd.f32 0.0, %v1651
    %v1653 = vpop.f32.mrb[0].mxu0
    %1654 = vmatprep.mubr.bf16.mxu0 0
    %1655 = vmatmul.mubr.bf16.gmra.mrb[0].mxu0 %v1612
    %v1656 = vpop.f32.mrb[0].mxu0
    %v1657 = vadd.f32 0.0, %v1656
    %v1658 = vpop.f32.mrb[0].mxu0
    %v1659 = vpop.f32.mrb[0].mxu0
    %v1660 = vadd.f32 0.0, %v1659
    %v1661 = vpop.f32.mrb[0].mxu0
    %1662 = vdwg.mxu0
    %v1663 = vadd.f32 %v1448, %v1515
    %v1664 = vadd.f32 %v1663, %v1582
    %v1665 = vadd.f32 %v1664, %v1649
    %v1666 = vadd.f32 %v1451, %v1518
    %v1667 = vadd.f32 %v1666, %v1585
    %v1668 = vadd.f32 %v1667, %v1652
    %v1669 = vadd.f32 %v1456, %v1523
    %v1670 = vadd.f32 %v1669, %v1590
    %v1671 = vadd.f32 %v1670, %v1657
    %v1672 = vadd.f32 %v1459, %v1526
    %v1673 = vadd.f32 %v1672, %v1593
    %v1674 = vadd.f32 %v1673, %v1660
    %v1675 = vld [vmem:[%s7] sm:$0x1]
    %v1677 = vlaneseq
    %v1678 = vshrl.u32 %v1677, 7
    %v1679 = vsub.s32 0, %v1678
    %v1680 = vrot.slane %v1675, %v1679
    %v1682 = vadd.f32 %v1665, %v1680
    %v1683 = vadd.f32 %v1668, %v1680
    %v1684 = vadd.f32 %v1671, %v1680
    %v1685 = vadd.f32 %v1674, %v1680
    %v1686 = vadd.f32 %v283, %v1682
    %v1687 = vadd.f32 %v286, %v1683
    %v1688 = vadd.f32 %v291, %v1684
    %v1689 = vadd.f32 %v294, %v1685
    %v1690 = vld [vmem:[%s8] sm:$0x1]
    %v1691 = vld [vmem:[%s9] sm:$0x1]
    %1692 = vadd.xlane.f32.xlu0 %v1686
    %v1693 = vpop.xlane.xlu0 %1692
    %1694 = vadd.xlane.f32.xlu0 %v1687
    %v1695 = vpop.xlane.xlu0 %1694
    %1696 = vadd.xlane.f32.xlu0 %v1688
    %v1697 = vpop.xlane.xlu0 %1696
    %1698 = vadd.xlane.f32.xlu0 %v1689
    %v1699 = vpop.xlane.xlu0 %1698
    %v1700 = vrcp.pop 128.0
    %v1701 = vmul.f32 %v1693, %v1700
    %v1702 = vmul.f32 %v1695, %v1700
    %v1703 = vmul.f32 %v1697, %v1700
    %v1704 = vmul.f32 %v1699, %v1700
    %v1705 = vsub.f32 %v1686, %v1701
    %v1706 = vsub.f32 %v1687, %v1702
    %v1707 = vsub.f32 %v1688, %v1703
    %v1708 = vsub.f32 %v1689, %v1704
    %v1709 = vmul.f32 %v1705, %v1705
    %v1710 = vmul.f32 %v1706, %v1706
    %v1711 = vmul.f32 %v1707, %v1707
    %v1712 = vmul.f32 %v1708, %v1708
    %1713 = vadd.xlane.f32.xlu0 %v1709
    %v1714 = vpop.xlane.xlu0 %1713
    %1715 = vadd.xlane.f32.xlu0 %v1710
    %v1716 = vpop.xlane.xlu0 %1715
    %1717 = vadd.xlane.f32.xlu0 %v1711
    %v1718 = vpop.xlane.xlu0 %1717
    %1719 = vadd.xlane.f32.xlu0 %v1712
    %v1720 = vpop.xlane.xlu0 %1719
    %v1721 = vmul.f32 %v1714, %v1700
    %v1722 = vmul.f32 %v1716, %v1700
    %v1723 = vmul.f32 %v1718, %v1700
    %v1724 = vmul.f32 %v1720, %v1700
    %v1725 = vadd.f32 %v1721, 1e-05
    %v1726 = vadd.f32 %v1722, 1e-05
    %v1727 = vadd.f32 %v1723, 1e-05
    %v1728 = vadd.f32 %v1724, 1e-05
    %v1729 = vrsqrt.pop %v1725
    %v1730 = vrsqrt.pop %v1726
    %v1731 = vrsqrt.pop %v1727
    %v1732 = vrsqrt.pop %v1728
    %v1733 = vmul.f32 %v1705, %v1729
    %v1734 = vmul.f32 %v1706, %v1730
    %v1735 = vmul.f32 %v1707, %v1731
    %v1736 = vmul.f32 %v1708, %v1732
    %v1738 = vlaneseq
    %v1739 = vshrl.u32 %v1738, 7
    %v1740 = vsub.s32 0, %v1739
    %v1741 = vrot.slane %v1690, %v1740
    %v1743 = vmul.f32 %v1733, %v1741
    %v1744 = vmul.f32 %v1734, %v1741
    %v1745 = vmul.f32 %v1735, %v1741
    %v1746 = vmul.f32 %v1736, %v1741
    %v1748 = vlaneseq
    %v1749 = vshrl.u32 %v1748, 7
    %v1750 = vsub.s32 0, %v1749
    %v1751 = vrot.slane %v1691, %v1750
    %v1753 = vadd.f32 %v1743, %v1751
    %v1754 = vadd.f32 %v1744, %v1751
    %v1755 = vadd.f32 %v1745, %v1751
    %v1756 = vadd.f32 %v1746, %v1751
    %v1757 = vld [vmem:[#allocation13] sm:$0xff]
    %v1758 = vld [vmem:[#allocation13 + $0x8] sm:$0xff]
    %v1759 = vld [vmem:[#allocation13 + $0x10] sm:$0xff]
    %v1760 = vld [vmem:[#allocation13 + $0x18] sm:$0xff]
    %v1761 = vld [vmem:[#allocation13 + $0x20] sm:$0xff]
    %v1762 = vld [vmem:[#allocation13 + $0x28] sm:$0xff]
    %v1763 = vld [vmem:[#allocation13 + $0x30] sm:$0xff]
    %v1764 = vld [vmem:[#allocation13 + $0x38] sm:$0xff]
    %v1765 = vld [vmem:[#allocation13 + $0x40] sm:$0xff]
    %v1766 = vld [vmem:[#allocation13 + $0x48] sm:$0xff]
    %v1767 = vld [vmem:[#allocation13 + $0x50] sm:$0xff]
    %v1768 = vld [vmem:[#allocation13 + $0x58] sm:$0xff]
    %v1769 = vld [vmem:[#allocation13 + $0x60] sm:$0xff]
    %v1770 = vld [vmem:[#allocation13 + $0x68] sm:$0xff]
    %v1771 = vld [vmem:[#allocation13 + $0x70] sm:$0xff]
    %v1772 = vld [vmem:[#allocation13 + $0x78] sm:$0xff]
    %v1773 = vpack.c.bf16 %v1754, %v1753
    %v1774 = vpack.c.bf16 %v1756, %v1755
    %v1775 = vld [vmem:[%s11] sm:$0x3]
    %v1777 = vlaneseq
    %v1778 = vshrl.u32 %v1777, 7
    %v1779 = vsub.s32 0, %v1778
    %v1780 = vrot.slane %v1775, %v1779
    %v1781 = vlaneseq
    %v1782 = vshrl.u32 %v1781, 7
    %v1783 = vsub.s32 1, %v1782
    %v1784 = vrot.slane %v1775, %v1783
    %v1803 = vunpack.c.l.b16 %v1757
    %v1804 = vunpack.c.h.b16 %v1757
    %v1805 = vunpack.c.l.b16 %v1758
    %v1806 = vunpack.c.h.b16 %v1758
    %v1807 = vunpack.c.l.b16 %v1759
    %v1808 = vunpack.c.h.b16 %v1759
    %v1809 = vunpack.c.l.b16 %v1760
    %v1810 = vunpack.c.h.b16 %v1760
    %v1811 = vunpack.c.l.b16 %v1761
    %v1812 = vunpack.c.h.b16 %v1761
    %v1813 = vunpack.c.l.b16 %v1762
    %v1814 = vunpack.c.h.b16 %v1762
    %v1815 = vunpack.c.l.b16 %v1763
    %v1816 = vunpack.c.h.b16 %v1763
    %v1817 = vunpack.c.l.b16 %v1764
    %v1818 = vunpack.c.h.b16 %v1764
    %v1819 = vunpack.c.l.b16 %v1765
    %v1820 = vunpack.c.h.b16 %v1765
    %v1821 = vunpack.c.l.b16 %v1766
    %v1822 = vunpack.c.h.b16 %v1766
    %v1823 = vunpack.c.l.b16 %v1767
    %v1824 = vunpack.c.h.b16 %v1767
    %v1825 = vunpack.c.l.b16 %v1768
    %v1826 = vunpack.c.h.b16 %v1768
    %v1827 = vunpack.c.l.b16 %v1769
    %v1828 = vunpack.c.h.b16 %v1769
    %v1829 = vunpack.c.l.b16 %v1770
    %v1830 = vunpack.c.h.b16 %v1770
    %v1831 = vunpack.c.l.b16 %v1771
    %v1832 = vunpack.c.h.b16 %v1771
    %v1833 = vunpack.c.l.b16 %v1772
    %v1834 = vunpack.c.h.b16 %v1772
    %v1835 = vpack.c.b16 %v1805, %v1803
    %v1836 = vpack.c.b16 %v1806, %v1804
    %v1837 = vpack.c.b16 %v1809, %v1807
    %v1838 = vpack.c.b16 %v1810, %v1808
    %v1839 = vpack.c.b16 %v1813, %v1811
    %v1840 = vpack.c.b16 %v1814, %v1812
    %v1841 = vpack.c.b16 %v1817, %v1815
    %v1842 = vpack.c.b16 %v1818, %v1816
    %v1843 = vpack.c.b16 %v1821, %v1819
    %v1844 = vpack.c.b16 %v1822, %v1820
    %v1845 = vpack.c.b16 %v1825, %v1823
    %v1846 = vpack.c.b16 %v1826, %v1824
    %v1847 = vpack.c.b16 %v1829, %v1827
    %v1848 = vpack.c.b16 %v1830, %v1828
    %v1849 = vpack.c.b16 %v1833, %v1831
    %v1850 = vpack.c.b16 %v1834, %v1832
    %1867 = vmatprep.subr.bf16.mxu0 %v1836
    %1868 = vmatpush1.bf16.msra.mxu0 %v1835
    %1869 = vmatprep.subr.bf16.mxu0 %v1838
    %1870 = vmatpush1.bf16.msra.mxu0 %v1837
    %1871 = vmatprep.subr.bf16.mxu0 %v1840
    %1872 = vmatpush1.bf16.msra.mxu0 %v1839
    %1873 = vmatprep.subr.bf16.mxu0 %v1842
    %1874 = vmatpush1.bf16.msra.mxu0 %v1841
    %1875 = vmatprep.subr.bf16.mxu0 %v1844
    %1876 = vmatpush1.bf16.msra.mxu0 %v1843
    %1877 = vmatprep.subr.bf16.mxu0 %v1846
    %1878 = vmatpush1.bf16.msra.mxu0 %v1845
    %1879 = vmatprep.subr.bf16.mxu0 %v1848
    %1880 = vmatpush1.bf16.msra.mxu0 %v1847
    %1881 = vmatprep.subr.bf16.mxu0 %v1850
    %1882 = vmatpush1.bf16.msra.mxu0 %v1849
    %1883 = vmatprep.subr.bf16.mxu0 0
    %1884 = vmatpush1.bf16.msra.mxu0 0
    %1885 = vmatprep.subr.bf16.mxu0 0
    %1886 = vmatpush1.bf16.msra.mxu0 0
    %1887 = vmatprep.subr.bf16.mxu0 0
    %1888 = vmatpush1.bf16.msra.mxu0 0
    %1889 = vmatprep.subr.bf16.mxu0 0
    %1890 = vmatpush1.bf16.msra.mxu0 0
    %1891 = vmatprep.subr.bf16.mxu0 0
    %1892 = vmatpush1.bf16.msra.mxu0 0
    %1893 = vmatprep.subr.bf16.mxu0 0
    %1894 = vmatpush1.bf16.msra.mxu0 0
    %1895 = vmatprep.subr.bf16.mxu0 0
    %1896 = vmatpush1.bf16.msra.mxu0 0
    %1897 = vmatprep.subr.bf16.mxu0 0
    %1898 = vmatpush1.bf16.msra.mxu0 0
    %1899 = vmatprep.mubr.bf16.mxu0 0
    %1900 = vmatmul.mubr.bf16.gmra.mrb[0].mxu0 %v1773
    %v1901 = vpop.f32.mrb[0].mxu0
    %v1902 = vadd.f32 %v1780, %v1901
    %v1903 = vpop.f32.mrb[0].mxu0
    %v1904 = vadd.f32 %v1784, %v1903
    %v1905 = vpop.f32.mrb[0].mxu0
    %v1906 = vadd.f32 %v1780, %v1905
    %v1907 = vpop.f32.mrb[0].mxu0
    %v1908 = vadd.f32 %v1784, %v1907
    %1909 = vmatprep.mubr.bf16.mxu0 0
    %1910 = vmatmul.mubr.bf16.gmra.mrb[0].mxu0 %v1774
    %v1911 = vpop.f32.mrb[0].mxu0
    %v1912 = vadd.f32 %v1780, %v1911
    %v1913 = vpop.f32.mrb[0].mxu0
    %v1914 = vadd.f32 %v1784, %v1913
    %v1915 = vpop.f32.mrb[0].mxu0
    %v1916 = vadd.f32 %v1780, %v1915
    %v1917 = vpop.f32.mrb[0].mxu0
    %v1918 = vadd.f32 %v1784, %v1917
    %1919 = vdwg.mxu0
    %v1920 = vmax.f32 %v1902, 0.0
    %v1921 = vmax.f32 %v1904, 0.0
    %v1922 = vmax.f32 %v1906, 0.0
    %v1923 = vmax.f32 %v1908, 0.0
    %v1924 = vmax.f32 %v1912, 0.0
    %v1925 = vmax.f32 %v1914, 0.0
    %v1926 = vmax.f32 %v1916, 0.0
    %v1927 = vmax.f32 %v1918, 0.0
    %v1928 = vld [vmem:[#allocation14] sm:$0xf]
    %v1929 = vld [vmem:[#allocation14 + $0x4] sm:$0xf]
    %v1930 = vld [vmem:[#allocation14 + $0x8] sm:$0xf]
    %v1931 = vld [vmem:[#allocation14 + $0xc] sm:$0xf]
    %v1932 = vld [vmem:[#allocation14 + $0x10] sm:$0xf]
    %v1933 = vld [vmem:[#allocation14 + $0x14] sm:$0xf]
    %v1934 = vld [vmem:[#allocation14 + $0x18] sm:$0xf]
    %v1935 = vld [vmem:[#allocation14 + $0x1c] sm:$0xf]
    %v1936 = vld [vmem:[#allocation14 + $0x20] sm:$0xf]
    %v1937 = vld [vmem:[#allocation14 + $0x24] sm:$0xf]
    %v1938 = vld [vmem:[#allocation14 + $0x28] sm:$0xf]
    %v1939 = vld [vmem:[#allocation14 + $0x2c] sm:$0xf]
    %v1940 = vld [vmem:[#allocation14 + $0x30] sm:$0xf]
    %v1941 = vld [vmem:[#allocation14 + $0x34] sm:$0xf]
    %v1942 = vld [vmem:[#allocation14 + $0x38] sm:$0xf]
    %v1943 = vld [vmem:[#allocation14 + $0x3c] sm:$0xf]
    %v1944 = vld [vmem:[#allocation14 + $0x40] sm:$0xf]
    %v1945 = vld [vmem:[#allocation14 + $0x44] sm:$0xf]
    %v1946 = vld [vmem:[#allocation14 + $0x48] sm:$0xf]
    %v1947 = vld [vmem:[#allocation14 + $0x4c] sm:$0xf]
    %v1948 = vld [vmem:[#allocation14 + $0x50] sm:$0xf]
    %v1949 = vld [vmem:[#allocation14 + $0x54] sm:$0xf]
    %v1950 = vld [vmem:[#allocation14 + $0x58] sm:$0xf]
    %v1951 = vld [vmem:[#allocation14 + $0x5c] sm:$0xf]
    %v1952 = vld [vmem:[#allocation14 + $0x60] sm:$0xf]
    %v1953 = vld [vmem:[#allocation14 + $0x64] sm:$0xf]
    %v1954 = vld [vmem:[#allocation14 + $0x68] sm:$0xf]
    %v1955 = vld [vmem:[#allocation14 + $0x6c] sm:$0xf]
    %v1956 = vld [vmem:[#allocation14 + $0x70] sm:$0xf]
    %v1957 = vld [vmem:[#allocation14 + $0x74] sm:$0xf]
    %v1958 = vld [vmem:[#allocation14 + $0x78] sm:$0xf]
    %v1959 = vld [vmem:[#allocation14 + $0x7c] sm:$0xf]
    %v1960 = vpack.c.bf16 %v1922, %v1920
    %v1961 = vpack.c.bf16 %v1923, %v1921
    %v1962 = vpack.c.bf16 %v1926, %v1924
    %v1963 = vpack.c.bf16 %v1927, %v1925
    %v1964 = vld [vmem:[%s13] sm:$0x1]
    %v1966 = vlaneseq
    %v1967 = vshrl.u32 %v1966, 7
    %v1968 = vsub.s32 0, %v1967
    %v1969 = vrot.slane %v1964, %v1968
    %v2003 = vunpack.c.l.b16 %v1928
    %v2004 = vunpack.c.l.b16 %v1929
    %v2005 = vunpack.c.l.b16 %v1930
    %v2006 = vunpack.c.l.b16 %v1931
    %v2007 = vunpack.c.l.b16 %v1932
    %v2008 = vunpack.c.l.b16 %v1933
    %v2009 = vunpack.c.l.b16 %v1934
    %v2010 = vunpack.c.l.b16 %v1935
    %v2011 = vunpack.c.l.b16 %v1936
    %v2012 = vunpack.c.l.b16 %v1937
    %v2013 = vunpack.c.l.b16 %v1938
    %v2014 = vunpack.c.l.b16 %v1939
    %v2015 = vunpack.c.l.b16 %v1940
    %v2016 = vunpack.c.l.b16 %v1941
    %v2017 = vunpack.c.l.b16 %v1942
    %v2018 = vunpack.c.l.b16 %v1943
    %v2019 = vunpack.c.l.b16 %v1944
    %v2020 = vunpack.c.l.b16 %v1945
    %v2021 = vunpack.c.l.b16 %v1946
    %v2022 = vunpack.c.l.b16 %v1947
    %v2023 = vunpack.c.l.b16 %v1948
    %v2024 = vunpack.c.l.b16 %v1949
    %v2025 = vunpack.c.l.b16 %v1950
    %v2026 = vunpack.c.l.b16 %v1951
    %v2027 = vunpack.c.l.b16 %v1952
    %v2028 = vunpack.c.l.b16 %v1953
    %v2029 = vunpack.c.l.b16 %v1954
    %v2030 = vunpack.c.l.b16 %v1955
    %v2031 = vunpack.c.l.b16 %v1956
    %v2032 = vunpack.c.l.b16 %v1957
    %v2033 = vunpack.c.l.b16 %v1958
    %v2034 = vunpack.c.l.b16 %v1959
    %v2035 = vpack.c.b16 %v2004, %v2003
    %v2036 = vpack.c.b16 %v2006, %v2005
    %v2037 = vpack.c.b16 %v2008, %v2007
    %v2038 = vpack.c.b16 %v2010, %v2009
    %v2039 = vpack.c.b16 %v2012, %v2011
    %v2040 = vpack.c.b16 %v2014, %v2013
    %v2041 = vpack.c.b16 %v2016, %v2015
    %v2042 = vpack.c.b16 %v2018, %v2017
    %v2043 = vpack.c.b16 %v2020, %v2019
    %v2044 = vpack.c.b16 %v2022, %v2021
    %v2045 = vpack.c.b16 %v2024, %v2023
    %v2046 = vpack.c.b16 %v2026, %v2025
    %v2047 = vpack.c.b16 %v2028, %v2027
    %v2048 = vpack.c.b16 %v2030, %v2029
    %v2049 = vpack.c.b16 %v2032, %v2031
    %v2050 = vpack.c.b16 %v2034, %v2033
    %2067 = vmatprep.subr.bf16.mxu0 0
    %2068 = vmatpush1.bf16.msra.mxu0 %v2035
    %2069 = vmatprep.subr.bf16.mxu0 0
    %2070 = vmatpush1.bf16.msra.mxu0 %v2036
    %2071 = vmatprep.subr.bf16.mxu0 0
    %2072 = vmatpush1.bf16.msra.mxu0 %v2037
    %2073 = vmatprep.subr.bf16.mxu0 0
    %2074 = vmatpush1.bf16.msra.mxu0 %v2038
    %2075 = vmatprep.subr.bf16.mxu0 0
    %2076 = vmatpush1.bf16.msra.mxu0 %v2039
    %2077 = vmatprep.subr.bf16.mxu0 0
    %2078 = vmatpush1.bf16.msra.mxu0 %v2040
    %2079 = vmatprep.subr.bf16.mxu0 0
    %2080 = vmatpush1.bf16.msra.mxu0 %v2041
    %2081 = vmatprep.subr.bf16.mxu0 0
    %2082 = vmatpush1.bf16.msra.mxu0 %v2042
    %2083 = vmatprep.subr.bf16.mxu0 0
    %2084 = vmatpush1.bf16.msra.mxu0 %v2043
    %2085 = vmatprep.subr.bf16.mxu0 0
    %2086 = vmatpush1.bf16.msra.mxu0 %v2044
    %2087 = vmatprep.subr.bf16.mxu0 0
    %2088 = vmatpush1.bf16.msra.mxu0 %v2045
    %2089 = vmatprep.subr.bf16.mxu0 0
    %2090 = vmatpush1.bf16.msra.mxu0 %v2046
    %2091 = vmatprep.subr.bf16.mxu0 0
    %2092 = vmatpush1.bf16.msra.mxu0 %v2047
    %2093 = vmatprep.subr.bf16.mxu0 0
    %2094 = vmatpush1.bf16.msra.mxu0 %v2048
    %2095 = vmatprep.subr.bf16.mxu0 0
    %2096 = vmatpush1.bf16.msra.mxu0 %v2049
    %2097 = vmatprep.subr.bf16.mxu0 0
    %2098 = vmatpush1.bf16.msra.mxu0 %v2050
    %2099 = vmatprep.mubr.bf16.mxu0 %v1961
    %2100 = vmatmul.mubr.bf16.gmra.mrb[0].mxu0 %v1960
    %v2101 = vpop.f32.mrb[0].mxu0
    %v2102 = vadd.f32 %v1969, %v2101
    %v2103 = vpop.f32.mrb[0].mxu0
    %v2104 = vpop.f32.mrb[0].mxu0
    %v2105 = vadd.f32 %v1969, %v2104
    %v2106 = vpop.f32.mrb[0].mxu0
    %2107 = vmatprep.mubr.bf16.mxu0 %v1963
    %2108 = vmatmul.mubr.bf16.gmra.mrb[0].mxu0 %v1962
    %v2109 = vpop.f32.mrb[0].mxu0
    %v2110 = vadd.f32 %v1969, %v2109
    %v2111 = vpop.f32.mrb[0].mxu0
    %v2112 = vpop.f32.mrb[0].mxu0
    %v2113 = vadd.f32 %v1969, %v2112
    %v2114 = vpop.f32.mrb[0].mxu0
    %2115 = vdwg.mxu0
    %v2116 = vadd.f32 %v1753, %v2102
    %v2117 = vadd.f32 %v1754, %v2105
    %v2118 = vadd.f32 %v1755, %v2110
    %v2119 = vadd.f32 %v1756, %v2113
    %v2120 = vld [vmem:[%s14] sm:$0x1]
    %v2121 = vld [vmem:[%s15] sm:$0x1]
    %2122 = vadd.xlane.f32.xlu0 %v2116
    %v2123 = vpop.xlane.xlu0 %2122
    %2124 = vadd.xlane.f32.xlu0 %v2117
    %v2125 = vpop.xlane.xlu0 %2124
    %2126 = vadd.xlane.f32.xlu0 %v2118
    %v2127 = vpop.xlane.xlu0 %2126
    %2128 = vadd.xlane.f32.xlu0 %v2119
    %v2129 = vpop.xlane.xlu0 %2128
    %v2130 = vmul.f32 %v2123, %v1700
    %v2131 = vmul.f32 %v2125, %v1700
    %v2132 = vmul.f32 %v2127, %v1700
    %v2133 = vmul.f32 %v2129, %v1700
    %v2134 = vsub.f32 %v2116, %v2130
    %v2135 = vsub.f32 %v2117, %v2131
    %v2136 = vsub.f32 %v2118, %v2132
    %v2137 = vsub.f32 %v2119, %v2133
    %v2138 = vmul.f32 %v2134, %v2134
    %v2139 = vmul.f32 %v2135, %v2135
    %v2140 = vmul.f32 %v2136, %v2136
    %v2141 = vmul.f32 %v2137, %v2137
    %2142 = vadd.xlane.f32.xlu0 %v2138
    %v2143 = vpop.xlane.xlu0 %2142
    %2144 = vadd.xlane.f32.xlu0 %v2139
    %v2145 = vpop.xlane.xlu0 %2144
    %2146 = vadd.xlane.f32.xlu0 %v2140
    %v2147 = vpop.xlane.xlu0 %2146
    %2148 = vadd.xlane.f32.xlu0 %v2141
    %v2149 = vpop.xlane.xlu0 %2148
    %v2150 = vmul.f32 %v2143, %v1700
    %v2151 = vmul.f32 %v2145, %v1700
    %v2152 = vmul.f32 %v2147, %v1700
    %v2153 = vmul.f32 %v2149, %v1700
    %v2154 = vadd.f32 %v2150, 1e-05
    %v2155 = vadd.f32 %v2151, 1e-05
    %v2156 = vadd.f32 %v2152, 1e-05
    %v2157 = vadd.f32 %v2153, 1e-05
    %v2158 = vrsqrt.pop %v2154
    %v2159 = vrsqrt.pop %v2155
    %v2160 = vrsqrt.pop %v2156
    %v2161 = vrsqrt.pop %v2157
    %v2162 = vmul.f32 %v2134, %v2158
    %v2163 = vmul.f32 %v2135, %v2159
    %v2164 = vmul.f32 %v2136, %v2160
    %v2165 = vmul.f32 %v2137, %v2161
    %v2167 = vlaneseq
    %v2168 = vshrl.u32 %v2167, 7
    %v2169 = vsub.s32 0, %v2168
    %v2170 = vrot.slane %v2120, %v2169
    %v2172 = vmul.f32 %v2162, %v2170
    %v2173 = vmul.f32 %v2163, %v2170
    %v2174 = vmul.f32 %v2164, %v2170
    %v2175 = vmul.f32 %v2165, %v2170
    %v2177 = vlaneseq
    %v2178 = vshrl.u32 %v2177, 7
    %v2179 = vsub.s32 0, %v2178
    %v2180 = vrot.slane %v2121, %v2179
    %v2182 = vadd.f32 %v2172, %v2180
    %v2183 = vadd.f32 %v2173, %v2180
    %v2184 = vadd.f32 %v2174, %v2180
    %v2185 = vadd.f32 %v2175, %v2180
    %s2186 = scalar_lea.vmem [#allocation10], 192
    %v2187 = vld [vmem:[%s2186] sm:$0xff]
    %v2188 = vld [vmem:[%s2186 + $0x8] sm:$0xf]
    %v2189 = vld [vmem:[%s2186 + $0xc] sm:$0xff]
    %v2190 = vld [vmem:[%s2186 + $0x14] sm:$0xf]
    %v2191 = vld [vmem:[%s2186 + $0x18] sm:$0xff]
    %v2192 = vld [vmem:[%s2186 + $0x20] sm:$0xf]
    %v2193 = vld [vmem:[%s2186 + $0x24] sm:$0xff]
    %v2194 = vld [vmem:[%s2186 + $0x2c] sm:$0xf]
    %v2195 = vld [vmem:[%s2186 + $0x30] sm:$0xff]
    %v2196 = vld [vmem:[%s2186 + $0x38] sm:$0xf]
    %v2197 = vld [vmem:[%s2186 + $0x3c] sm:$0xff]
    %v2198 = vld [vmem:[%s2186 + $0x44] sm:$0xf]
    %v2199 = vld [vmem:[%s2186 + $0x48] sm:$0xff]
    %v2200 = vld [vmem:[%s2186 + $0x50] sm:$0xf]
    %v2201 = vld [vmem:[%s2186 + $0x54] sm:$0xff]
    %v2202 = vld [vmem:[%s2186 + $0x5c] sm:$0xf]
    %v2203 = vld [vmem:[%s2186 + $0x60] sm:$0xff]
    %v2204 = vld [vmem:[%s2186 + $0x68] sm:$0xf]
    %v2205 = vld [vmem:[%s2186 + $0x6c] sm:$0xff]
    %v2206 = vld [vmem:[%s2186 + $0x74] sm:$0xf]
    %v2207 = vld [vmem:[%s2186 + $0x78] sm:$0xff]
    %v2208 = vld [vmem:[%s2186 + $0x80] sm:$0xf]
    %v2209 = vld [vmem:[%s2186 + $0x84] sm:$0xff]
    %v2210 = vld [vmem:[%s2186 + $0x8c] sm:$0xf]
    %v2211 = vld [vmem:[%s2186 + $0x90] sm:$0xff]
    %v2212 = vld [vmem:[%s2186 + $0x98] sm:$0xf]
    %v2213 = vld [vmem:[%s2186 + $0x9c] sm:$0xff]
    %v2214 = vld [vmem:[%s2186 + $0xa4] sm:$0xf]
    %v2215 = vld [vmem:[%s2186 + $0xa8] sm:$0xff]
    %v2216 = vld [vmem:[%s2186 + $0xb0] sm:$0xf]
    %v2217 = vld [vmem:[%s2186 + $0xb4] sm:$0xff]
    %v2218 = vld [vmem:[%s2186 + $0xbc] sm:$0xf]
    %v2219 = vpack.c.bf16 %v2183, %v2182
    %v2220 = vpack.c.bf16 %v2185, %v2184
    %s2221 = scalar_lea.vmem %s5, 3
    %v2222 = vld [vmem:[%s2221] sm:$0x7]
    %v2224 = vlaneseq
    %v2225 = vshrl.u32 %v2224, 7
    %v2226 = vsub.s32 0, %v2225
    %v2227 = vrot.slane %v2222, %v2226
    %v2228 = vlaneseq
    %v2229 = vshrl.u32 %v2228, 7
    %v2230 = vsub.s32 1, %v2229
    %v2231 = vrot.slane %v2222, %v2230
    %v2232 = vlaneseq
    %v2233 = vshrl.u32 %v2232, 7
    %v2234 = vsub.s32 2, %v2233
    %v2235 = vrot.slane %v2222, %v2234
    %v2271 = vunpack.c.l.b16 %v2187
    %v2272 = vunpack.c.h.b16 %v2187
    %v2273 = vunpack.c.l.b16 %v2188
    %v2274 = vunpack.c.l.b16 %v2189
    %v2275 = vunpack.c.h.b16 %v2189
    %v2276 = vunpack.c.l.b16 %v2190
    %v2277 = vunpack.c.l.b16 %v2191
    %v2278 = vunpack.c.h.b16 %v2191
    %v2279 = vunpack.c.l.b16 %v2192
    %v2280 = vunpack.c.l.b16 %v2193
    %v2281 = vunpack.c.h.b16 %v2193
    %v2282 = vunpack.c.l.b16 %v2194
    %v2283 = vunpack.c.l.b16 %v2195
    %v2284 = vunpack.c.h.b16 %v2195
    %v2285 = vunpack.c.l.b16 %v2196
    %v2286 = vunpack.c.l.b16 %v2197
    %v2287 = vunpack.c.h.b16 %v2197
    %v2288 = vunpack.c.l.b16 %v2198
    %v2289 = vunpack.c.l.b16 %v2199
    %v2290 = vunpack.c.h.b16 %v2199
    %v2291 = vunpack.c.l.b16 %v2200
    %v2292 = vunpack.c.l.b16 %v2201
    %v2293 = vunpack.c.h.b16 %v2201
    %v2294 = vunpack.c.l.b16 %v2202
    %v2295 = vunpack.c.l.b16 %v2203
    %v2296 = vunpack.c.h.b16 %v2203
    %v2297 = vunpack.c.l.b16 %v2204
    %v2298 = vunpack.c.l.b16 %v2205
    %v2299 = vunpack.c.h.b16 %v2205
    %v2300 = vunpack.c.l.b16 %v2206
    %v2301 = vunpack.c.l.b16 %v2207
    %v2302 = vunpack.c.h.b16 %v2207
    %v2303 = vunpack.c.l.b16 %v2208
    %v2304 = vunpack.c.l.b16 %v2209
    %v2305 = vunpack.c.h.b16 %v2209
    %v2306 = vunpack.c.l.b16 %v2210
    %v2307 = vunpack.c.l.b16 %v2211
    %v2308 = vunpack.c.h.b16 %v2211
    %v2309 = vunpack.c.l.b16 %v2212
    %v2310 = vunpack.c.l.b16 %v2213
    %v2311 = vunpack.c.h.b16 %v2213
    %v2312 = vunpack.c.l.b16 %v2214
    %v2313 = vunpack.c.l.b16 %v2215
    %v2314 = vunpack.c.h.b16 %v2215
    %v2315 = vunpack.c.l.b16 %v2216
    %v2316 = vunpack.c.l.b16 %v2217
    %v2317 = vunpack.c.h.b16 %v2217
    %v2318 = vunpack.c.l.b16 %v2218
    %v2319 = vpack.c.b16 %v2274, %v2271
    %v2320 = vpack.c.b16 %v2275, %v2272
    %v2321 = vpack.c.b16 %v2276, %v2273
    %v2322 = vpack.c.b16 %v2280, %v2277
    %v2323 = vpack.c.b16 %v2281, %v2278
    %v2324 = vpack.c.b16 %v2282, %v2279
    %v2325 = vpack.c.b16 %v2286, %v2283
    %v2326 = vpack.c.b16 %v2287, %v2284
    %v2327 = vpack.c.b16 %v2288, %v2285
    %v2328 = vpack.c.b16 %v2292, %v2289
    %v2329 = vpack.c.b16 %v2293, %v2290
    %v2330 = vpack.c.b16 %v2294, %v2291
    %v2331 = vpack.c.b16 %v2298, %v2295
    %v2332 = vpack.c.b16 %v2299, %v2296
    %v2333 = vpack.c.b16 %v2300, %v2297
    %v2334 = vpack.c.b16 %v2304, %v2301
    %v2335 = vpack.c.b16 %v2305, %v2302
    %v2336 = vpack.c.b16 %v2306, %v2303
    %v2337 = vpack.c.b16 %v2310, %v2307
    %v2338 = vpack.c.b16 %v2311, %v2308
    %v2339 = vpack.c.b16 %v2312, %v2309
    %v2340 = vpack.c.b16 %v2316, %v2313
    %v2341 = vpack.c.b16 %v2317, %v2314
    %v2342 = vpack.c.b16 %v2318, %v2315
    %2367 = vmatprep.subr.bf16.mxu0 %v2320
    %2368 = vmatpush1.bf16.msra.mxu0 %v2319
    %2369 = vmatprep.subr.bf16.mxu0 %v2323
    %2370 = vmatpush1.bf16.msra.mxu0 %v2322
    %2371 = vmatprep.subr.bf16.mxu0 %v2326
    %2372 = vmatpush1.bf16.msra.mxu0 %v2325
    %2373 = vmatprep.subr.bf16.mxu0 %v2329
    %2374 = vmatpush1.bf16.msra.mxu0 %v2328
    %2375 = vmatprep.subr.bf16.mxu0 %v2332
    %2376 = vmatpush1.bf16.msra.mxu0 %v2331
    %2377 = vmatprep.subr.bf16.mxu0 %v2335
    %2378 = vmatpush1.bf16.msra.mxu0 %v2334
    %2379 = vmatprep.subr.bf16.mxu0 %v2338
    %2380 = vmatpush1.bf16.msra.mxu0 %v2337
    %2381 = vmatprep.subr.bf16.mxu0 %v2341
    %2382 = vmatpush1.bf16.msra.mxu0 %v2340
    %2383 = vmatprep.subr.bf16.mxu0 0
    %2384 = vmatpush1.bf16.msra.mxu0 0
    %2385 = vmatprep.subr.bf16.mxu0 0
    %2386 = vmatpush1.bf16.msra.mxu0 0
    %2387 = vmatprep.subr.bf16.mxu0 0
    %2388 = vmatpush1.bf16.msra.mxu0 0
    %2389 = vmatprep.subr.bf16.mxu0 0
    %2390 = vmatpush1.bf16.msra.mxu0 0
    %2391 = vmatprep.subr.bf16.mxu0 0
    %2392 = vmatpush1.bf16.msra.mxu0 0
    %2393 = vmatprep.subr.bf16.mxu0 0
    %2394 = vmatpush1.bf16.msra.mxu0 0
    %2395 = vmatprep.subr.bf16.mxu0 0
    %2396 = vmatpush1.bf16.msra.mxu0 0
    %2397 = vmatprep.subr.bf16.mxu0 0
    %2398 = vmatpush1.bf16.msra.mxu0 0
    %2399 = vmatprep.mubr.bf16.mxu0 0
    %2400 = vmatmul.mubr.bf16.gmra.mrb[0].mxu0 %v2219
    %v2401 = vpop.f32.mrb[0].mxu0
    %v2402 = vadd.f32 %v2227, %v2401
    %v2403 = vpop.f32.mrb[0].mxu0
    %v2404 = vadd.f32 %v2231, %v2403
    %v2405 = vpop.f32.mrb[0].mxu0
    %v2406 = vadd.f32 %v2227, %v2405
    %v2407 = vpop.f32.mrb[0].mxu0
    %v2408 = vadd.f32 %v2231, %v2407
    %2409 = vmatprep.mubr.bf16.mxu0 0
    %2410 = vmatmul.mubr.bf16.gmra.mrb[0].mxu0 %v2220
    %v2411 = vpop.f32.mrb[0].mxu0
    %v2412 = vadd.f32 %v2227, %v2411
    %v2413 = vpop.f32.mrb[0].mxu0
    %v2414 = vadd.f32 %v2231, %v2413
    %v2415 = vpop.f32.mrb[0].mxu0
    %v2416 = vadd.f32 %v2227, %v2415
    %v2417 = vpop.f32.mrb[0].mxu0
    %v2418 = vadd.f32 %v2231, %v2417
    %2419 = vdwg.mxu0
    %2420 = vmatprep.subr.bf16.mxu0 0
    %2421 = vmatpush1.bf16.msra.mxu0 %v2321
    %2422 = vmatprep.subr.bf16.mxu0 0
    %2423 = vmatpush1.bf16.msra.mxu0 %v2324
    %2424 = vmatprep.subr.bf16.mxu0 0
    %2425 = vmatpush1.bf16.msra.mxu0 %v2327
    %2426 = vmatprep.subr.bf16.mxu0 0
    %2427 = vmatpush1.bf16.msra.mxu0 %v2330
    %2428 = vmatprep.subr.bf16.mxu0 0
    %2429 = vmatpush1.bf16.msra.mxu0 %v2333
    %2430 = vmatprep.subr.bf16.mxu0 0
    %2431 = vmatpush1.bf16.msra.mxu0 %v2336
    %2432 = vmatprep.subr.bf16.mxu0 0
    %2433 = vmatpush1.bf16.msra.mxu0 %v2339
    %2434 = vmatprep.subr.bf16.mxu0 0
    %2435 = vmatpush1.bf16.msra.mxu0 %v2342
    %2436 = vmatprep.subr.bf16.mxu0 0
    %2437 = vmatpush1.bf16.msra.mxu0 0
    %2438 = vmatprep.subr.bf16.mxu0 0
    %2439 = vmatpush1.bf16.msra.mxu0 0
    %2440 = vmatprep.subr.bf16.mxu0 0
    %2441 = vmatpush1.bf16.msra.mxu0 0
    %2442 = vmatprep.subr.bf16.mxu0 0
    %2443 = vmatpush1.bf16.msra.mxu0 0
    %2444 = vmatprep.subr.bf16.mxu0 0
    %2445 = vmatpush1.bf16.msra.mxu0 0
    %2446 = vmatprep.subr.bf16.mxu0 0
    %2447 = vmatpush1.bf16.msra.mxu0 0
    %2448 = vmatprep.subr.bf16.mxu0 0
    %2449 = vmatpush1.bf16.msra.mxu0 0
    %2450 = vmatprep.subr.bf16.mxu0 0
    %2451 = vmatpush1.bf16.msra.mxu0 0
    %2452 = vmatprep.mubr.bf16.mxu0 0
    %2453 = vmatmul.mubr.bf16.gmra.mrb[0].mxu0 %v2219
    %v2454 = vpop.f32.mrb[0].mxu0
    %v2455 = vadd.f32 %v2235, %v2454
    %v2456 = vpop.f32.mrb[0].mxu0
    %v2457 = vpop.f32.mrb[0].mxu0
    %v2458 = vadd.f32 %v2235, %v2457
    %v2459 = vpop.f32.mrb[0].mxu0
    %2460 = vmatprep.mubr.bf16.mxu0 0
    %2461 = vmatmul.mubr.bf16.gmra.mrb[0].mxu0 %v2220
    %v2462 = vpop.f32.mrb[0].mxu0
    %v2463 = vadd.f32 %v2235, %v2462
    %v2464 = vpop.f32.mrb[0].mxu0
    %v2465 = vpop.f32.mrb[0].mxu0
    %v2466 = vadd.f32 %v2235, %v2465
    %v2467 = vpop.f32.mrb[0].mxu0
    %2468 = vdwg.mxu0
    %2473 = vrot.lane.b32.xlu0 %v2402, 96
    %v2474 = vpop.permute.xlu0 %2473
    %2475 = vrot.lane.b32.xlu0 %v2406, 96
    %v2476 = vpop.permute.xlu0 %2475
    %2477 = vrot.lane.b32.xlu0 %v2412, 96
    %v2478 = vpop.permute.xlu0 %2477
    %2479 = vrot.lane.b32.xlu0 %v2416, 96
    %v2480 = vpop.permute.xlu0 %2479
    %2485 = vrot.lane.b32.xlu0 %v2402, 64
    %v2486 = vpop.permute.xlu0 %2485
    %2487 = vrot.lane.b32.xlu0 %v2406, 64
    %v2488 = vpop.permute.xlu0 %2487
    %2489 = vrot.lane.b32.xlu0 %v2412, 64
    %v2490 = vpop.permute.xlu0 %2489
    %2491 = vrot.lane.b32.xlu0 %v2416, 64
    %v2492 = vpop.permute.xlu0 %2491
    %2497 = vrot.lane.b32.xlu0 %v2402, 32
    %v2498 = vpop.permute.xlu0 %2497
    %2499 = vrot.lane.b32.xlu0 %v2406, 32
    %v2500 = vpop.permute.xlu0 %2499
    %2501 = vrot.lane.b32.xlu0 %v2412, 32
    %v2502 = vpop.permute.xlu0 %2501
    %2503 = vrot.lane.b32.xlu0 %v2416, 32
    %v2504 = vpop.permute.xlu0 %2503
    %v2509 = vpack.c.bf16 %v2406, %v2402
    %v2510 = vpack.c.bf16 %v2416, %v2412
    %v2511 = vpack.c.bf16 %v2476, %v2474
    %v2512 = vpack.c.bf16 %v2480, %v2478
    %v2513 = vpack.c.bf16 %v2488, %v2486
    %v2514 = vpack.c.bf16 %v2492, %v2490
    %v2515 = vpack.c.bf16 %v2500, %v2498
    %v2516 = vpack.c.bf16 %v2504, %v2502
    %2521 = vrot.lane.b32.xlu0 %v2404, 96
    %v2522 = vpop.permute.xlu0 %2521
    %2523 = vrot.lane.b32.xlu0 %v2408, 96
    %v2524 = vpop.permute.xlu0 %2523
    %2525 = vrot.lane.b32.xlu0 %v2414, 96
    %v2526 = vpop.permute.xlu0 %2525
    %2527 = vrot.lane.b32.xlu0 %v2418, 96
    %v2528 = vpop.permute.xlu0 %2527
    %2533 = vrot.lane.b32.xlu0 %v2404, 64
    %v2534 = vpop.permute.xlu0 %2533
    %2535 = vrot.lane.b32.xlu0 %v2408, 64
    %v2536 = vpop.permute.xlu0 %2535
    %2537 = vrot.lane.b32.xlu0 %v2414, 64
    %v2538 = vpop.permute.xlu0 %2537
    %2539 = vrot.lane.b32.xlu0 %v2418, 64
    %v2540 = vpop.permute.xlu0 %2539
    %2545 = vrot.lane.b32.xlu0 %v2404, 32
    %v2546 = vpop.permute.xlu0 %2545
    %2547 = vrot.lane.b32.xlu0 %v2408, 32
    %v2548 = vpop.permute.xlu0 %2547
    %2549 = vrot.lane.b32.xlu0 %v2414, 32
    %v2550 = vpop.permute.xlu0 %2549
    %2551 = vrot.lane.b32.xlu0 %v2418, 32
    %v2552 = vpop.permute.xlu0 %2551
    %v2557 = vpack.c.bf16 %v2408, %v2404
    %v2558 = vpack.c.bf16 %v2418, %v2414
    %v2559 = vpack.c.bf16 %v2524, %v2522
    %v2560 = vpack.c.bf16 %v2528, %v2526
    %v2561 = vpack.c.bf16 %v2536, %v2534
    %v2562 = vpack.c.bf16 %v2540, %v2538
    %v2563 = vpack.c.bf16 %v2548, %v2546
    %v2564 = vpack.c.bf16 %v2552, %v2550
    %2569 = vrot.lane.b32.xlu0 %v2455, 96
    %v2570 = vpop.permute.xlu0 %2569
    %2571 = vrot.lane.b32.xlu0 %v2458, 96
    %v2572 = vpop.permute.xlu0 %2571
    %2573 = vrot.lane.b32.xlu0 %v2463, 96
    %v2574 = vpop.permute.xlu0 %2573
    %2575 = vrot.lane.b32.xlu0 %v2466, 96
    %v2576 = vpop.permute.xlu0 %2575
    %2581 = vrot.lane.b32.xlu0 %v2455, 64
    %v2582 = vpop.permute.xlu0 %2581
    %2583 = vrot.lane.b32.xlu0 %v2458, 64
    %v2584 = vpop.permute.xlu0 %2583
    %2585 = vrot.lane.b32.xlu0 %v2463, 64
    %v2586 = vpop.permute.xlu0 %2585
    %2587 = vrot.lane.b32.xlu0 %v2466, 64
    %v2588 = vpop.permute.xlu0 %2587
    %2593 = vrot.lane.b32.xlu0 %v2455, 32
    %v2594 = vpop.permute.xlu0 %2593
    %2595 = vrot.lane.b32.xlu0 %v2458, 32
    %v2596 = vpop.permute.xlu0 %2595
    %2597 = vrot.lane.b32.xlu0 %v2463, 32
    %v2598 = vpop.permute.xlu0 %2597
    %2599 = vrot.lane.b32.xlu0 %v2466, 32
    %v2600 = vpop.permute.xlu0 %2599
    %v2605 = vpack.c.bf16 %v2458, %v2455
    %v2606 = vpack.c.bf16 %v2466, %v2463
    %v2607 = vpack.c.bf16 %v2572, %v2570
    %v2608 = vpack.c.bf16 %v2576, %v2574
    %v2609 = vpack.c.bf16 %v2584, %v2582
    %v2610 = vpack.c.bf16 %v2588, %v2586
    %v2611 = vpack.c.bf16 %v2596, %v2594
    %v2612 = vpack.c.bf16 %v2600, %v2598
    %v2614 = vsel %vm722, %v2509, 0
    %v2617 = vsel %vm722, %v2510, 0
    %v2620 = vsel %vm722, %v2557, 0
    %v2623 = vsel %vm722, %v2558, 0
    %2625 = vmatprep.subr.bf16.mxu0 0
    %2626 = vmatpush1.bf16.xpose.msra.mxu0 %v2620
    %2627 = vmatprep.subr.bf16.mxu0 0
    %2628 = vmatpush1.bf16.xpose.msra.mxu0 %v2623
    %2629 = vmatprep.subr.bf16.mxu0 0
    %2630 = vmatpush1.bf16.xpose.msra.mxu0 0
    %2631 = vmatprep.subr.bf16.mxu0 0
    %2632 = vmatpush1.bf16.xpose.msra.mxu0 0
    %2633 = vmatprep.subr.bf16.mxu0 0
    %2634 = vmatpush1.bf16.xpose.msra.mxu0 0
    %2635 = vmatprep.subr.bf16.mxu0 0
    %2636 = vmatpush1.bf16.xpose.msra.mxu0 0
    %2637 = vmatprep.subr.bf16.mxu0 0
    %2638 = vmatpush1.bf16.xpose.msra.mxu0 0
    %2639 = vmatprep.subr.bf16.mxu0 0
    %2640 = vmatpush1.bf16.xpose.msra.mxu0 0
    %2641 = vmatprep.subr.bf16.mxu0 0
    %2642 = vmatpush1.bf16.xpose.msra.mxu0 0
    %2643 = vmatprep.subr.bf16.mxu0 0
    %2644 = vmatpush1.bf16.xpose.msra.mxu0 0
    %2645 = vmatprep.subr.bf16.mxu0 0
    %2646 = vmatpush1.bf16.xpose.msra.mxu0 0
    %2647 = vmatprep.subr.bf16.mxu0 0
    %2648 = vmatpush1.bf16.xpose.msra.mxu0 0
    %2649 = vmatprep.subr.bf16.mxu0 0
    %2650 = vmatpush1.bf16.xpose.msra.mxu0 0
    %2651 = vmatprep.subr.bf16.mxu0 0
    %2652 = vmatpush1.bf16.xpose.msra.mxu0 0
    %2653 = vmatprep.subr.bf16.mxu0 0
    %2654 = vmatpush1.bf16.xpose.msra.mxu0 0
    %2655 = vmatprep.subr.bf16.mxu0 0
    %2656 = vmatpush1.bf16.xpose.msra.mxu0 0
    %2657 = vmatprep.mubr.bf16.mxu0 0
    %2658 = vmatmul.mubr.bf16.gmra.mrb[0].mxu0 %v2614
    %v2659 = vpop.f32.mrb[0].mxu0
    %v2660 = vadd.f32 %v184, %v2659
    %v2661 = vpop.f32.mrb[0].mxu0
    %v2662 = vpop.f32.mrb[0].mxu0
    %v2663 = vadd.f32 %v185, %v2662
    %v2664 = vpop.f32.mrb[0].mxu0
    %2665 = vmatprep.mubr.bf16.mxu0 0
    %2666 = vmatmul.mubr.bf16.gmra.mrb[0].mxu0 %v2617
    %v2667 = vpop.f32.mrb[0].mxu0
    %v2668 = vadd.f32 %v186, %v2667
    %v2669 = vpop.f32.mrb[0].mxu0
    %v2670 = vpop.f32.mrb[0].mxu0
    %v2671 = vadd.f32 %v187, %v2670
    %v2672 = vpop.f32.mrb[0].mxu0
    %2673 = vdwg.mxu0
    %v2675 = vsel %vm722, %v2511, 0
    %v2678 = vsel %vm722, %v2512, 0
    %v2681 = vsel %vm722, %v2559, 0
    %v2684 = vsel %vm722, %v2560, 0
    %2686 = vmatprep.subr.bf16.mxu0 0
    %2687 = vmatpush1.bf16.xpose.msra.mxu0 %v2681
    %2688 = vmatprep.subr.bf16.mxu0 0
    %2689 = vmatpush1.bf16.xpose.msra.mxu0 %v2684
    %2690 = vmatprep.subr.bf16.mxu0 0
    %2691 = vmatpush1.bf16.xpose.msra.mxu0 0
    %2692 = vmatprep.subr.bf16.mxu0 0
    %2693 = vmatpush1.bf16.xpose.msra.mxu0 0
    %2694 = vmatprep.subr.bf16.mxu0 0
    %2695 = vmatpush1.bf16.xpose.msra.mxu0 0
    %2696 = vmatprep.subr.bf16.mxu0 0
    %2697 = vmatpush1.bf16.xpose.msra.mxu0 0
    %2698 = vmatprep.subr.bf16.mxu0 0
    %2699 = vmatpush1.bf16.xpose.msra.mxu0 0
    %2700 = vmatprep.subr.bf16.mxu0 0
    %2701 = vmatpush1.bf16.xpose.msra.mxu0 0
    %2702 = vmatprep.subr.bf16.mxu0 0
    %2703 = vmatpush1.bf16.xpose.msra.mxu0 0
    %2704 = vmatprep.subr.bf16.mxu0 0
    %2705 = vmatpush1.bf16.xpose.msra.mxu0 0
    %2706 = vmatprep.subr.bf16.mxu0 0
    %2707 = vmatpush1.bf16.xpose.msra.mxu0 0
    %2708 = vmatprep.subr.bf16.mxu0 0
    %2709 = vmatpush1.bf16.xpose.msra.mxu0 0
    %2710 = vmatprep.subr.bf16.mxu0 0
    %2711 = vmatpush1.bf16.xpose.msra.mxu0 0
    %2712 = vmatprep.subr.bf16.mxu0 0
    %2713 = vmatpush1.bf16.xpose.msra.mxu0 0
    %2714 = vmatprep.subr.bf16.mxu0 0
    %2715 = vmatpush1.bf16.xpose.msra.mxu0 0
    %2716 = vmatprep.subr.bf16.mxu0 0
    %2717 = vmatpush1.bf16.xpose.msra.mxu0 0
    %2718 = vmatprep.mubr.bf16.mxu0 0
    %2719 = vmatmul.mubr.bf16.gmra.mrb[0].mxu0 %v2675
    %v2720 = vpop.f32.mrb[0].mxu0
    %v2721 = vadd.f32 %v184, %v2720
    %v2722 = vpop.f32.mrb[0].mxu0
    %v2723 = vpop.f32.mrb[0].mxu0
    %v2724 = vadd.f32 %v185, %v2723
    %v2725 = vpop.f32.mrb[0].mxu0
    %2726 = vmatprep.mubr.bf16.mxu0 0
    %2727 = vmatmul.mubr.bf16.gmra.mrb[0].mxu0 %v2678
    %v2728 = vpop.f32.mrb[0].mxu0
    %v2729 = vadd.f32 %v186, %v2728
    %v2730 = vpop.f32.mrb[0].mxu0
    %v2731 = vpop.f32.mrb[0].mxu0
    %v2732 = vadd.f32 %v187, %v2731
    %v2733 = vpop.f32.mrb[0].mxu0
    %2734 = vdwg.mxu0
    %v2736 = vsel %vm722, %v2513, 0
    %v2739 = vsel %vm722, %v2514, 0
    %v2742 = vsel %vm722, %v2561, 0
    %v2745 = vsel %vm722, %v2562, 0
    %2747 = vmatprep.subr.bf16.mxu0 0
    %2748 = vmatpush1.bf16.xpose.msra.mxu0 %v2742
    %2749 = vmatprep.subr.bf16.mxu0 0
    %2750 = vmatpush1.bf16.xpose.msra.mxu0 %v2745
    %2751 = vmatprep.subr.bf16.mxu0 0
    %2752 = vmatpush1.bf16.xpose.msra.mxu0 0
    %2753 = vmatprep.subr.bf16.mxu0 0
    %2754 = vmatpush1.bf16.xpose.msra.mxu0 0
    %2755 = vmatprep.subr.bf16.mxu0 0
    %2756 = vmatpush1.bf16.xpose.msra.mxu0 0
    %2757 = vmatprep.subr.bf16.mxu0 0
    %2758 = vmatpush1.bf16.xpose.msra.mxu0 0
    %2759 = vmatprep.subr.bf16.mxu0 0
    %2760 = vmatpush1.bf16.xpose.msra.mxu0 0
    %2761 = vmatprep.subr.bf16.mxu0 0
    %2762 = vmatpush1.bf16.xpose.msra.mxu0 0
    %2763 = vmatprep.subr.bf16.mxu0 0
    %2764 = vmatpush1.bf16.xpose.msra.mxu0 0
    %2765 = vmatprep.subr.bf16.mxu0 0
    %2766 = vmatpush1.bf16.xpose.msra.mxu0 0
    %2767 = vmatprep.subr.bf16.mxu0 0
    %2768 = vmatpush1.bf16.xpose.msra.mxu0 0
    %2769 = vmatprep.subr.bf16.mxu0 0
    %2770 = vmatpush1.bf16.xpose.msra.mxu0 0
    %2771 = vmatprep.subr.bf16.mxu0 0
    %2772 = vmatpush1.bf16.xpose.msra.mxu0 0
    %2773 = vmatprep.subr.bf16.mxu0 0
    %2774 = vmatpush1.bf16.xpose.msra.mxu0 0
    %2775 = vmatprep.subr.bf16.mxu0 0
    %2776 = vmatpush1.bf16.xpose.msra.mxu0 0
    %2777 = vmatprep.subr.bf16.mxu0 0
    %2778 = vmatpush1.bf16.xpose.msra.mxu0 0
    %2779 = vmatprep.mubr.bf16.mxu0 0
    %2780 = vmatmul.mubr.bf16.gmra.mrb[0].mxu0 %v2736
    %v2781 = vpop.f32.mrb[0].mxu0
    %v2782 = vadd.f32 %v184, %v2781
    %v2783 = vpop.f32.mrb[0].mxu0
    %v2784 = vpop.f32.mrb[0].mxu0
    %v2785 = vadd.f32 %v185, %v2784
    %v2786 = vpop.f32.mrb[0].mxu0
    %2787 = vmatprep.mubr.bf16.mxu0 0
    %2788 = vmatmul.mubr.bf16.gmra.mrb[0].mxu0 %v2739
    %v2789 = vpop.f32.mrb[0].mxu0
    %v2790 = vadd.f32 %v186, %v2789
    %v2791 = vpop.f32.mrb[0].mxu0
    %v2792 = vpop.f32.mrb[0].mxu0
    %v2793 = vadd.f32 %v187, %v2792
    %v2794 = vpop.f32.mrb[0].mxu0
    %2795 = vdwg.mxu0
    %v2797 = vsel %vm722, %v2515, 0
    %v2800 = vsel %vm722, %v2516, 0
    %v2803 = vsel %vm722, %v2563, 0
    %v2806 = vsel %vm722, %v2564, 0
    %2808 = vmatprep.subr.bf16.mxu0 0
    %2809 = vmatpush1.bf16.xpose.msra.mxu0 %v2803
    %2810 = vmatprep.subr.bf16.mxu0 0
    %2811 = vmatpush1.bf16.xpose.msra.mxu0 %v2806
    %2812 = vmatprep.subr.bf16.mxu0 0
    %2813 = vmatpush1.bf16.xpose.msra.mxu0 0
    %2814 = vmatprep.subr.bf16.mxu0 0
    %2815 = vmatpush1.bf16.xpose.msra.mxu0 0
    %2816 = vmatprep.subr.bf16.mxu0 0
    %2817 = vmatpush1.bf16.xpose.msra.mxu0 0
    %2818 = vmatprep.subr.bf16.mxu0 0
    %2819 = vmatpush1.bf16.xpose.msra.mxu0 0
    %2820 = vmatprep.subr.bf16.mxu0 0
    %2821 = vmatpush1.bf16.xpose.msra.mxu0 0
    %2822 = vmatprep.subr.bf16.mxu0 0
    %2823 = vmatpush1.bf16.xpose.msra.mxu0 0
    %2824 = vmatprep.subr.bf16.mxu0 0
    %2825 = vmatpush1.bf16.xpose.msra.mxu0 0
    %2826 = vmatprep.subr.bf16.mxu0 0
    %2827 = vmatpush1.bf16.xpose.msra.mxu0 0
    %2828 = vmatprep.subr.bf16.mxu0 0
    %2829 = vmatpush1.bf16.xpose.msra.mxu0 0
    %2830 = vmatprep.subr.bf16.mxu0 0
    %2831 = vmatpush1.bf16.xpose.msra.mxu0 0
    %2832 = vmatprep.subr.bf16.mxu0 0
    %2833 = vmatpush1.bf16.xpose.msra.mxu0 0
    %2834 = vmatprep.subr.bf16.mxu0 0
    %2835 = vmatpush1.bf16.xpose.msra.mxu0 0
    %2836 = vmatprep.subr.bf16.mxu0 0
    %2837 = vmatpush1.bf16.xpose.msra.mxu0 0
    %2838 = vmatprep.subr.bf16.mxu0 0
    %2839 = vmatpush1.bf16.xpose.msra.mxu0 0
    %2840 = vmatprep.mubr.bf16.mxu0 0
    %2841 = vmatmul.mubr.bf16.gmra.mrb[0].mxu0 %v2797
    %v2842 = vpop.f32.mrb[0].mxu0
    %v2843 = vadd.f32 %v184, %v2842
    %v2844 = vpop.f32.mrb[0].mxu0
    %v2845 = vpop.f32.mrb[0].mxu0
    %v2846 = vadd.f32 %v185, %v2845
    %v2847 = vpop.f32.mrb[0].mxu0
    %2848 = vmatprep.mubr.bf16.mxu0 0
    %2849 = vmatmul.mubr.bf16.gmra.mrb[0].mxu0 %v2800
    %v2850 = vpop.f32.mrb[0].mxu0
    %v2851 = vadd.f32 %v186, %v2850
    %v2852 = vpop.f32.mrb[0].mxu0
    %v2853 = vpop.f32.mrb[0].mxu0
    %v2854 = vadd.f32 %v187, %v2853
    %v2855 = vpop.f32.mrb[0].mxu0
    %2856 = vdwg.mxu0
    %v2857 = vsel %vm722, %v2660, -inf
    %2858 = vmax.xlane.f32.xlu0 %v2857
    %v2859 = vpop.xlane.xlu0 %2858
    %v2860 = vsel %vm722, %v2663, -inf
    %2861 = vmax.xlane.f32.xlu0 %v2860
    %v2862 = vpop.xlane.xlu0 %2861
    %v2863 = vsel %vm722, %v2668, -inf
    %2864 = vmax.xlane.f32.xlu0 %v2863
    %v2865 = vpop.xlane.xlu0 %2864
    %v2866 = vsel %vm722, %v2671, -inf
    %2867 = vmax.xlane.f32.xlu0 %v2866
    %v2868 = vpop.xlane.xlu0 %2867
    %v2869 = vsel %vm722, %v2721, -inf
    %2870 = vmax.xlane.f32.xlu0 %v2869
    %v2871 = vpop.xlane.xlu0 %2870
    %v2872 = vsel %vm722, %v2724, -inf
    %2873 = vmax.xlane.f32.xlu0 %v2872
    %v2874 = vpop.xlane.xlu0 %2873
    %v2875 = vsel %vm722, %v2729, -inf
    %2876 = vmax.xlane.f32.xlu0 %v2875
    %v2877 = vpop.xlane.xlu0 %2876
    %v2878 = vsel %vm722, %v2732, -inf
    %2879 = vmax.xlane.f32.xlu0 %v2878
    %v2880 = vpop.xlane.xlu0 %2879
    %v2881 = vsel %vm722, %v2782, -inf
    %2882 = vmax.xlane.f32.xlu0 %v2881
    %v2883 = vpop.xlane.xlu0 %2882
    %v2884 = vsel %vm722, %v2785, -inf
    %2885 = vmax.xlane.f32.xlu0 %v2884
    %v2886 = vpop.xlane.xlu0 %2885
    %v2887 = vsel %vm722, %v2790, -inf
    %2888 = vmax.xlane.f32.xlu0 %v2887
    %v2889 = vpop.xlane.xlu0 %2888
    %v2890 = vsel %vm722, %v2793, -inf
    %2891 = vmax.xlane.f32.xlu0 %v2890
    %v2892 = vpop.xlane.xlu0 %2891
    %v2893 = vsel %vm722, %v2843, -inf
    %2894 = vmax.xlane.f32.xlu0 %v2893
    %v2895 = vpop.xlane.xlu0 %2894
    %v2896 = vsel %vm722, %v2846, -inf
    %2897 = vmax.xlane.f32.xlu0 %v2896
    %v2898 = vpop.xlane.xlu0 %2897
    %v2899 = vsel %vm722, %v2851, -inf
    %2900 = vmax.xlane.f32.xlu0 %v2899
    %v2901 = vpop.xlane.xlu0 %2900
    %v2902 = vsel %vm722, %v2854, -inf
    %2903 = vmax.xlane.f32.xlu0 %v2902
    %v2904 = vpop.xlane.xlu0 %2903
    %v2905 = vsub.f32 %v2660, %v2859
    %v2906 = vsub.f32 %v2663, %v2862
    %v2907 = vsub.f32 %v2668, %v2865
    %v2908 = vsub.f32 %v2671, %v2868
    %v2909 = vsub.f32 %v2721, %v2871
    %v2910 = vsub.f32 %v2724, %v2874
    %v2911 = vsub.f32 %v2729, %v2877
    %v2912 = vsub.f32 %v2732, %v2880
    %v2913 = vsub.f32 %v2782, %v2883
    %v2914 = vsub.f32 %v2785, %v2886
    %v2915 = vsub.f32 %v2790, %v2889
    %v2916 = vsub.f32 %v2793, %v2892
    %v2917 = vsub.f32 %v2843, %v2895
    %v2918 = vsub.f32 %v2846, %v2898
    %v2919 = vsub.f32 %v2851, %v2901
    %v2920 = vsub.f32 %v2854, %v2904
    %v2921 = vmul.f32 %v2905, 1.442695
    %v2922 = vpow.pop %v2921
    %v2923 = vmul.f32 %v2906, 1.442695
    %v2924 = vpow.pop %v2923
    %v2925 = vmul.f32 %v2907, 1.442695
    %v2926 = vpow.pop %v2925
    %v2927 = vmul.f32 %v2908, 1.442695
    %v2928 = vpow.pop %v2927
    %v2929 = vmul.f32 %v2909, 1.442695
    %v2930 = vpow.pop %v2929
    %v2931 = vmul.f32 %v2910, 1.442695
    %v2932 = vpow.pop %v2931
    %v2933 = vmul.f32 %v2911, 1.442695
    %v2934 = vpow.pop %v2933
    %v2935 = vmul.f32 %v2912, 1.442695
    %v2936 = vpow.pop %v2935
    %v2937 = vmul.f32 %v2913, 1.442695
    %v2938 = vpow.pop %v2937
    %v2939 = vmul.f32 %v2914, 1.442695
    %v2940 = vpow.pop %v2939
    %v2941 = vmul.f32 %v2915, 1.442695
    %v2942 = vpow.pop %v2941
    %v2943 = vmul.f32 %v2916, 1.442695
    %v2944 = vpow.pop %v2943
    %v2945 = vmul.f32 %v2917, 1.442695
    %v2946 = vpow.pop %v2945
    %v2947 = vmul.f32 %v2918, 1.442695
    %v2948 = vpow.pop %v2947
    %v2949 = vmul.f32 %v2919, 1.442695
    %v2950 = vpow.pop %v2949
    %v2951 = vmul.f32 %v2920, 1.442695
    %v2952 = vpow.pop %v2951
    %v2953 = vsel %vm722, %v2922, 0.0
    %2954 = vadd.xlane.f32.xlu0 %v2953
    %v2955 = vpop.xlane.xlu0 %2954
    %v2956 = vsel %vm722, %v2924, 0.0
    %2957 = vadd.xlane.f32.xlu0 %v2956
    %v2958 = vpop.xlane.xlu0 %2957
    %v2959 = vsel %vm722, %v2926, 0.0
    %2960 = vadd.xlane.f32.xlu0 %v2959
    %v2961 = vpop.xlane.xlu0 %2960
    %v2962 = vsel %vm722, %v2928, 0.0
    %2963 = vadd.xlane.f32.xlu0 %v2962
    %v2964 = vpop.xlane.xlu0 %2963
    %v2965 = vsel %vm722, %v2930, 0.0
    %2966 = vadd.xlane.f32.xlu0 %v2965
    %v2967 = vpop.xlane.xlu0 %2966
    %v2968 = vsel %vm722, %v2932, 0.0
    %2969 = vadd.xlane.f32.xlu0 %v2968
    %v2970 = vpop.xlane.xlu0 %2969
    %v2971 = vsel %vm722, %v2934, 0.0
    %2972 = vadd.xlane.f32.xlu0 %v2971
    %v2973 = vpop.xlane.xlu0 %2972
    %v2974 = vsel %vm722, %v2936, 0.0
    %2975 = vadd.xlane.f32.xlu0 %v2974
    %v2976 = vpop.xlane.xlu0 %2975
    %v2977 = vsel %vm722, %v2938, 0.0
    %2978 = vadd.xlane.f32.xlu0 %v2977
    %v2979 = vpop.xlane.xlu0 %2978
    %v2980 = vsel %vm722, %v2940, 0.0
    %2981 = vadd.xlane.f32.xlu0 %v2980
    %v2982 = vpop.xlane.xlu0 %2981
    %v2983 = vsel %vm722, %v2942, 0.0
    %2984 = vadd.xlane.f32.xlu0 %v2983
    %v2985 = vpop.xlane.xlu0 %2984
    %v2986 = vsel %vm722, %v2944, 0.0
    %2987 = vadd.xlane.f32.xlu0 %v2986
    %v2988 = vpop.xlane.xlu0 %2987
    %v2989 = vsel %vm722, %v2946, 0.0
    %2990 = vadd.xlane.f32.xlu0 %v2989
    %v2991 = vpop.xlane.xlu0 %2990
    %v2992 = vsel %vm722, %v2948, 0.0
    %2993 = vadd.xlane.f32.xlu0 %v2992
    %v2994 = vpop.xlane.xlu0 %2993
    %v2995 = vsel %vm722, %v2950, 0.0
    %2996 = vadd.xlane.f32.xlu0 %v2995
    %v2997 = vpop.xlane.xlu0 %2996
    %v2998 = vsel %vm722, %v2952, 0.0
    %2999 = vadd.xlane.f32.xlu0 %v2998
    %v3000 = vpop.xlane.xlu0 %2999
    %v3001 = vrcp.pop %v2955
    %v3002 = vmul.f32 %v2922, %v3001
    %v3003 = vrcp.pop %v2958
    %v3004 = vmul.f32 %v2924, %v3003
    %v3005 = vrcp.pop %v2961
    %v3006 = vmul.f32 %v2926, %v3005
    %v3007 = vrcp.pop %v2964
    %v3008 = vmul.f32 %v2928, %v3007
    %v3009 = vrcp.pop %v2967
    %v3010 = vmul.f32 %v2930, %v3009
    %v3011 = vrcp.pop %v2970
    %v3012 = vmul.f32 %v2932, %v3011
    %v3013 = vrcp.pop %v2973
    %v3014 = vmul.f32 %v2934, %v3013
    %v3015 = vrcp.pop %v2976
    %v3016 = vmul.f32 %v2936, %v3015
    %v3017 = vrcp.pop %v2979
    %v3018 = vmul.f32 %v2938, %v3017
    %v3019 = vrcp.pop %v2982
    %v3020 = vmul.f32 %v2940, %v3019
    %v3021 = vrcp.pop %v2985
    %v3022 = vmul.f32 %v2942, %v3021
    %v3023 = vrcp.pop %v2988
    %v3024 = vmul.f32 %v2944, %v3023
    %v3025 = vrcp.pop %v2991
    %v3026 = vmul.f32 %v2946, %v3025
    %v3027 = vrcp.pop %v2994
    %v3028 = vmul.f32 %v2948, %v3027
    %v3029 = vrcp.pop %v2997
    %v3030 = vmul.f32 %v2950, %v3029
    %v3031 = vrcp.pop %v3000
    %v3032 = vmul.f32 %v2952, %v3031
    %v3033 = vpack.c.bf16 %v3004, %v3002
    %v3034 = vpack.c.bf16 %v3008, %v3006
    %v3035 = vpack.c.bf16 %v3012, %v3010
    %v3036 = vpack.c.bf16 %v3016, %v3014
    %v3037 = vpack.c.bf16 %v3020, %v3018
    %v3038 = vpack.c.bf16 %v3024, %v3022
    %v3039 = vpack.c.bf16 %v3028, %v3026
    %v3040 = vpack.c.bf16 %v3032, %v3030
    %v3042 = vsel %vm722, %v3033, 0
    %v3045 = vsel %vm722, %v3034, 0
    %3047 = vmatprep.subr.bf16.mxu0 0
    %3048 = vmatpush1.bf16.msra.mxu0 %v2605
    %3049 = vmatprep.subr.bf16.mxu0 0
    %3050 = vmatpush1.bf16.msra.mxu0 %v2606
    %3051 = vmatprep.subr.bf16.mxu0 0
    %3052 = vmatpush1.bf16.msra.mxu0 0
    %3053 = vmatprep.subr.bf16.mxu0 0
    %3054 = vmatpush1.bf16.msra.mxu0 0
    %3055 = vmatprep.subr.bf16.mxu0 0
    %3056 = vmatpush1.bf16.msra.mxu0 0
    %3057 = vmatprep.subr.bf16.mxu0 0
    %3058 = vmatpush1.bf16.msra.mxu0 0
    %3059 = vmatprep.subr.bf16.mxu0 0
    %3060 = vmatpush1.bf16.msra.mxu0 0
    %3061 = vmatprep.subr.bf16.mxu0 0
    %3062 = vmatpush1.bf16.msra.mxu0 0
    %3063 = vmatprep.subr.bf16.mxu0 0
    %3064 = vmatpush1.bf16.msra.mxu0 0
    %3065 = vmatprep.subr.bf16.mxu0 0
    %3066 = vmatpush1.bf16.msra.mxu0 0
    %3067 = vmatprep.subr.bf16.mxu0 0
    %3068 = vmatpush1.bf16.msra.mxu0 0
    %3069 = vmatprep.subr.bf16.mxu0 0
    %3070 = vmatpush1.bf16.msra.mxu0 0
    %3071 = vmatprep.subr.bf16.mxu0 0
    %3072 = vmatpush1.bf16.msra.mxu0 0
    %3073 = vmatprep.subr.bf16.mxu0 0
    %3074 = vmatpush1.bf16.msra.mxu0 0
    %3075 = vmatprep.subr.bf16.mxu0 0
    %3076 = vmatpush1.bf16.msra.mxu0 0
    %3077 = vmatprep.subr.bf16.mxu0 0
    %3078 = vmatpush1.bf16.msra.mxu0 0
    %3079 = vmatprep.mubr.bf16.mxu0 0
    %3080 = vmatmul.mubr.bf16.gmra.mrb[0].mxu0 %v3042
    %v3081 = vpop.f32.mrb[0].mxu0
    %v3082 = vadd.f32 0.0, %v3081
    %v3083 = vpop.f32.mrb[0].mxu0
    %v3084 = vpop.f32.mrb[0].mxu0
    %v3085 = vadd.f32 0.0, %v3084
    %v3086 = vpop.f32.mrb[0].mxu0
    %3087 = vmatprep.mubr.bf16.mxu0 0
    %3088 = vmatmul.mubr.bf16.gmra.mrb[0].mxu0 %v3045
    %v3089 = vpop.f32.mrb[0].mxu0
    %v3090 = vadd.f32 0.0, %v3089
    %v3091 = vpop.f32.mrb[0].mxu0
    %v3092 = vpop.f32.mrb[0].mxu0
    %v3093 = vadd.f32 0.0, %v3092
    %v3094 = vpop.f32.mrb[0].mxu0
    %3095 = vdwg.mxu0
    %v3097 = vsel %vm722, %v3035, 0
    %v3100 = vsel %vm722, %v3036, 0
    %3102 = vmatprep.subr.bf16.mxu0 0
    %3103 = vmatpush1.bf16.msra.mxu0 %v2607
    %3104 = vmatprep.subr.bf16.mxu0 0
    %3105 = vmatpush1.bf16.msra.mxu0 %v2608
    %3106 = vmatprep.subr.bf16.mxu0 0
    %3107 = vmatpush1.bf16.msra.mxu0 0
    %3108 = vmatprep.subr.bf16.mxu0 0
    %3109 = vmatpush1.bf16.msra.mxu0 0
    %3110 = vmatprep.subr.bf16.mxu0 0
    %3111 = vmatpush1.bf16.msra.mxu0 0
    %3112 = vmatprep.subr.bf16.mxu0 0
    %3113 = vmatpush1.bf16.msra.mxu0 0
    %3114 = vmatprep.subr.bf16.mxu0 0
    %3115 = vmatpush1.bf16.msra.mxu0 0
    %3116 = vmatprep.subr.bf16.mxu0 0
    %3117 = vmatpush1.bf16.msra.mxu0 0
    %3118 = vmatprep.subr.bf16.mxu0 0
    %3119 = vmatpush1.bf16.msra.mxu0 0
    %3120 = vmatprep.subr.bf16.mxu0 0
    %3121 = vmatpush1.bf16.msra.mxu0 0
    %3122 = vmatprep.subr.bf16.mxu0 0
    %3123 = vmatpush1.bf16.msra.mxu0 0
    %3124 = vmatprep.subr.bf16.mxu0 0
    %3125 = vmatpush1.bf16.msra.mxu0 0
    %3126 = vmatprep.subr.bf16.mxu0 0
    %3127 = vmatpush1.bf16.msra.mxu0 0
    %3128 = vmatprep.subr.bf16.mxu0 0
    %3129 = vmatpush1.bf16.msra.mxu0 0
    %3130 = vmatprep.subr.bf16.mxu0 0
    %3131 = vmatpush1.bf16.msra.mxu0 0
    %3132 = vmatprep.subr.bf16.mxu0 0
    %3133 = vmatpush1.bf16.msra.mxu0 0
    %3134 = vmatprep.mubr.bf16.mxu0 0
    %3135 = vmatmul.mubr.bf16.gmra.mrb[0].mxu0 %v3097
    %v3136 = vpop.f32.mrb[0].mxu0
    %v3137 = vadd.f32 0.0, %v3136
    %v3138 = vpop.f32.mrb[0].mxu0
    %v3139 = vpop.f32.mrb[0].mxu0
    %v3140 = vadd.f32 0.0, %v3139
    %v3141 = vpop.f32.mrb[0].mxu0
    %3142 = vmatprep.mubr.bf16.mxu0 0
    %3143 = vmatmul.mubr.bf16.gmra.mrb[0].mxu0 %v3100
    %v3144 = vpop.f32.mrb[0].mxu0
    %v3145 = vadd.f32 0.0, %v3144
    %v3146 = vpop.f32.mrb[0].mxu0
    %v3147 = vpop.f32.mrb[0].mxu0
    %v3148 = vadd.f32 0.0, %v3147
    %v3149 = vpop.f32.mrb[0].mxu0
    %3150 = vdwg.mxu0
    %v3152 = vsel %vm722, %v3037, 0
    %v3155 = vsel %vm722, %v3038, 0
    %3157 = vmatprep.subr.bf16.mxu0 0
    %3158 = vmatpush1.bf16.msra.mxu0 %v2609
    %3159 = vmatprep.subr.bf16.mxu0 0
    %3160 = vmatpush1.bf16.msra.mxu0 %v2610
    %3161 = vmatprep.subr.bf16.mxu0 0
    %3162 = vmatpush1.bf16.msra.mxu0 0
    %3163 = vmatprep.subr.bf16.mxu0 0
    %3164 = vmatpush1.bf16.msra.mxu0 0
    %3165 = vmatprep.subr.bf16.mxu0 0
    %3166 = vmatpush1.bf16.msra.mxu0 0
    %3167 = vmatprep.subr.bf16.mxu0 0
    %3168 = vmatpush1.bf16.msra.mxu0 0
    %3169 = vmatprep.subr.bf16.mxu0 0
    %3170 = vmatpush1.bf16.msra.mxu0 0
    %3171 = vmatprep.subr.bf16.mxu0 0
    %3172 = vmatpush1.bf16.msra.mxu0 0
    %3173 = vmatprep.subr.bf16.mxu0 0
    %3174 = vmatpush1.bf16.msra.mxu0 0
    %3175 = vmatprep.subr.bf16.mxu0 0
    %3176 = vmatpush1.bf16.msra.mxu0 0
    %3177 = vmatprep.subr.bf16.mxu0 0
    %3178 = vmatpush1.bf16.msra.mxu0 0
    %3179 = vmatprep.subr.bf16.mxu0 0
    %3180 = vmatpush1.bf16.msra.mxu0 0
    %3181 = vmatprep.subr.bf16.mxu0 0
    %3182 = vmatpush1.bf16.msra.mxu0 0
    %3183 = vmatprep.subr.bf16.mxu0 0
    %3184 = vmatpush1.bf16.msra.mxu0 0
    %3185 = vmatprep.subr.bf16.mxu0 0
    %3186 = vmatpush1.bf16.msra.mxu0 0
    %3187 = vmatprep.subr.bf16.mxu0 0
    %3188 = vmatpush1.bf16.msra.mxu0 0
    %3189 = vmatprep.mubr.bf16.mxu0 0
    %3190 = vmatmul.mubr.bf16.gmra.mrb[0].mxu0 %v3152
    %v3191 = vpop.f32.mrb[0].mxu0
    %v3192 = vadd.f32 0.0, %v3191
    %v3193 = vpop.f32.mrb[0].mxu0
    %v3194 = vpop.f32.mrb[0].mxu0
    %v3195 = vadd.f32 0.0, %v3194
    %v3196 = vpop.f32.mrb[0].mxu0
    %3197 = vmatprep.mubr.bf16.mxu0 0
    %3198 = vmatmul.mubr.bf16.gmra.mrb[0].mxu0 %v3155
    %v3199 = vpop.f32.mrb[0].mxu0
    %v3200 = vadd.f32 0.0, %v3199
    %v3201 = vpop.f32.mrb[0].mxu0
    %v3202 = vpop.f32.mrb[0].mxu0
    %v3203 = vadd.f32 0.0, %v3202
    %v3204 = vpop.f32.mrb[0].mxu0
    %3205 = vdwg.mxu0
    %v3207 = vsel %vm722, %v3039, 0
    %v3210 = vsel %vm722, %v3040, 0
    %3212 = vmatprep.subr.bf16.mxu0 0
    %3213 = vmatpush1.bf16.msra.mxu0 %v2611
    %3214 = vmatprep.subr.bf16.mxu0 0
    %3215 = vmatpush1.bf16.msra.mxu0 %v2612
    %3216 = vmatprep.subr.bf16.mxu0 0
    %3217 = vmatpush1.bf16.msra.mxu0 0
    %3218 = vmatprep.subr.bf16.mxu0 0
    %3219 = vmatpush1.bf16.msra.mxu0 0
    %3220 = vmatprep.subr.bf16.mxu0 0
    %3221 = vmatpush1.bf16.msra.mxu0 0
    %3222 = vmatprep.subr.bf16.mxu0 0
    %3223 = vmatpush1.bf16.msra.mxu0 0
    %3224 = vmatprep.subr.bf16.mxu0 0
    %3225 = vmatpush1.bf16.msra.mxu0 0
    %3226 = vmatprep.subr.bf16.mxu0 0
    %3227 = vmatpush1.bf16.msra.mxu0 0
    %3228 = vmatprep.subr.bf16.mxu0 0
    %3229 = vmatpush1.bf16.msra.mxu0 0
    %3230 = vmatprep.subr.bf16.mxu0 0
    %3231 = vmatpush1.bf16.msra.mxu0 0
    %3232 = vmatprep.subr.bf16.mxu0 0
    %3233 = vmatpush1.bf16.msra.mxu0 0
    %3234 = vmatprep.subr.bf16.mxu0 0
    %3235 = vmatpush1.bf16.msra.mxu0 0
    %3236 = vmatprep.subr.bf16.mxu0 0
    %3237 = vmatpush1.bf16.msra.mxu0 0
    %3238 = vmatprep.subr.bf16.mxu0 0
    %3239 = vmatpush1.bf16.msra.mxu0 0
    %3240 = vmatprep.subr.bf16.mxu0 0
    %3241 = vmatpush1.bf16.msra.mxu0 0
    %3242 = vmatprep.subr.bf16.mxu0 0
    %3243 = vmatpush1.bf16.msra.mxu0 0
    %3244 = vmatprep.mubr.bf16.mxu0 0
    %3245 = vmatmul.mubr.bf16.gmra.mrb[0].mxu0 %v3207
    %v3246 = vpop.f32.mrb[0].mxu0
    %v3247 = vadd.f32 0.0, %v3246
    %v3248 = vpop.f32.mrb[0].mxu0
    %v3249 = vpop.f32.mrb[0].mxu0
    %v3250 = vadd.f32 0.0, %v3249
    %v3251 = vpop.f32.mrb[0].mxu0
    %3252 = vmatprep.mubr.bf16.mxu0 0
    %3253 = vmatmul.mubr.bf16.gmra.mrb[0].mxu0 %v3210
    %v3254 = vpop.f32.mrb[0].mxu0
    %v3255 = vadd.f32 0.0, %v3254
    %v3256 = vpop.f32.mrb[0].mxu0
    %v3257 = vpop.f32.mrb[0].mxu0
    %v3258 = vadd.f32 0.0, %v3257
    %v3259 = vpop.f32.mrb[0].mxu0
    %3260 = vdwg.mxu0
    %v3261 = vpack.c.bf16 %v3085, %v3082
    %v3262 = vpack.c.bf16 %v3093, %v3090
    %v3263 = vpack.c.bf16 %v3140, %v3137
    %v3264 = vpack.c.bf16 %v3148, %v3145
    %v3265 = vpack.c.bf16 %v3195, %v3192
    %v3266 = vpack.c.bf16 %v3203, %v3200
    %v3267 = vpack.c.bf16 %v3250, %v3247
    %v3268 = vpack.c.bf16 %v3258, %v3255
    %s3269 = scalar_lea.vmem [#allocation11], 64
    %v3270 = vld [vmem:[%s3269] sm:$0xf]
    %v3271 = vld [vmem:[%s3269 + $0x4] sm:$0xf]
    %v3272 = vld [vmem:[%s3269 + $0x8] sm:$0xf]
    %v3273 = vld [vmem:[%s3269 + $0xc] sm:$0xf]
    %v3274 = vld [vmem:[%s3269 + $0x10] sm:$0xf]
    %v3275 = vld [vmem:[%s3269 + $0x14] sm:$0xf]
    %v3276 = vld [vmem:[%s3269 + $0x18] sm:$0xf]
    %v3277 = vld [vmem:[%s3269 + $0x1c] sm:$0xf]
    %v3278 = vld [vmem:[%s3269 + $0x20] sm:$0xf]
    %v3279 = vld [vmem:[%s3269 + $0x24] sm:$0xf]
    %v3280 = vld [vmem:[%s3269 + $0x28] sm:$0xf]
    %v3281 = vld [vmem:[%s3269 + $0x2c] sm:$0xf]
    %v3282 = vld [vmem:[%s3269 + $0x30] sm:$0xf]
    %v3283 = vld [vmem:[%s3269 + $0x34] sm:$0xf]
    %v3284 = vld [vmem:[%s3269 + $0x38] sm:$0xf]
    %v3285 = vld [vmem:[%s3269 + $0x3c] sm:$0xf]
    %v3290 = vunpack.c.l.b16 %v3270
    %v3291 = vunpack.c.l.b16 %v3271
    %v3292 = vunpack.c.l.b16 %v3272
    %v3293 = vunpack.c.l.b16 %v3273
    %v3294 = vpack.c.b16 %v3291, %v3290
    %v3295 = vpack.c.b16 %v3293, %v3292
    %v3299 = vsel %vm722, %v3261, 0
    %v3302 = vsel %vm722, %v3262, 0
    %3304 = vmatprep.subr.bf16.mxu0 0
    %3305 = vmatpush1.bf16.msra.mxu0 %v3294
    %3306 = vmatprep.subr.bf16.mxu0 0
    %3307 = vmatpush1.bf16.msra.mxu0 %v3295
    %3308 = vmatprep.subr.bf16.mxu0 0
    %3309 = vmatpush1.bf16.msra.mxu0 0
    %3310 = vmatprep.subr.bf16.mxu0 0
    %3311 = vmatpush1.bf16.msra.mxu0 0
    %3312 = vmatprep.subr.bf16.mxu0 0
    %3313 = vmatpush1.bf16.msra.mxu0 0
    %3314 = vmatprep.subr.bf16.mxu0 0
    %3315 = vmatpush1.bf16.msra.mxu0 0
    %3316 = vmatprep.subr.bf16.mxu0 0
    %3317 = vmatpush1.bf16.msra.mxu0 0
    %3318 = vmatprep.subr.bf16.mxu0 0
    %3319 = vmatpush1.bf16.msra.mxu0 0
    %3320 = vmatprep.subr.bf16.mxu0 0
    %3321 = vmatpush1.bf16.msra.mxu0 0
    %3322 = vmatprep.subr.bf16.mxu0 0
    %3323 = vmatpush1.bf16.msra.mxu0 0
    %3324 = vmatprep.subr.bf16.mxu0 0
    %3325 = vmatpush1.bf16.msra.mxu0 0
    %3326 = vmatprep.subr.bf16.mxu0 0
    %3327 = vmatpush1.bf16.msra.mxu0 0
    %3328 = vmatprep.subr.bf16.mxu0 0
    %3329 = vmatpush1.bf16.msra.mxu0 0
    %3330 = vmatprep.subr.bf16.mxu0 0
    %3331 = vmatpush1.bf16.msra.mxu0 0
    %3332 = vmatprep.subr.bf16.mxu0 0
    %3333 = vmatpush1.bf16.msra.mxu0 0
    %3334 = vmatprep.subr.bf16.mxu0 0
    %3335 = vmatpush1.bf16.msra.mxu0 0
    %3336 = vmatprep.mubr.bf16.mxu0 0
    %3337 = vmatmul.mubr.bf16.gmra.mrb[0].mxu0 %v3299
    %v3338 = vpop.f32.mrb[0].mxu0
    %v3339 = vadd.f32 0.0, %v3338
    %v3340 = vpop.f32.mrb[0].mxu0
    %v3341 = vpop.f32.mrb[0].mxu0
    %v3342 = vadd.f32 0.0, %v3341
    %v3343 = vpop.f32.mrb[0].mxu0
    %3344 = vmatprep.mubr.bf16.mxu0 0
    %3345 = vmatmul.mubr.bf16.gmra.mrb[0].mxu0 %v3302
    %v3346 = vpop.f32.mrb[0].mxu0
    %v3347 = vadd.f32 0.0, %v3346
    %v3348 = vpop.f32.mrb[0].mxu0
    %v3349 = vpop.f32.mrb[0].mxu0
    %v3350 = vadd.f32 0.0, %v3349
    %v3351 = vpop.f32.mrb[0].mxu0
    %3352 = vdwg.mxu0
    %v3357 = vunpack.c.l.b16 %v3274
    %v3358 = vunpack.c.l.b16 %v3275
    %v3359 = vunpack.c.l.b16 %v3276
    %v3360 = vunpack.c.l.b16 %v3277
    %v3361 = vpack.c.b16 %v3358, %v3357
    %v3362 = vpack.c.b16 %v3360, %v3359
    %v3366 = vsel %vm722, %v3263, 0
    %v3369 = vsel %vm722, %v3264, 0
    %3371 = vmatprep.subr.bf16.mxu0 0
    %3372 = vmatpush1.bf16.msra.mxu0 %v3361
    %3373 = vmatprep.subr.bf16.mxu0 0
    %3374 = vmatpush1.bf16.msra.mxu0 %v3362
    %3375 = vmatprep.subr.bf16.mxu0 0
    %3376 = vmatpush1.bf16.msra.mxu0 0
    %3377 = vmatprep.subr.bf16.mxu0 0
    %3378 = vmatpush1.bf16.msra.mxu0 0
    %3379 = vmatprep.subr.bf16.mxu0 0
    %3380 = vmatpush1.bf16.msra.mxu0 0
    %3381 = vmatprep.subr.bf16.mxu0 0
    %3382 = vmatpush1.bf16.msra.mxu0 0
    %3383 = vmatprep.subr.bf16.mxu0 0
    %3384 = vmatpush1.bf16.msra.mxu0 0
    %3385 = vmatprep.subr.bf16.mxu0 0
    %3386 = vmatpush1.bf16.msra.mxu0 0
    %3387 = vmatprep.subr.bf16.mxu0 0
    %3388 = vmatpush1.bf16.msra.mxu0 0
    %3389 = vmatprep.subr.bf16.mxu0 0
    %3390 = vmatpush1.bf16.msra.mxu0 0
    %3391 = vmatprep.subr.bf16.mxu0 0
    %3392 = vmatpush1.bf16.msra.mxu0 0
    %3393 = vmatprep.subr.bf16.mxu0 0
    %3394 = vmatpush1.bf16.msra.mxu0 0
    %3395 = vmatprep.subr.bf16.mxu0 0
    %3396 = vmatpush1.bf16.msra.mxu0 0
    %3397 = vmatprep.subr.bf16.mxu0 0
    %3398 = vmatpush1.bf16.msra.mxu0 0
    %3399 = vmatprep.subr.bf16.mxu0 0
    %3400 = vmatpush1.bf16.msra.mxu0 0
    %3401 = vmatprep.subr.bf16.mxu0 0
    %3402 = vmatpush1.bf16.msra.mxu0 0
    %3403 = vmatprep.mubr.bf16.mxu0 0
    %3404 = vmatmul.mubr.bf16.gmra.mrb[0].mxu0 %v3366
    %v3405 = vpop.f32.mrb[0].mxu0
    %v3406 = vadd.f32 0.0, %v3405
    %v3407 = vpop.f32.mrb[0].mxu0
    %v3408 = vpop.f32.mrb[0].mxu0
    %v3409 = vadd.f32 0.0, %v3408
    %v3410 = vpop.f32.mrb[0].mxu0
    %3411 = vmatprep.mubr.bf16.mxu0 0
    %3412 = vmatmul.mubr.bf16.gmra.mrb[0].mxu0 %v3369
    %v3413 = vpop.f32.mrb[0].mxu0
    %v3414 = vadd.f32 0.0, %v3413
    %v3415 = vpop.f32.mrb[0].mxu0
    %v3416 = vpop.f32.mrb[0].mxu0
    %v3417 = vadd.f32 0.0, %v3416
    %v3418 = vpop.f32.mrb[0].mxu0
    %3419 = vdwg.mxu0
    %v3424 = vunpack.c.l.b16 %v3278
    %v3425 = vunpack.c.l.b16 %v3279
    %v3426 = vunpack.c.l.b16 %v3280
    %v3427 = vunpack.c.l.b16 %v3281
    %v3428 = vpack.c.b16 %v3425, %v3424
    %v3429 = vpack.c.b16 %v3427, %v3426
    %v3433 = vsel %vm722, %v3265, 0
    %v3436 = vsel %vm722, %v3266, 0
    %3438 = vmatprep.subr.bf16.mxu0 0
    %3439 = vmatpush1.bf16.msra.mxu0 %v3428
    %3440 = vmatprep.subr.bf16.mxu0 0
    %3441 = vmatpush1.bf16.msra.mxu0 %v3429
    %3442 = vmatprep.subr.bf16.mxu0 0
    %3443 = vmatpush1.bf16.msra.mxu0 0
    %3444 = vmatprep.subr.bf16.mxu0 0
    %3445 = vmatpush1.bf16.msra.mxu0 0
    %3446 = vmatprep.subr.bf16.mxu0 0
    %3447 = vmatpush1.bf16.msra.mxu0 0
    %3448 = vmatprep.subr.bf16.mxu0 0
    %3449 = vmatpush1.bf16.msra.mxu0 0
    %3450 = vmatprep.subr.bf16.mxu0 0
    %3451 = vmatpush1.bf16.msra.mxu0 0
    %3452 = vmatprep.subr.bf16.mxu0 0
    %3453 = vmatpush1.bf16.msra.mxu0 0
    %3454 = vmatprep.subr.bf16.mxu0 0
    %3455 = vmatpush1.bf16.msra.mxu0 0
    %3456 = vmatprep.subr.bf16.mxu0 0
    %3457 = vmatpush1.bf16.msra.mxu0 0
    %3458 = vmatprep.subr.bf16.mxu0 0
    %3459 = vmatpush1.bf16.msra.mxu0 0
    %3460 = vmatprep.subr.bf16.mxu0 0
    %3461 = vmatpush1.bf16.msra.mxu0 0
    %3462 = vmatprep.subr.bf16.mxu0 0
    %3463 = vmatpush1.bf16.msra.mxu0 0
    %3464 = vmatprep.subr.bf16.mxu0 0
    %3465 = vmatpush1.bf16.msra.mxu0 0
    %3466 = vmatprep.subr.bf16.mxu0 0
    %3467 = vmatpush1.bf16.msra.mxu0 0
    %3468 = vmatprep.subr.bf16.mxu0 0
    %3469 = vmatpush1.bf16.msra.mxu0 0
    %3470 = vmatprep.mubr.bf16.mxu0 0
    %3471 = vmatmul.mubr.bf16.gmra.mrb[0].mxu0 %v3433
    %v3472 = vpop.f32.mrb[0].mxu0
    %v3473 = vadd.f32 0.0, %v3472
    %v3474 = vpop.f32.mrb[0].mxu0
    %v3475 = vpop.f32.mrb[0].mxu0
    %v3476 = vadd.f32 0.0, %v3475
    %v3477 = vpop.f32.mrb[0].mxu0
    %3478 = vmatprep.mubr.bf16.mxu0 0
    %3479 = vmatmul.mubr.bf16.gmra.mrb[0].mxu0 %v3436
    %v3480 = vpop.f32.mrb[0].mxu0
    %v3481 = vadd.f32 0.0, %v3480
    %v3482 = vpop.f32.mrb[0].mxu0
    %v3483 = vpop.f32.mrb[0].mxu0
    %v3484 = vadd.f32 0.0, %v3483
    %v3485 = vpop.f32.mrb[0].mxu0
    %3486 = vdwg.mxu0
    %v3491 = vunpack.c.l.b16 %v3282
    %v3492 = vunpack.c.l.b16 %v3283
    %v3493 = vunpack.c.l.b16 %v3284
    %v3494 = vunpack.c.l.b16 %v3285
    %v3495 = vpack.c.b16 %v3492, %v3491
    %v3496 = vpack.c.b16 %v3494, %v3493
    %v3500 = vsel %vm722, %v3267, 0
    %v3503 = vsel %vm722, %v3268, 0
    %3505 = vmatprep.subr.bf16.mxu0 0
    %3506 = vmatpush1.bf16.msra.mxu0 %v3495
    %3507 = vmatprep.subr.bf16.mxu0 0
    %3508 = vmatpush1.bf16.msra.mxu0 %v3496
    %3509 = vmatprep.subr.bf16.mxu0 0
    %3510 = vmatpush1.bf16.msra.mxu0 0
    %3511 = vmatprep.subr.bf16.mxu0 0
    %3512 = vmatpush1.bf16.msra.mxu0 0
    %3513 = vmatprep.subr.bf16.mxu0 0
    %3514 = vmatpush1.bf16.msra.mxu0 0
    %3515 = vmatprep.subr.bf16.mxu0 0
    %3516 = vmatpush1.bf16.msra.mxu0 0
    %3517 = vmatprep.subr.bf16.mxu0 0
    %3518 = vmatpush1.bf16.msra.mxu0 0
    %3519 = vmatprep.subr.bf16.mxu0 0
    %3520 = vmatpush1.bf16.msra.mxu0 0
    %3521 = vmatprep.subr.bf16.mxu0 0
    %3522 = vmatpush1.bf16.msra.mxu0 0
    %3523 = vmatprep.subr.bf16.mxu0 0
    %3524 = vmatpush1.bf16.msra.mxu0 0
    %3525 = vmatprep.subr.bf16.mxu0 0
    %3526 = vmatpush1.bf16.msra.mxu0 0
    %3527 = vmatprep.subr.bf16.mxu0 0
    %3528 = vmatpush1.bf16.msra.mxu0 0
    %3529 = vmatprep.subr.bf16.mxu0 0
    %3530 = vmatpush1.bf16.msra.mxu0 0
    %3531 = vmatprep.subr.bf16.mxu0 0
    %3532 = vmatpush1.bf16.msra.mxu0 0
    %3533 = vmatprep.subr.bf16.mxu0 0
    %3534 = vmatpush1.bf16.msra.mxu0 0
    %3535 = vmatprep.subr.bf16.mxu0 0
    %3536 = vmatpush1.bf16.msra.mxu0 0
    %3537 = vmatprep.mubr.bf16.mxu0 0
    %3538 = vmatmul.mubr.bf16.gmra.mrb[0].mxu0 %v3500
    %v3539 = vpop.f32.mrb[0].mxu0
    %v3540 = vadd.f32 0.0, %v3539
    %v3541 = vpop.f32.mrb[0].mxu0
    %v3542 = vpop.f32.mrb[0].mxu0
    %v3543 = vadd.f32 0.0, %v3542
    %v3544 = vpop.f32.mrb[0].mxu0
    %3545 = vmatprep.mubr.bf16.mxu0 0
    %3546 = vmatmul.mubr.bf16.gmra.mrb[0].mxu0 %v3503
    %v3547 = vpop.f32.mrb[0].mxu0
    %v3548 = vadd.f32 0.0, %v3547
    %v3549 = vpop.f32.mrb[0].mxu0
    %v3550 = vpop.f32.mrb[0].mxu0
    %v3551 = vadd.f32 0.0, %v3550
    %v3552 = vpop.f32.mrb[0].mxu0
    %3553 = vdwg.mxu0
    %v3554 = vadd.f32 %v3339, %v3406
    %v3555 = vadd.f32 %v3554, %v3473
    %v3556 = vadd.f32 %v3555, %v3540
    %v3557 = vadd.f32 %v3342, %v3409
    %v3558 = vadd.f32 %v3557, %v3476
    %v3559 = vadd.f32 %v3558, %v3543
    %v3560 = vadd.f32 %v3347, %v3414
    %v3561 = vadd.f32 %v3560, %v3481
    %v3562 = vadd.f32 %v3561, %v3548
    %v3563 = vadd.f32 %v3350, %v3417
    %v3564 = vadd.f32 %v3563, %v3484
    %v3565 = vadd.f32 %v3564, %v3551
    %s3566 = scalar_lea.vmem %s7, 1
    %v3567 = vld [vmem:[%s3566] sm:$0x1]
    %v3569 = vlaneseq
    %v3570 = vshrl.u32 %v3569, 7
    %v3571 = vsub.s32 0, %v3570
    %v3572 = vrot.slane %v3567, %v3571
    %v3574 = vadd.f32 %v3556, %v3572
    %v3575 = vadd.f32 %v3559, %v3572
    %v3576 = vadd.f32 %v3562, %v3572
    %v3577 = vadd.f32 %v3565, %v3572
    %v3578 = vadd.f32 %v2182, %v3574
    %v3579 = vadd.f32 %v2183, %v3575
    %v3580 = vadd.f32 %v2184, %v3576
    %v3581 = vadd.f32 %v2185, %v3577
    %s3582 = scalar_lea.vmem %s8, 1
    %v3583 = vld [vmem:[%s3582] sm:$0x1]
    %s3584 = scalar_lea.vmem %s9, 1
    %v3585 = vld [vmem:[%s3584] sm:$0x1]
    %3586 = vadd.xlane.f32.xlu0 %v3578
    %v3587 = vpop.xlane.xlu0 %3586
    %3588 = vadd.xlane.f32.xlu0 %v3579
    %v3589 = vpop.xlane.xlu0 %3588
    %3590 = vadd.xlane.f32.xlu0 %v3580
    %v3591 = vpop.xlane.xlu0 %3590
    %3592 = vadd.xlane.f32.xlu0 %v3581
    %v3593 = vpop.xlane.xlu0 %3592
    %v3594 = vmul.f32 %v3587, %v1700
    %v3595 = vmul.f32 %v3589, %v1700
    %v3596 = vmul.f32 %v3591, %v1700
    %v3597 = vmul.f32 %v3593, %v1700
    %v3598 = vsub.f32 %v3578, %v3594
    %v3599 = vsub.f32 %v3579, %v3595
    %v3600 = vsub.f32 %v3580, %v3596
    %v3601 = vsub.f32 %v3581, %v3597
    %v3602 = vmul.f32 %v3598, %v3598
    %v3603 = vmul.f32 %v3599, %v3599
    %v3604 = vmul.f32 %v3600, %v3600
    %v3605 = vmul.f32 %v3601, %v3601
    %3606 = vadd.xlane.f32.xlu0 %v3602
    %v3607 = vpop.xlane.xlu0 %3606
    %3608 = vadd.xlane.f32.xlu0 %v3603
    %v3609 = vpop.xlane.xlu0 %3608
    %3610 = vadd.xlane.f32.xlu0 %v3604
    %v3611 = vpop.xlane.xlu0 %3610
    %3612 = vadd.xlane.f32.xlu0 %v3605
    %v3613 = vpop.xlane.xlu0 %3612
    %v3614 = vmul.f32 %v3607, %v1700
    %v3615 = vmul.f32 %v3609, %v1700
    %v3616 = vmul.f32 %v3611, %v1700
    %v3617 = vmul.f32 %v3613, %v1700
    %v3618 = vadd.f32 %v3614, 1e-05
    %v3619 = vadd.f32 %v3615, 1e-05
    %v3620 = vadd.f32 %v3616, 1e-05
    %v3621 = vadd.f32 %v3617, 1e-05
    %v3622 = vrsqrt.pop %v3618
    %v3623 = vrsqrt.pop %v3619
    %v3624 = vrsqrt.pop %v3620
    %v3625 = vrsqrt.pop %v3621
    %v3626 = vmul.f32 %v3598, %v3622
    %v3627 = vmul.f32 %v3599, %v3623
    %v3628 = vmul.f32 %v3600, %v3624
    %v3629 = vmul.f32 %v3601, %v3625
    %v3631 = vlaneseq
    %v3632 = vshrl.u32 %v3631, 7
    %v3633 = vsub.s32 0, %v3632
    %v3634 = vrot.slane %v3583, %v3633
    %v3636 = vmul.f32 %v3626, %v3634
    %v3637 = vmul.f32 %v3627, %v3634
    %v3638 = vmul.f32 %v3628, %v3634
    %v3639 = vmul.f32 %v3629, %v3634
    %v3641 = vlaneseq
    %v3642 = vshrl.u32 %v3641, 7
    %v3643 = vsub.s32 0, %v3642
    %v3644 = vrot.slane %v3585, %v3643
    %v3646 = vadd.f32 %v3636, %v3644
    %v3647 = vadd.f32 %v3637, %v3644
    %v3648 = vadd.f32 %v3638, %v3644
    %v3649 = vadd.f32 %v3639, %v3644
    %s3650 = scalar_lea.vmem [#allocation13], 128
    %v3651 = vld [vmem:[%s3650] sm:$0xff]
    %v3652 = vld [vmem:[%s3650 + $0x8] sm:$0xff]
    %v3653 = vld [vmem:[%s3650 + $0x10] sm:$0xff]
    %v3654 = vld [vmem:[%s3650 + $0x18] sm:$0xff]
    %v3655 = vld [vmem:[%s3650 + $0x20] sm:$0xff]
    %v3656 = vld [vmem:[%s3650 + $0x28] sm:$0xff]
    %v3657 = vld [vmem:[%s3650 + $0x30] sm:$0xff]
    %v3658 = vld [vmem:[%s3650 + $0x38] sm:$0xff]
    %v3659 = vld [vmem:[%s3650 + $0x40] sm:$0xff]
    %v3660 = vld [vmem:[%s3650 + $0x48] sm:$0xff]
    %v3661 = vld [vmem:[%s3650 + $0x50] sm:$0xff]
    %v3662 = vld [vmem:[%s3650 + $0x58] sm:$0xff]
    %v3663 = vld [vmem:[%s3650 + $0x60] sm:$0xff]
    %v3664 = vld [vmem:[%s3650 + $0x68] sm:$0xff]
    %v3665 = vld [vmem:[%s3650 + $0x70] sm:$0xff]
    %v3666 = vld [vmem:[%s3650 + $0x78] sm:$0xff]
    %v3667 = vpack.c.bf16 %v3647, %v3646
    %v3668 = vpack.c.bf16 %v3649, %v3648
    %s3669 = scalar_lea.vmem %s11, 2
    %v3670 = vld [vmem:[%s3669] sm:$0x3]
    %v3672 = vlaneseq
    %v3673 = vshrl.u32 %v3672, 7
    %v3674 = vsub.s32 0, %v3673
    %v3675 = vrot.slane %v3670, %v3674
    %v3676 = vlaneseq
    %v3677 = vshrl.u32 %v3676, 7
    %v3678 = vsub.s32 1, %v3677
    %v3679 = vrot.slane %v3670, %v3678
    %v3698 = vunpack.c.l.b16 %v3651
    %v3699 = vunpack.c.h.b16 %v3651
    %v3700 = vunpack.c.l.b16 %v3652
    %v3701 = vunpack.c.h.b16 %v3652
    %v3702 = vunpack.c.l.b16 %v3653
    %v3703 = vunpack.c.h.b16 %v3653
    %v3704 = vunpack.c.l.b16 %v3654
    %v3705 = vunpack.c.h.b16 %v3654
    %v3706 = vunpack.c.l.b16 %v3655
    %v3707 = vunpack.c.h.b16 %v3655
    %v3708 = vunpack.c.l.b16 %v3656
    %v3709 = vunpack.c.h.b16 %v3656
    %v3710 = vunpack.c.l.b16 %v3657
    %v3711 = vunpack.c.h.b16 %v3657
    %v3712 = vunpack.c.l.b16 %v3658
    %v3713 = vunpack.c.h.b16 %v3658
    %v3714 = vunpack.c.l.b16 %v3659
    %v3715 = vunpack.c.h.b16 %v3659
    %v3716 = vunpack.c.l.b16 %v3660
    %v3717 = vunpack.c.h.b16 %v3660
    %v3718 = vunpack.c.l.b16 %v3661
    %v3719 = vunpack.c.h.b16 %v3661
    %v3720 = vunpack.c.l.b16 %v3662
    %v3721 = vunpack.c.h.b16 %v3662
    %v3722 = vunpack.c.l.b16 %v3663
    %v3723 = vunpack.c.h.b16 %v3663
    %v3724 = vunpack.c.l.b16 %v3664
    %v3725 = vunpack.c.h.b16 %v3664
    %v3726 = vunpack.c.l.b16 %v3665
    %v3727 = vunpack.c.h.b16 %v3665
    %v3728 = vunpack.c.l.b16 %v3666
    %v3729 = vunpack.c.h.b16 %v3666
    %v3730 = vpack.c.b16 %v3700, %v3698
    %v3731 = vpack.c.b16 %v3701, %v3699
    %v3732 = vpack.c.b16 %v3704, %v3702
    %v3733 = vpack.c.b16 %v3705, %v3703
    %v3734 = vpack.c.b16 %v3708, %v3706
    %v3735 = vpack.c.b16 %v3709, %v3707
    %v3736 = vpack.c.b16 %v3712, %v3710
    %v3737 = vpack.c.b16 %v3713, %v3711
    %v3738 = vpack.c.b16 %v3716, %v3714
    %v3739 = vpack.c.b16 %v3717, %v3715
    %v3740 = vpack.c.b16 %v3720, %v3718
    %v3741 = vpack.c.b16 %v3721, %v3719
    %v3742 = vpack.c.b16 %v3724, %v3722
    %v3743 = vpack.c.b16 %v3725, %v3723
    %v3744 = vpack.c.b16 %v3728, %v3726
    %v3745 = vpack.c.b16 %v3729, %v3727
    %3762 = vmatprep.subr.bf16.mxu0 %v3731
    %3763 = vmatpush1.bf16.msra.mxu0 %v3730
    %3764 = vmatprep.subr.bf16.mxu0 %v3733
    %3765 = vmatpush1.bf16.msra.mxu0 %v3732
    %3766 = vmatprep.subr.bf16.mxu0 %v3735
    %3767 = vmatpush1.bf16.msra.mxu0 %v3734
    %3768 = vmatprep.subr.bf16.mxu0 %v3737
    %3769 = vmatpush1.bf16.msra.mxu0 %v3736
    %3770 = vmatprep.subr.bf16.mxu0 %v3739
    %3771 = vmatpush1.bf16.msra.mxu0 %v3738
    %3772 = vmatprep.subr.bf16.mxu0 %v3741
    %3773 = vmatpush1.bf16.msra.mxu0 %v3740
    %3774 = vmatprep.subr.bf16.mxu0 %v3743
    %3775 = vmatpush1.bf16.msra.mxu0 %v3742
    %3776 = vmatprep.subr.bf16.mxu0 %v3745
    %3777 = vmatpush1.bf16.msra.mxu0 %v3744
    %3778 = vmatprep.subr.bf16.mxu0 0
    %3779 = vmatpush1.bf16.msra.mxu0 0
    %3780 = vmatprep.subr.bf16.mxu0 0
    %3781 = vmatpush1.bf16.msra.mxu0 0
    %3782 = vmatprep.subr.bf16.mxu0 0
    %3783 = vmatpush1.bf16.msra.mxu0 0
    %3784 = vmatprep.subr.bf16.mxu0 0
    %3785 = vmatpush1.bf16.msra.mxu0 0
    %3786 = vmatprep.subr.bf16.mxu0 0
    %3787 = vmatpush1.bf16.msra.mxu0 0
    %3788 = vmatprep.subr.bf16.mxu0 0
    %3789 = vmatpush1.bf16.msra.mxu0 0
    %3790 = vmatprep.subr.bf16.mxu0 0
    %3791 = vmatpush1.bf16.msra.mxu0 0
    %3792 = vmatprep.subr.bf16.mxu0 0
    %3793 = vmatpush1.bf16.msra.mxu0 0
    %3794 = vmatprep.mubr.bf16.mxu0 0
    %3795 = vmatmul.mubr.bf16.gmra.mrb[0].mxu0 %v3667
    %v3796 = vpop.f32.mrb[0].mxu0
    %v3797 = vadd.f32 %v3675, %v3796
    %v3798 = vpop.f32.mrb[0].mxu0
    %v3799 = vadd.f32 %v3679, %v3798
    %v3800 = vpop.f32.mrb[0].mxu0
    %v3801 = vadd.f32 %v3675, %v3800
    %v3802 = vpop.f32.mrb[0].mxu0
    %v3803 = vadd.f32 %v3679, %v3802
    %3804 = vmatprep.mubr.bf16.mxu0 0
    %3805 = vmatmul.mubr.bf16.gmra.mrb[0].mxu0 %v3668
    %v3806 = vpop.f32.mrb[0].mxu0
    %v3807 = vadd.f32 %v3675, %v3806
    %v3808 = vpop.f32.mrb[0].mxu0
    %v3809 = vadd.f32 %v3679, %v3808
    %v3810 = vpop.f32.mrb[0].mxu0
    %v3811 = vadd.f32 %v3675, %v3810
    %v3812 = vpop.f32.mrb[0].mxu0
    %v3813 = vadd.f32 %v3679, %v3812
    %3814 = vdwg.mxu0
    %v3815 = vmax.f32 %v3797, 0.0
    %v3816 = vmax.f32 %v3799, 0.0
    %v3817 = vmax.f32 %v3801, 0.0
    %v3818 = vmax.f32 %v3803, 0.0
    %v3819 = vmax.f32 %v3807, 0.0
    %v3820 = vmax.f32 %v3809, 0.0
    %v3821 = vmax.f32 %v3811, 0.0
    %v3822 = vmax.f32 %v3813, 0.0
    %s3823 = scalar_lea.vmem [#allocation14], 128
    %v3824 = vld [vmem:[%s3823] sm:$0xf]
    %v3825 = vld [vmem:[%s3823 + $0x4] sm:$0xf]
    %v3826 = vld [vmem:[%s3823 + $0x8] sm:$0xf]
    %v3827 = vld [vmem:[%s3823 + $0xc] sm:$0xf]
    %v3828 = vld [vmem:[%s3823 + $0x10] sm:$0xf]
    %v3829 = vld [vmem:[%s3823 + $0x14] sm:$0xf]
    %v3830 = vld [vmem:[%s3823 + $0x18] sm:$0xf]
    %v3831 = vld [vmem:[%s3823 + $0x1c] sm:$0xf]
    %v3832 = vld [vmem:[%s3823 + $0x20] sm:$0xf]
    %v3833 = vld [vmem:[%s3823 + $0x24] sm:$0xf]
    %v3834 = vld [vmem:[%s3823 + $0x28] sm:$0xf]
    %v3835 = vld [vmem:[%s3823 + $0x2c] sm:$0xf]
    %v3836 = vld [vmem:[%s3823 + $0x30] sm:$0xf]
    %v3837 = vld [vmem:[%s3823 + $0x34] sm:$0xf]
    %v3838 = vld [vmem:[%s3823 + $0x38] sm:$0xf]
    %v3839 = vld [vmem:[%s3823 + $0x3c] sm:$0xf]
    %v3840 = vld [vmem:[%s3823 + $0x40] sm:$0xf]
    %v3841 = vld [vmem:[%s3823 + $0x44] sm:$0xf]
    %v3842 = vld [vmem:[%s3823 + $0x48] sm:$0xf]
    %v3843 = vld [vmem:[%s3823 + $0x4c] sm:$0xf]
    %v3844 = vld [vmem:[%s3823 + $0x50] sm:$0xf]
    %v3845 = vld [vmem:[%s3823 + $0x54] sm:$0xf]
    %v3846 = vld [vmem:[%s3823 + $0x58] sm:$0xf]
    %v3847 = vld [vmem:[%s3823 + $0x5c] sm:$0xf]
    %v3848 = vld [vmem:[%s3823 + $0x60] sm:$0xf]
    %v3849 = vld [vmem:[%s3823 + $0x64] sm:$0xf]
    %v3850 = vld [vmem:[%s3823 + $0x68] sm:$0xf]
    %v3851 = vld [vmem:[%s3823 + $0x6c] sm:$0xf]
    %v3852 = vld [vmem:[%s3823 + $0x70] sm:$0xf]
    %v3853 = vld [vmem:[%s3823 + $0x74] sm:$0xf]
    %v3854 = vld [vmem:[%s3823 + $0x78] sm:$0xf]
    %v3855 = vld [vmem:[%s3823 + $0x7c] sm:$0xf]
    %v3856 = vpack.c.bf16 %v3817, %v3815
    %v3857 = vpack.c.bf16 %v3818, %v3816
    %v3858 = vpack.c.bf16 %v3821, %v3819
    %v3859 = vpack.c.bf16 %v3822, %v3820
    %s3860 = scalar_lea.vmem %s13, 1
    %v3861 = vld [vmem:[%s3860] sm:$0x1]
    %v3863 = vlaneseq
    %v3864 = vshrl.u32 %v3863, 7
    %v3865 = vsub.s32 0, %v3864
    %v3866 = vrot.slane %v3861, %v3865
    %v3900 = vunpack.c.l.b16 %v3824
    %v3901 = vunpack.c.l.b16 %v3825
    %v3902 = vunpack.c.l.b16 %v3826
    %v3903 = vunpack.c.l.b16 %v3827
    %v3904 = vunpack.c.l.b16 %v3828
    %v3905 = vunpack.c.l.b16 %v3829
    %v3906 = vunpack.c.l.b16 %v3830
    %v3907 = vunpack.c.l.b16 %v3831
    %v3908 = vunpack.c.l.b16 %v3832
    %v3909 = vunpack.c.l.b16 %v3833
    %v3910 = vunpack.c.l.b16 %v3834
    %v3911 = vunpack.c.l.b16 %v3835
    %v3912 = vunpack.c.l.b16 %v3836
    %v3913 = vunpack.c.l.b16 %v3837
    %v3914 = vunpack.c.l.b16 %v3838
    %v3915 = vunpack.c.l.b16 %v3839
    %v3916 = vunpack.c.l.b16 %v3840
    %v3917 = vunpack.c.l.b16 %v3841
    %v3918 = vunpack.c.l.b16 %v3842
    %v3919 = vunpack.c.l.b16 %v3843
    %v3920 = vunpack.c.l.b16 %v3844
    %v3921 = vunpack.c.l.b16 %v3845
    %v3922 = vunpack.c.l.b16 %v3846
    %v3923 = vunpack.c.l.b16 %v3847
    %v3924 = vunpack.c.l.b16 %v3848
    %v3925 = vunpack.c.l.b16 %v3849
    %v3926 = vunpack.c.l.b16 %v3850
    %v3927 = vunpack.c.l.b16 %v3851
    %v3928 = vunpack.c.l.b16 %v3852
    %v3929 = vunpack.c.l.b16 %v3853
    %v3930 = vunpack.c.l.b16 %v3854
    %v3931 = vunpack.c.l.b16 %v3855
    %v3932 = vpack.c.b16 %v3901, %v3900
    %v3933 = vpack.c.b16 %v3903, %v3902
    %v3934 = vpack.c.b16 %v3905, %v3904
    %v3935 = vpack.c.b16 %v3907, %v3906
    %v3936 = vpack.c.b16 %v3909, %v3908
    %v3937 = vpack.c.b16 %v3911, %v3910
    %v3938 = vpack.c.b16 %v3913, %v3912
    %v3939 = vpack.c.b16 %v3915, %v3914
    %v3940 = vpack.c.b16 %v3917, %v3916
    %v3941 = vpack.c.b16 %v3919, %v3918
    %v3942 = vpack.c.b16 %v3921, %v3920
    %v3943 = vpack.c.b16 %v3923, %v3922
    %v3944 = vpack.c.b16 %v3925, %v3924
    %v3945 = vpack.c.b16 %v3927, %v3926
    %v3946 = vpack.c.b16 %v3929, %v3928
    %v3947 = vpack.c.b16 %v3931, %v3930
    %3964 = vmatprep.subr.bf16.mxu0 0
    %3965 = vmatpush1.bf16.msra.mxu0 %v3932
    %3966 = vmatprep.subr.bf16.mxu0 0
    %3967 = vmatpush1.bf16.msra.mxu0 %v3933
    %3968 = vmatprep.subr.bf16.mxu0 0
    %3969 = vmatpush1.bf16.msra.mxu0 %v3934
    %3970 = vmatprep.subr.bf16.mxu0 0
    %3971 = vmatpush1.bf16.msra.mxu0 %v3935
    %3972 = vmatprep.subr.bf16.mxu0 0
    %3973 = vmatpush1.bf16.msra.mxu0 %v3936
    %3974 = vmatprep.subr.bf16.mxu0 0
    %3975 = vmatpush1.bf16.msra.mxu0 %v3937
    %3976 = vmatprep.subr.bf16.mxu0 0
    %3977 = vmatpush1.bf16.msra.mxu0 %v3938
    %3978 = vmatprep.subr.bf16.mxu0 0
    %3979 = vmatpush1.bf16.msra.mxu0 %v3939
    %3980 = vmatprep.subr.bf16.mxu0 0
    %3981 = vmatpush1.bf16.msra.mxu0 %v3940
    %3982 = vmatprep.subr.bf16.mxu0 0
    %3983 = vmatpush1.bf16.msra.mxu0 %v3941
    %3984 = vmatprep.subr.bf16.mxu0 0
    %3985 = vmatpush1.bf16.msra.mxu0 %v3942
    %3986 = vmatprep.subr.bf16.mxu0 0
    %3987 = vmatpush1.bf16.msra.mxu0 %v3943
    %3988 = vmatprep.subr.bf16.mxu0 0
    %3989 = vmatpush1.bf16.msra.mxu0 %v3944
    %3990 = vmatprep.subr.bf16.mxu0 0
    %3991 = vmatpush1.bf16.msra.mxu0 %v3945
    %3992 = vmatprep.subr.bf16.mxu0 0
    %3993 = vmatpush1.bf16.msra.mxu0 %v3946
    %3994 = vmatprep.subr.bf16.mxu0 0
    %3995 = vmatpush1.bf16.msra.mxu0 %v3947
    %3996 = vmatprep.mubr.bf16.mxu0 %v3857
    %3997 = vmatmul.mubr.bf16.gmra.mrb[0].mxu0 %v3856
    %v3998 = vpop.f32.mrb[0].mxu0
    %v3999 = vadd.f32 %v3866, %v3998
    %v4000 = vpop.f32.mrb[0].mxu0
    %v4001 = vpop.f32.mrb[0].mxu0
    %v4002 = vadd.f32 %v3866, %v4001
    %v4003 = vpop.f32.mrb[0].mxu0
    %4004 = vmatprep.mubr.bf16.mxu0 %v3859
    %4005 = vmatmul.mubr.bf16.gmra.mrb[0].mxu0 %v3858
    %v4006 = vpop.f32.mrb[0].mxu0
    %v4007 = vadd.f32 %v3866, %v4006
    %v4008 = vpop.f32.mrb[0].mxu0
    %v4009 = vpop.f32.mrb[0].mxu0
    %v4010 = vadd.f32 %v3866, %v4009
    %v4011 = vpop.f32.mrb[0].mxu0
    %4012 = vdwg.mxu0
    %v4013 = vadd.f32 %v3646, %v3999
    %v4014 = vadd.f32 %v3647, %v4002
    %v4015 = vadd.f32 %v3648, %v4007
    %v4016 = vadd.f32 %v3649, %v4010
    %s4017 = scalar_lea.vmem %s14, 1
    %v4018 = vld [vmem:[%s4017] sm:$0x1]
    %s4019 = scalar_lea.vmem %s15, 1
    %v4020 = vld [vmem:[%s4019] sm:$0x1]
    %4021 = vadd.xlane.f32.xlu0 %v4013
    %v4022 = vpop.xlane.xlu0 %4021
    %4023 = vadd.xlane.f32.xlu0 %v4014
    %v4024 = vpop.xlane.xlu0 %4023
    %4025 = vadd.xlane.f32.xlu0 %v4015
    %v4026 = vpop.xlane.xlu0 %4025
    %4027 = vadd.xlane.f32.xlu0 %v4016
    %v4028 = vpop.xlane.xlu0 %4027
    %v4029 = vmul.f32 %v4022, %v1700
    %v4030 = vmul.f32 %v4024, %v1700
    %v4031 = vmul.f32 %v4026, %v1700
    %v4032 = vmul.f32 %v4028, %v1700
    %v4033 = vsub.f32 %v4013, %v4029
    %v4034 = vsub.f32 %v4014, %v4030
    %v4035 = vsub.f32 %v4015, %v4031
    %v4036 = vsub.f32 %v4016, %v4032
    %v4037 = vmul.f32 %v4033, %v4033
    %v4038 = vmul.f32 %v4034, %v4034
    %v4039 = vmul.f32 %v4035, %v4035
    %v4040 = vmul.f32 %v4036, %v4036
    %4041 = vadd.xlane.f32.xlu0 %v4037
    %v4042 = vpop.xlane.xlu0 %4041
    %4043 = vadd.xlane.f32.xlu0 %v4038
    %v4044 = vpop.xlane.xlu0 %4043
    %4045 = vadd.xlane.f32.xlu0 %v4039
    %v4046 = vpop.xlane.xlu0 %4045
    %4047 = vadd.xlane.f32.xlu0 %v4040
    %v4048 = vpop.xlane.xlu0 %4047
    %v4049 = vmul.f32 %v4042, %v1700
    %v4050 = vmul.f32 %v4044, %v1700
    %v4051 = vmul.f32 %v4046, %v1700
    %v4052 = vmul.f32 %v4048, %v1700
    %v4053 = vadd.f32 %v4049, 1e-05
    %v4054 = vadd.f32 %v4050, 1e-05
    %v4055 = vadd.f32 %v4051, 1e-05
    %v4056 = vadd.f32 %v4052, 1e-05
    %v4057 = vrsqrt.pop %v4053
    %v4058 = vrsqrt.pop %v4054
    %v4059 = vrsqrt.pop %v4055
    %v4060 = vrsqrt.pop %v4056
    %v4061 = vmul.f32 %v4033, %v4057
    %v4062 = vmul.f32 %v4034, %v4058
    %v4063 = vmul.f32 %v4035, %v4059
    %v4064 = vmul.f32 %v4036, %v4060
    %v4066 = vlaneseq
    %v4067 = vshrl.u32 %v4066, 7
    %v4068 = vsub.s32 0, %v4067
    %v4069 = vrot.slane %v4018, %v4068
    %v4071 = vmul.f32 %v4061, %v4069
    %v4072 = vmul.f32 %v4062, %v4069
    %v4073 = vmul.f32 %v4063, %v4069
    %v4074 = vmul.f32 %v4064, %v4069
    %v4076 = vlaneseq
    %v4077 = vshrl.u32 %v4076, 7
    %v4078 = vsub.s32 0, %v4077
    %v4079 = vrot.slane %v4020, %v4078
    %v4081 = vadd.f32 %v4071, %v4079
    %v4082 = vadd.f32 %v4072, %v4079
    %v4083 = vadd.f32 %v4073, %v4079
    %v4084 = vadd.f32 %v4074, %v4079
    %v4085 = vld [vmem:[#allocation16] sm:$0xf]
    %v4086 = vld [vmem:[#allocation16 + $0x4] sm:$0xf]
    %v4087 = vld [vmem:[#allocation16 + $0x8] sm:$0xf]
    %v4088 = vld [vmem:[#allocation16 + $0xc] sm:$0xf]
    %v4089 = vld [vmem:[#allocation16 + $0x10] sm:$0xf]
    %v4090 = vld [vmem:[#allocation16 + $0x14] sm:$0xf]
    %v4091 = vld [vmem:[#allocation16 + $0x18] sm:$0xf]
    %v4092 = vld [vmem:[#allocation16 + $0x1c] sm:$0xf]
    %v4093 = vld [vmem:[#allocation16 + $0x20] sm:$0xf]
    %v4094 = vld [vmem:[#allocation16 + $0x24] sm:$0xf]
    %v4095 = vld [vmem:[#allocation16 + $0x28] sm:$0xf]
    %v4096 = vld [vmem:[#allocation16 + $0x2c] sm:$0xf]
    %v4097 = vld [vmem:[#allocation16 + $0x30] sm:$0xf]
    %v4098 = vld [vmem:[#allocation16 + $0x34] sm:$0xf]
    %v4099 = vld [vmem:[#allocation16 + $0x38] sm:$0xf]
    %v4100 = vld [vmem:[#allocation16 + $0x3c] sm:$0xf]
    %v4101 = vpack.c.bf16 %v4082, %v4081
    %v4102 = vpack.c.bf16 %v4084, %v4083
    %v4103 = vld [vmem:[%s17] sm:$0x1]
    %v4105 = vlaneseq
    %v4106 = vshrl.u32 %v4105, 7
    %v4107 = vsub.s32 0, %v4106
    %v4108 = vrot.slane %v4103, %v4107
    %v4126 = vunpack.c.l.b16 %v4085
    %v4127 = vunpack.c.l.b16 %v4086
    %v4128 = vunpack.c.l.b16 %v4087
    %v4129 = vunpack.c.l.b16 %v4088
    %v4130 = vunpack.c.l.b16 %v4089
    %v4131 = vunpack.c.l.b16 %v4090
    %v4132 = vunpack.c.l.b16 %v4091
    %v4133 = vunpack.c.l.b16 %v4092
    %v4134 = vunpack.c.l.b16 %v4093
    %v4135 = vunpack.c.l.b16 %v4094
    %v4136 = vunpack.c.l.b16 %v4095
    %v4137 = vunpack.c.l.b16 %v4096
    %v4138 = vunpack.c.l.b16 %v4097
    %v4139 = vunpack.c.l.b16 %v4098
    %v4140 = vunpack.c.l.b16 %v4099
    %v4141 = vunpack.c.l.b16 %v4100
    %v4142 = vpack.c.b16 %v4127, %v4126
    %v4143 = vpack.c.b16 %v4129, %v4128
    %v4144 = vpack.c.b16 %v4131, %v4130
    %v4145 = vpack.c.b16 %v4133, %v4132
    %v4146 = vpack.c.b16 %v4135, %v4134
    %v4147 = vpack.c.b16 %v4137, %v4136
    %v4148 = vpack.c.b16 %v4139, %v4138
    %v4149 = vpack.c.b16 %v4141, %v4140
    %4158 = vmatprep.subr.bf16.mxu0 0
    %4159 = vmatpush1.bf16.msra.mxu0 %v4142
    %4160 = vmatprep.subr.bf16.mxu0 0
    %4161 = vmatpush1.bf16.msra.mxu0 %v4143
    %4162 = vmatprep.subr.bf16.mxu0 0
    %4163 = vmatpush1.bf16.msra.mxu0 %v4144
    %4164 = vmatprep.subr.bf16.mxu0 0
    %4165 = vmatpush1.bf16.msra.mxu0 %v4145
    %4166 = vmatprep.subr.bf16.mxu0 0
    %4167 = vmatpush1.bf16.msra.mxu0 %v4146
    %4168 = vmatprep.subr.bf16.mxu0 0
    %4169 = vmatpush1.bf16.msra.mxu0 %v4147
    %4170 = vmatprep.subr.bf16.mxu0 0
    %4171 = vmatpush1.bf16.msra.mxu0 %v4148
    %4172 = vmatprep.subr.bf16.mxu0 0
    %4173 = vmatpush1.bf16.msra.mxu0 %v4149
    %4174 = vmatprep.subr.bf16.mxu0 0
    %4175 = vmatpush1.bf16.msra.mxu0 0
    %4176 = vmatprep.subr.bf16.mxu0 0
    %4177 = vmatpush1.bf16.msra.mxu0 0
    %4178 = vmatprep.subr.bf16.mxu0 0
    %4179 = vmatpush1.bf16.msra.mxu0 0
    %4180 = vmatprep.subr.bf16.mxu0 0
    %4181 = vmatpush1.bf16.msra.mxu0 0
    %4182 = vmatprep.subr.bf16.mxu0 0
    %4183 = vmatpush1.bf16.msra.mxu0 0
    %4184 = vmatprep.subr.bf16.mxu0 0
    %4185 = vmatpush1.bf16.msra.mxu0 0
    %4186 = vmatprep.subr.bf16.mxu0 0
    %4187 = vmatpush1.bf16.msra.mxu0 0
    %4188 = vmatprep.subr.bf16.mxu0 0
    %4189 = vmatpush1.bf16.msra.mxu0 0
    %4190 = vmatprep.mubr.bf16.mxu0 0
    %4191 = vmatmul.mubr.bf16.gmra.mrb[0].mxu0 %v4101
    %v4192 = vpop.f32.mrb[0].mxu0
    %v4193 = vadd.f32 %v4108, %v4192
    %v4194 = vpop.f32.mrb[0].mxu0
    %v4195 = vpop.f32.mrb[0].mxu0
    %v4196 = vadd.f32 %v4108, %v4195
    %v4197 = vpop.f32.mrb[0].mxu0
    %4198 = vmatprep.mubr.bf16.mxu0 0
    %4199 = vmatmul.mubr.bf16.gmra.mrb[0].mxu0 %v4102
    %v4200 = vpop.f32.mrb[0].mxu0
    %v4201 = vadd.f32 %v4108, %v4200
    %v4202 = vpop.f32.mrb[0].mxu0
    %v4203 = vpop.f32.mrb[0].mxu0
    %v4204 = vadd.f32 %v4108, %v4203
    %v4205 = vpop.f32.mrb[0].mxu0
    %4206 = vdwg.mxu0
    %4207 = vst [vmem:[#allocation17] sm:$0xff] %v4193
    %4208 = vst [vmem:[#allocation17 + $0x8] sm:$0xff] %v4196
    %4209 = vst [vmem:[#allocation17 + $0x10] sm:$0xff] %v4201
    %4210 = vst [vmem:[#allocation17 + $0x18] sm:$0xff] %v4204
    %4211 = vst [vmem:[#allocation18] sm:$0xff] %v4081
    %4212 = vst [vmem:[#allocation18 + $0x8] sm:$0xff] %v4082
    %4213 = vst [vmem:[#allocation18 + $0x10] sm:$0xff] %v4083
    %4214 = vst [vmem:[#allocation18 + $0x18] sm:$0xff] %v4084
    // Predicated region
    $region110: #{tpu_custom_call.1} parent=1 // pred_check
      _
    $region111: #{tpu_custom_call.1} parent=1 // pred_check_branch
      %4216 = sbr.rel (0) target = $region113
    $region112: #{tpu_custom_call.1} parent=1 // pred_region
      %s4218 = ssub.s32 512, 512
      %4219 = vsyncadd [#allocation4], %s4218
      %s4220 = sshll.u32 [#allocation17], 4
      %s4221 = int_to_ptr.vmem [resolvable:$true] %s4220
      %4226 = dma.vmem_to_hbm [thread:$0]  %s4221, 512, %s18, [#allocation4], 128, 128, 8
    $region113: #{tpu_custom_call.1} parent=1 // pred_fallthru
      _
    // Predicated region
    $region114: #{tpu_custom_call.1} parent=1 // pred_check
      _
    $region115: #{tpu_custom_call.1} parent=1 // pred_check_branch
      %4228 = sbr.rel (0) target = $region117
    $region116: #{tpu_custom_call.1} parent=1 // pred_region
      %s4230 = ssub.s32 512, 512
      %4231 = vsyncadd [#allocation19], %s4230
      %s4232 = sshll.u32 [#allocation18], 4
      %s4233 = int_to_ptr.vmem [resolvable:$true] %s4232
      %4238 = dma.vmem_to_hbm [thread:$0]  %s4233, 512, %s19, [#allocation19], 128, 128, 8
    $region117: #{tpu_custom_call.1} parent=1 // pred_fallthru
      _
    // Predicated region
    $region118: #{tpu_custom_call.1} parent=1 // pred_check
      _
    $region119: #{tpu_custom_call.1} parent=1 // pred_check_branch
      %4240 = sbr.rel (0) target = $region121
    $region120: #{tpu_custom_call.1} parent=1 // pred_region
      %4241 = dma.done [#allocation4], 512
    $region121: #{tpu_custom_call.1} parent=1 // pred_fallthru
      _
    // Predicated region
    $region122: #{tpu_custom_call.1} parent=1 // pred_check
      _
    $region123: #{tpu_custom_call.1} parent=1 // pred_check_branch
      %4243 = sbr.rel (0) target = $region125
    $region124: #{tpu_custom_call.1} parent=1 // pred_region
      %4244 = dma.done [#allocation19], 512
    $region125: #{tpu_custom_call.1} parent=1 // pred_fallthru
      _
    %4245 = vsyncpa [#allocation3], 1
    %4246 = vsyncpa [#allocation6], 1
    %4247 = vsyncpa [#allocation9], 1
    %4248 = vsyncpa [#allocation12], 1
    %4249 = vsyncpa [#allocation15], 1
    %4250 = vsyncpa [#allocation4], 1
    %4251 = vsyncpa [#allocation19], 1

</llo_original>
